<compile_context>
chip_gen: v5e
topology: v5e:2x2
jax: 0.10.0
libtpu: 0.0.40
codegen_flags: <defaults>
</compile_context>

<pallas_src>
import math
import numpy as np

import jax
import jax.numpy as jnp
from jax import lax
from jax.experimental import pallas as pl
from jax.experimental.pallas import tpu as pltpu


_CONV_PAD = 8  # left zero-pad rows for the causal depthwise conv (>= d_conv - 1)


# ----------------------------------------------------------------------------- #
# Kernel 1: fused multi-branch 1x1 Conv + folded BatchNorm + ReLU6 (row-tiled)
# ----------------------------------------------------------------------------- #
def _ppm_conv_kernel(x_ref, w_ref, scale_ref, shift_ref, o_ref):
    acc = jnp.dot(x_ref[...], w_ref[...], preferred_element_type=jnp.float32)
    o_ref[...] = jnp.clip(acc * scale_ref[...] + shift_ref[...], 0.0, 6.0)


def ppm_conv(x_rows, w_all, scale_all, shift_all, *, max_tile_rows=512):
    """x_rows: (N, Cin); w_all: (Cin, Cout_pad); scale/shift: (1, Cout_pad)."""
    N, Cin = x_rows.shape
    Cout = w_all.shape[1]
    n8 = ((N + 7) // 8) * 8
    tm = min(max_tile_rows, n8)
    n_pad = ((n8 + tm - 1) // tm) * tm
    if n_pad != N:
        x_rows = jnp.pad(x_rows, ((0, n_pad - N), (0, 0)))
    out = pl.pallas_call(
        _ppm_conv_kernel,
        out_shape=jax.ShapeDtypeStruct((n_pad, Cout), jnp.float32),
        grid=(n_pad // tm,),
        in_specs=[
            pl.BlockSpec((tm, Cin), lambda i: (i, 0)),
            pl.BlockSpec((Cin, Cout), lambda i: (0, 0)),
            pl.BlockSpec((1, Cout), lambda i: (0, 0)),
            pl.BlockSpec((1, Cout), lambda i: (0, 0)),
        ],
        out_specs=pl.BlockSpec((tm, Cout), lambda i: (i, 0)),
        compiler_params=pltpu.CompilerParams(dimension_semantics=("parallel",)),
    )(x_rows, w_all, scale_all, shift_all)
    return out[:N]


# ----------------------------------------------------------------------------- #
# Kernel 2: fully fused Mamba block, gridded over batch
# ----------------------------------------------------------------------------- #
def _make_mamba_kernel(L, d_inner, d_state, d_conv, chunk):
    n_chunks = L // chunk

    def kernel(seq_ref, w_inx_ref, w_inz_ref, conv_w_ref, conv_b_ref,
               w_dt_ref, w_bc_ref, dtb_ref, A_ref, D_ref, w_out_ref,
               out_ref,
               xpad_scr, delta_scr, du_scr, gate_scr, skip_scr, bc_scr, y_scr):
        f32 = jnp.float32
        seq = seq_ref[...]                                                 # (L, d_model)

        # ---- in_proj: x / z halves (two lane-dense MXU matmuls) -----------
        x_in = jnp.dot(seq, w_inx_ref[...], preferred_element_type=f32)    # (L, Din)
        z = jnp.dot(seq, w_inz_ref[...], preferred_element_type=f32)       # (L, Din)
        gate = z * jax.nn.sigmoid(z)                                       # SiLU(z), bulk

        # ---- causal depthwise conv1d + SiLU --------------------------------
        # The causal left pad lives in a VMEM scratch so that x_in is stored
        # once (sublane-aligned) and each tap is one block read.
        xpad_scr[pl.ds(0, _CONV_PAD), :] = jnp.zeros((_CONV_PAD, d_inner), f32)
        xpad_scr[pl.ds(_CONV_PAD, L), :] = x_in
        acc = conv_b_ref[...]
        for k in range(d_conv):                                            # static unroll
            tap = xpad_scr[pl.ds(_CONV_PAD - (d_conv - 1) + k, L), :]      # (L, Din)
            acc = acc + conv_w_ref[k:k + 1, :] * tap
        u = acc * jax.nn.sigmoid(acc)                                      # (L, Din)

        # ---- x_proj with dt_proj folded in (trace-time weight product) ----
        dt_full = jnp.dot(u, w_dt_ref[...], preferred_element_type=f32)    # (L, Din)
        bc = jnp.dot(u, w_bc_ref[...], preferred_element_type=f32)         # (L, 2S)
        delta = jax.nn.softplus(dt_full + dtb_ref[...])                    # bulk EUP

        # bulk pre-compute for the scan (full 8-sublane / EUP utilisation)
        delta_scr[...] = delta
        du_scr[...] = delta * u
        gate_scr[...] = gate
        skip_scr[...] = D_ref[...] * u * gate
        bc_scr[...] = bc

        # loop-invariant values hoisted out of the scan (live in vregs)
        A = A_ref[...]                                                     # (S, Din)
        eye2s = (lax.broadcasted_iota(jnp.int32, (2 * d_state, 2 * d_state), 0)
                 == lax.broadcasted_iota(jnp.int32, (2 * d_state, 2 * d_state), 1)
                 ).astype(f32)
        row_ids = lax.broadcasted_iota(jnp.int32, (chunk, d_inner), 0)

        # ---- selective scan: sequential in time, chunked by `chunk` --------
        def chunk_body(c, h):
            t0 = pl.multiple_of(c * chunk, chunk)
            d_c = delta_scr[pl.ds(t0, chunk), :]                           # (8, Din)
            du_c = du_scr[pl.ds(t0, chunk), :]                             # (8, Din)
            bc_c = bc_scr[pl.ds(t0, chunk), :]                             # (8, 2S)
            # (8, 2S) -> (2S, 8) on the MXU (A @ B^T pattern): B_t / C_t become
            # (S, 1) columns that broadcast along the d_inner lane axis.
            bct = lax.dot_general(eye2s, bc_c, (((1,), (1,)), ((), ())),
                                  preferred_element_type=f32)              # (2S, 8)
            y_c = jnp.zeros((chunk, d_inner), f32)
            for k in range(chunk):                                         # static unroll
                d_k = d_c[k:k + 1, :]                                      # (1, Din)
                du_k = du_c[k:k + 1, :]                                    # (1, Din)
                b_k = bct[0:d_state, k:k + 1]                              # (S, 1)
                c_k = bct[d_state:2 * d_state, k:k + 1]                    # (S, 1)
                h = jnp.exp(d_k * A) * h + b_k * du_k                      # (S, Din)
                y_k = jnp.sum(h * c_k, axis=0, keepdims=True)              # (1, Din)
                y_c = y_c + jnp.where(row_ids == k, y_k, 0.0)
            y_scr[pl.ds(t0, chunk), :] = (
                y_c * gate_scr[pl.ds(t0, chunk), :]
                + skip_scr[pl.ds(t0, chunk), :])
            return h

        h0 = jnp.zeros((d_state, d_inner), f32)
        lax.fori_loop(0, n_chunks, chunk_body, h0)

        # ---- out_proj -------------------------------------------------------
        out_ref[...] = jnp.dot(y_scr[...], w_out_ref[...],
                               preferred_element_type=f32)

    return kernel


def mamba_fused(seq, p, cfg, *, chunk=8):
    """seq: (B, L, d_model) -> (B, L, d_model), one pallas_call over batch."""
    B, L, d_model = seq.shape
    d_inner = cfg["d_inner"]
    d_state = cfg["d_state"]
    d_conv = cfg["d_conv"]
    dt_rank = cfg["dt_rank"]
    assert L % chunk == 0, "sequence length must be a multiple of the chunk size"
    assert d_conv - 1 <= _CONV_PAD

    w_inx = p["in_proj_w"][:, :d_inner]                      # (d_model, Din)
    w_inz = p["in_proj_w"][:, d_inner:]                      # (d_model, Din)
    # fold dt_proj into x_proj at trace time
    w_dt_full = p["x_proj_w"][:, :dt_rank] @ p["dt_proj_w"]  # (Din, Din)
    w_bc = p["x_proj_w"][:, dt_rank:]                        # (Din, 2S)
    A_neg_T = -jnp.exp(p["A_log"]).T                         # (S, Din)
    S = d_state

    kernel = _make_mamba_kernel(L, d_inner, d_state, d_conv, chunk)
    return pl.pallas_call(
        kernel,
        out_shape=jax.ShapeDtypeStruct((B, L, d_model), jnp.float32),
        grid=(B,),
        in_specs=[
            pl.BlockSpec((None, L, d_model), lambda b: (b, 0, 0)),   # seq
            pl.BlockSpec((d_model, d_inner), lambda b: (0, 0)),      # in_proj (x half)
            pl.BlockSpec((d_model, d_inner), lambda b: (0, 0)),      # in_proj (z half)
            pl.BlockSpec((d_conv, d_inner), lambda b: (0, 0)),       # conv_w
            pl.BlockSpec((1, d_inner), lambda b: (0, 0)),            # conv_b
            pl.BlockSpec((d_inner, d_inner), lambda b: (0, 0)),      # x_proj @ dt_proj
            pl.BlockSpec((d_inner, 2 * S), lambda b: (0, 0)),        # x_proj [B|C]
            pl.BlockSpec((1, d_inner), lambda b: (0, 0)),            # dt_proj bias
            pl.BlockSpec((S, d_inner), lambda b: (0, 0)),            # -exp(A_log).T
            pl.BlockSpec((1, d_inner), lambda b: (0, 0)),            # D
            pl.BlockSpec((d_inner, d_model), lambda b: (0, 0)),      # out_proj
        ],
        out_specs=pl.BlockSpec((None, L, d_model), lambda b: (b, 0, 0)),
        scratch_shapes=[
            pltpu.VMEM((L + _CONV_PAD, d_inner), jnp.float32),   # padded conv input
            pltpu.VMEM((L, d_inner), jnp.float32),               # delta
            pltpu.VMEM((L, d_inner), jnp.float32),               # delta * u
            pltpu.VMEM((L, d_inner), jnp.float32),               # silu(z)
            pltpu.VMEM((L, d_inner), jnp.float32),               # D * u * silu(z)
            pltpu.VMEM((L, 2 * S), jnp.float32),                 # [B | C] time-major
            pltpu.VMEM((L, d_inner), jnp.float32),               # gated scan output
        ],
        compiler_params=pltpu.CompilerParams(dimension_semantics=("parallel",)),
    )(seq, w_inx, w_inz, p["conv_w"], p["conv_b"].reshape(1, d_inner),
      w_dt_full, w_bc, p["dt_proj_b"].reshape(1, d_inner), A_neg_T,
      p["D"].reshape(1, d_inner), p["out_proj_w"])


# ----------------------------------------------------------------------------- #
# Glue: adaptive average pool / bilinear resize as separable linear maps
# ----------------------------------------------------------------------------- #
def adaptive_pool_matrix(in_size, out_size):
    P = np.zeros((out_size, in_size), dtype=np.float32)
    for i in range(out_size):
        start = (i * in_size) // out_size
        end = ((i + 1) * in_size + out_size - 1) // out_size
        P[i, start:end] = 1.0 / (end - start)
    return jnp.asarray(P)


def bilinear_matrix(out_size, in_size):
    # PyTorch F.interpolate(mode='bilinear', align_corners=False)
    M = np.zeros((out_size, in_size), dtype=np.float32)
    scale = in_size / out_size
    for o in range(out_size):
        src = (o + 0.5) * scale - 0.5
        src = max(src, 0.0)
        i0 = min(int(np.floor(src)), in_size - 1)
        i1 = min(i0 + 1, in_size - 1)
        w1 = src - i0
        M[o, i0] += 1.0 - w1
        M[o, i1] += w1
    return jnp.asarray(M)


# ----------------------------------------------------------------------------- #
# Forward pass
# ----------------------------------------------------------------------------- #
def mamba_layer_forward(x, params, cfg):
    """x: (B, in_chs, H, W) NCHW -> (B, chs, H, W)."""
    B, C, H, W = x.shape
    dim = cfg["dim"]
    pool_scales = cfg["pool_scales"]

    x_nhwc = jnp.transpose(x, (0, 2, 3, 1))                              # (B, H, W, C)

    # Stack rows of all branch inputs (full-res + every pooled map) so that one
    # lane-dense matmul evaluates every 1x1 Conv+BN+ReLU6 branch at once.
    rows = [x_nhwc.reshape(B * H * W, C)]
    for s in pool_scales[1:]:
        Ph = adaptive_pool_matrix(H, s)
        Pw = adaptive_pool_matrix(W, s)
        pooled = jnp.einsum("sh,bhwc,tw->bstc", Ph, x_nhwc, Pw)          # (B, s, s, C)
        rows.append(pooled.reshape(B * s * s, C))
    x_rows = jnp.concatenate(rows, axis=0)

    # Concatenate per-branch weights along Cout and pad to 128 lanes.
    w_all = jnp.concatenate([p["w"] for p in params["pool"]], axis=1)    # (C, 7*dim)
    sc_all = jnp.concatenate([p["scale"] for p in params["pool"]], axis=0)
    sh_all = jnp.concatenate([p["shift"] for p in params["pool"]], axis=0)
    cout = w_all.shape[1]
    cout_pad = ((cout + 127) // 128) * 128
    if cout_pad != cout:
        w_all = jnp.pad(w_all, ((0, 0), (0, cout_pad - cout)))
        sc_all = jnp.pad(sc_all, (0, cout_pad - cout))
        sh_all = jnp.pad(sh_all, (0, cout_pad - cout))

    y_rows = ppm_conv(x_rows, w_all, sc_all.reshape(1, cout_pad),
                      sh_all.reshape(1, cout_pad))

    # Re-assemble the pyramid (channels-last) and upsample each branch.
    ppm = [x_nhwc]
    feat0 = y_rows[: B * H * W, :dim].reshape(B, H, W, dim)
    g = jnp.mean(feat0, axis=(1, 2), keepdims=True)                      # AdaptiveAvgPool(1)
    ppm.append(jnp.broadcast_to(g, (B, H, W, dim)))                      # bilinear of 1x1 map
    off = B * H * W
    for i, s in enumerate(pool_scales[1:], start=1):
        n = B * s * s
        feat = y_rows[off: off + n, i * dim:(i + 1) * dim].reshape(B, s, s, dim)
        off += n
        Mh = bilinear_matrix(H, s)
        Mw = bilinear_matrix(W, s)
        ppm.append(jnp.einsum("oi,bijc,pj->bopc", Mh, feat, Mw))
    feats = jnp.concatenate(ppm, axis=-1)                                # (B, H, W, chs)
    chs = feats.shape[-1]

    seq = feats.reshape(B, H * W, chs)                                   # 'b c h w -> b (h w) c'
    out = mamba_fused(seq, params["mamba"], cfg)                         # (B, L, chs)
    return jnp.transpose(out.reshape(B, H, W, chs), (0, 3, 1, 2))        # back to NCHW


# ----------------------------------------------------------------------------- #
# Deterministic parameter initialization
# ----------------------------------------------------------------------------- #
def init_params(key, cfg):
    keys = jax.random.split(key, 64)
    ki = iter(keys)
    in_chs, dim = cfg["in_chs"], cfg["dim"]
    d_model, d_inner = cfg["d_model"], cfg["d_inner"]
    d_state, d_conv, dt_rank = cfg["d_state"], cfg["d_conv"], cfg["dt_rank"]

    def bn_fold(k, c):
        k1, k2, k3, k4 = jax.random.split(k, 4)
        gamma = jax.random.uniform(k1, (c,), jnp.float32, 0.5, 1.5)
        beta = 0.1 * jax.random.normal(k2, (c,), jnp.float32)
        rmean = 0.1 * jax.random.normal(k3, (c,), jnp.float32)
        rvar = jax.random.uniform(k4, (c,), jnp.float32, 0.5, 1.5)
        scale = gamma / jnp.sqrt(rvar + 1e-5)
        shift = beta - rmean * scale
        return scale, shift

    pool_params = []
    for _ in range(cfg["pool_len"]):
        w = 0.1 * jax.random.normal(next(ki), (in_chs, dim), jnp.float32)
        scale, shift = bn_fold(next(ki), dim)
        pool_params.append({"w": w, "scale": scale, "shift": shift})

    def lin_w(k, fan_in, fan_out):
        bound = 1.0 / math.sqrt(fan_in)
        return jax.random.uniform(k, (fan_in, fan_out), jnp.float32, -bound, bound)

    mamba = {
        "in_proj_w": lin_w(next(ki), d_model, 2 * d_inner),
        "conv_w": 0.2 * jax.random.normal(next(ki), (d_conv, d_inner), jnp.float32),
        "conv_b": 0.1 * jax.random.normal(next(ki), (d_inner,), jnp.float32),
        "x_proj_w": lin_w(next(ki), d_inner, dt_rank + 2 * d_state),
        "dt_proj_w": lin_w(next(ki), dt_rank, d_inner),
        "dt_proj_b": jax.random.uniform(next(ki), (d_inner,), jnp.float32, -4.0, -2.0),
        "A_log": jnp.log(
            jnp.broadcast_to(
                jnp.arange(1, d_state + 1, dtype=jnp.float32), (d_inner, d_state)
            )
        ),
        "D": jnp.ones((d_inner,), jnp.float32),
        "out_proj_w": lin_w(next(ki), d_inner, d_model),
    }
    return {"pool": pool_params, "mamba": mamba}


# ----------------------------------------------------------------------------- #
if __name__ == "__main__":
    # Small shapes consistent with the module (in_chs=32, dim=16, H=W=last_feat_size=8)
    B, in_chs, H, W = 2, 32, 8, 8
    dim, d_state, d_conv, expand, last_feat_size = 16, 8, 4, 2, 8

    pool_scales = list(range(1, last_feat_size, last_feat_size // 8))    # [1..7]
    pool_len = len(pool_scales)
    d_model = dim * pool_len + in_chs                                     # 144
    cfg = dict(
        in_chs=in_chs, dim=dim, d_state=d_state, d_conv=d_conv, expand=expand,
        pool_scales=pool_scales, pool_len=pool_len,
        d_model=d_model, d_inner=expand * d_model,
        dt_rank=math.ceil(d_model / 16),
    )

    key = jax.random.PRNGKey(0)
    kx, kp = jax.random.split(key)
    x = jax.random.normal(kx, (B, in_chs, H, W), jnp.float32)
    params = init_params(kp, cfg)

    fwd = jax.jit(lambda xx: mamba_layer_forward(xx, params, cfg))
    out = fwd(x)
    jax.block_until_ready(out)
    assert out.shape == (B, d_model, H, W), out.shape
    assert bool(jnp.all(jnp.isfinite(out)))
    print("KERNEL_OK")
</pallas_src>

<mosaic_0001>
module attributes {stable_mosaic.version = 11 : i64} {
  func.func @_ppm_conv_kernel(%arg0: i32, %arg1: memref<408x32xf32, #tpu.memory_space<vmem>>, %arg2: memref<32x128xf32, #tpu.memory_space<vmem>>, %arg3: memref<1x128xf32, #tpu.memory_space<vmem>>, %arg4: memref<1x128xf32, #tpu.memory_space<vmem>>, %arg5: memref<408x128xf32, #tpu.memory_space<vmem>>) attributes {dimension_semantics = [#tpu.dimension_semantics<parallel>], iteration_bounds = array<i64: 1>, scalar_prefetch = 0 : i64, scratch_operands = 0 : i64, tpu.core_type = #tpu.core_type<tc>, window_params = [{transform_indices = @transform_0, window_bounds = array<i64: 408, 32>}, {pipeline_mode = #tpu.pipeline_mode<synchronous>, transform_indices = @transform_1, window_bounds = array<i64: 32, 128>}, {pipeline_mode = #tpu.pipeline_mode<synchronous>, transform_indices = @transform_2, window_bounds = array<i64: 1, 128>}, {pipeline_mode = #tpu.pipeline_mode<synchronous>, transform_indices = @transform_3, window_bounds = array<i64: 1, 128>}, {transform_indices = @transform_4, window_bounds = array<i64: 408, 128>}]} {
    %c0 = arith.constant 0 : index
    %c0_0 = arith.constant 0 : index
    %0 = vector.load %arg1[%c0, %c0_0] : memref<408x32xf32, #tpu.memory_space<vmem>>, vector<408x32xf32>
    %c0_1 = arith.constant 0 : index
    %c0_2 = arith.constant 0 : index
    %1 = vector.load %arg2[%c0_1, %c0_2] : memref<32x128xf32, #tpu.memory_space<vmem>>, vector<32x128xf32>
    %cst = arith.constant dense<0.000000e+00> : vector<408x128xf32>
    %2 = tpu.matmul %0, %1, %cst {dimension_numbers = #tpu.dot_dimension_numbers<[1], [0], [0], [1], [0, 0, 1, 1], [], []>} : vector<408x32xf32>, vector<32x128xf32>, vector<408x128xf32> -> vector<408x128xf32>
    %c0_3 = arith.constant 0 : index
    %c0_4 = arith.constant 0 : index
    %3 = vector.load %arg3[%c0_3, %c0_4] : memref<1x128xf32, #tpu.memory_space<vmem>>, vector<1x128xf32>
    %4 = vector.broadcast %3 : vector<1x128xf32> to vector<408x128xf32>
    %5 = arith.mulf %2, %4 : vector<408x128xf32>
    %c0_5 = arith.constant 0 : index
    %c0_6 = arith.constant 0 : index
    %6 = vector.load %arg4[%c0_5, %c0_6] : memref<1x128xf32, #tpu.memory_space<vmem>>, vector<1x128xf32>
    %7 = vector.broadcast %6 : vector<1x128xf32> to vector<408x128xf32>
    %8 = arith.addf %5, %7 : vector<408x128xf32>
    %cst_7 = arith.constant 0.000000e+00 : f32
    %cst_8 = arith.constant 6.000000e+00 : f32
    %9 = vector.broadcast %cst_7 : f32 to vector<408x128xf32>
    %10 = arith.maximumf %9, %8 : vector<408x128xf32>
    %11 = vector.broadcast %cst_8 : f32 to vector<408x128xf32>
    %12 = arith.minimumf %11, %10 : vector<408x128xf32>
    %c0_9 = arith.constant 0 : index
    %c0_10 = arith.constant 0 : index
    %13 = vector.load %arg5[%c0_9, %c0_10] : memref<408x128xf32, #tpu.memory_space<vmem>>, vector<408x128xf32>
    tpu.vector_store %arg5[%c0_9, %c0_10], %12 {strides = array<i32>} : memref<408x128xf32, #tpu.memory_space<vmem>>, vector<408x128xf32>,
    return
  }
  func.func @transform_0(%arg0: i32) -> (i32, i32) {
    %c0_i32 = arith.constant 0 : i32
    %c0_i32_0 = arith.constant 0 : i32
    return %arg0, %c0_i32 : i32, i32
  }
  func.func @transform_1(%arg0: i32) -> (i32, i32) {
    %c0_i32 = arith.constant 0 : i32
    %c0_i32_0 = arith.constant 0 : i32
    %c0_i32_1 = arith.constant 0 : i32
    return %c0_i32, %c0_i32_0 : i32, i32
  }
  func.func @transform_2(%arg0: i32) -> (i32, i32) {
    %c0_i32 = arith.constant 0 : i32
    %c0_i32_0 = arith.constant 0 : i32
    %c0_i32_1 = arith.constant 0 : i32
    return %c0_i32, %c0_i32_0 : i32, i32
  }
  func.func @transform_3(%arg0: i32) -> (i32, i32) {
    %c0_i32 = arith.constant 0 : i32
    %c0_i32_0 = arith.constant 0 : i32
    %c0_i32_1 = arith.constant 0 : i32
    return %c0_i32, %c0_i32_0 : i32, i32
  }
  func.func @transform_4(%arg0: i32) -> (i32, i32) {
    %c0_i32 = arith.constant 0 : i32
    %c0_i32_0 = arith.constant 0 : i32
    return %arg0, %c0_i32 : i32, i32
  }
}

module attributes {stable_mosaic.version = 11 : i64} {
  func.func @kernel(%arg0: i32, %arg1: memref<1x64x144xf32, #tpu.memory_space<vmem>>, %arg2: memref<144x288xf32, #tpu.memory_space<vmem>>, %arg3: memref<144x288xf32, #tpu.memory_space<vmem>>, %arg4: memref<4x288xf32, #tpu.memory_space<vmem>>, %arg5: memref<1x288xf32, #tpu.memory_space<vmem>>, %arg6: memref<288x288xf32, #tpu.memory_space<vmem>>, %arg7: memref<288x16xf32, #tpu.memory_space<vmem>>, %arg8: memref<1x288xf32, #tpu.memory_space<vmem>>, %arg9: memref<8x288xf32, #tpu.memory_space<vmem>>, %arg10: memref<1x288xf32, #tpu.memory_space<vmem>>, %arg11: memref<288x144xf32, #tpu.memory_space<vmem>>, %arg12: memref<1x64x144xf32, #tpu.memory_space<vmem>>, %arg13: memref<72x288xf32, #tpu.memory_space<vmem>>, %arg14: memref<64x288xf32, #tpu.memory_space<vmem>>, %arg15: memref<64x288xf32, #tpu.memory_space<vmem>>, %arg16: memref<64x288xf32, #tpu.memory_space<vmem>>, %arg17: memref<64x288xf32, #tpu.memory_space<vmem>>, %arg18: memref<64x16xf32, #tpu.memory_space<vmem>>, %arg19: memref<64x288xf32, #tpu.memory_space<vmem>>) attributes {dimension_semantics = [#tpu.dimension_semantics<parallel>], iteration_bounds = array<i64: 2>, scalar_prefetch = 0 : i64, scratch_operands = 7 : i64, tpu.core_type = #tpu.core_type<tc>, window_params = [{transform_indices = @transform_0, window_bounds = array<i64: 1, 64, 144>}, {pipeline_mode = #tpu.pipeline_mode<synchronous>, transform_indices = @transform_1, window_bounds = array<i64: 144, 288>}, {pipeline_mode = #tpu.pipeline_mode<synchronous>, transform_indices = @transform_2, window_bounds = array<i64: 144, 288>}, {pipeline_mode = #tpu.pipeline_mode<synchronous>, transform_indices = @transform_3, window_bounds = array<i64: 4, 288>}, {pipeline_mode = #tpu.pipeline_mode<synchronous>, transform_indices = @transform_4, window_bounds = array<i64: 1, 288>}, {pipeline_mode = #tpu.pipeline_mode<synchronous>, transform_indices = @transform_5, window_bounds = array<i64: 288, 288>}, {pipeline_mode = #tpu.pipeline_mode<synchronous>, transform_indices = @transform_6, window_bounds = array<i64: 288, 16>}, {pipeline_mode = #tpu.pipeline_mode<synchronous>, transform_indices = @transform_7, window_bounds = array<i64: 1, 288>}, {pipeline_mode = #tpu.pipeline_mode<synchronous>, transform_indices = @transform_8, window_bounds = array<i64: 8, 288>}, {pipeline_mode = #tpu.pipeline_mode<synchronous>, transform_indices = @transform_9, window_bounds = array<i64: 1, 288>}, {pipeline_mode = #tpu.pipeline_mode<synchronous>, transform_indices = @transform_10, window_bounds = array<i64: 288, 144>}, {transform_indices = @transform_11, window_bounds = array<i64: 1, 64, 144>}]} {
    %c0 = arith.constant 0 : index
    %c0_0 = arith.constant 0 : index
    %c0_1 = arith.constant 0 : index
    %0 = vector.load %arg1[%c0, %c0_0, %c0_1] : memref<1x64x144xf32, #tpu.memory_space<vmem>>, vector<1x64x144xf32>
    %1 = vector.shape_cast %0 : vector<1x64x144xf32> to vector<64x144xf32>
    %c0_2 = arith.constant 0 : index
    %c0_3 = arith.constant 0 : index
    %2 = vector.load %arg2[%c0_2, %c0_3] : memref<144x288xf32, #tpu.memory_space<vmem>>, vector<144x288xf32>
    %cst = arith.constant dense<0.000000e+00> : vector<64x288xf32>
    %3 = tpu.matmul %1, %2, %cst {dimension_numbers = #tpu.dot_dimension_numbers<[1], [0], [0], [1], [0, 0, 1, 1], [], []>} : vector<64x144xf32>, vector<144x288xf32>, vector<64x288xf32> -> vector<64x288xf32>
    %c0_4 = arith.constant 0 : index
    %c0_5 = arith.constant 0 : index
    %4 = vector.load %arg3[%c0_4, %c0_5] : memref<144x288xf32, #tpu.memory_space<vmem>>, vector<144x288xf32>
    %cst_6 = arith.constant dense<0.000000e+00> : vector<64x288xf32>
    %5 = tpu.matmul %1, %4, %cst_6 {dimension_numbers = #tpu.dot_dimension_numbers<[1], [0], [0], [1], [0, 0, 1, 1], [], []>} : vector<64x144xf32>, vector<144x288xf32>, vector<64x288xf32> -> vector<64x288xf32>
    %6 = arith.negf %5 : vector<64x288xf32>
    %7 = math.exp %6 : vector<64x288xf32>
    %cst_7 = arith.constant 1.000000e+00 : f32
    %8 = vector.broadcast %cst_7 : f32 to vector<64x288xf32>
    %9 = arith.addf %8, %7 : vector<64x288xf32>
    %10 = arith.divf %8, %9 : vector<64x288xf32>
    %11 = arith.mulf %5, %10 : vector<64x288xf32>
    %cst_8 = arith.constant 0.000000e+00 : f32
    %12 = vector.broadcast %cst_8 : f32 to vector<8x288xf32>
    %c0_9 = arith.constant 0 : index
    %c0_10 = arith.constant 0 : index
    %13 = vector.load %arg13[%c0_9, %c0_10] : memref<72x288xf32, #tpu.memory_space<vmem>>, vector<8x288xf32>
    tpu.vector_store %arg13[%c0_9, %c0_10], %12 {strides = array<i32>} : memref<72x288xf32, #tpu.memory_space<vmem>>, vector<8x288xf32>,
    %c8 = arith.constant 8 : index
    %c0_11 = arith.constant 0 : index
    %14 = vector.load %arg13[%c8, %c0_11] : memref<72x288xf32, #tpu.memory_space<vmem>>, vector<64x288xf32>
    tpu.vector_store %arg13[%c8, %c0_11], %3 {strides = array<i32>} : memref<72x288xf32, #tpu.memory_space<vmem>>, vector<64x288xf32>,
    %c0_12 = arith.constant 0 : index
    %c0_13 = arith.constant 0 : index
    %15 = vector.load %arg5[%c0_12, %c0_13] : memref<1x288xf32, #tpu.memory_space<vmem>>, vector<1x288xf32>
    %c5 = arith.constant 5 : index
    %c0_14 = arith.constant 0 : index
    %16 = vector.load %arg13[%c5, %c0_14] : memref<72x288xf32, #tpu.memory_space<vmem>>, vector<64x288xf32>
    %c0_15 = arith.constant 0 : index
    %c0_16 = arith.constant 0 : index
    %17 = vector.load %arg4[%c0_15, %c0_16] : memref<4x288xf32, #tpu.memory_space<vmem>>, vector<1x288xf32>
    %18 = vector.broadcast %17 : vector<1x288xf32> to vector<64x288xf32>
    %19 = arith.mulf %18, %16 : vector<64x288xf32>
    %20 = vector.broadcast %15 : vector<1x288xf32> to vector<64x288xf32>
    %21 = arith.addf %20, %19 : vector<64x288xf32>
    %c6 = arith.constant 6 : index
    %c0_17 = arith.constant 0 : index
    %22 = vector.load %arg13[%c6, %c0_17] : memref<72x288xf32, #tpu.memory_space<vmem>>, vector<64x288xf32>
    %c1 = arith.constant 1 : index
    %c0_18 = arith.constant 0 : index
    %23 = vector.load %arg4[%c1, %c0_18] : memref<4x288xf32, #tpu.memory_space<vmem>>, vector<1x288xf32>
    %24 = vector.broadcast %23 : vector<1x288xf32> to vector<64x288xf32>
    %25 = arith.mulf %24, %22 : vector<64x288xf32>
    %26 = arith.addf %21, %25 : vector<64x288xf32>
    %c7 = arith.constant 7 : index
    %c0_19 = arith.constant 0 : index
    %27 = vector.load %arg13[%c7, %c0_19] : memref<72x288xf32, #tpu.memory_space<vmem>>, vector<64x288xf32>
    %c2 = arith.constant 2 : index
    %c0_20 = arith.constant 0 : index
    %28 = vector.load %arg4[%c2, %c0_20] : memref<4x288xf32, #tpu.memory_space<vmem>>, vector<1x288xf32>
    %29 = vector.broadcast %28 : vector<1x288xf32> to vector<64x288xf32>
    %30 = arith.mulf %29, %27 : vector<64x288xf32>
    %31 = arith.addf %26, %30 : vector<64x288xf32>
    %c8_21 = arith.constant 8 : index
    %c0_22 = arith.constant 0 : index
    %32 = vector.load %arg13[%c8_21, %c0_22] : memref<72x288xf32, #tpu.memory_space<vmem>>, vector<64x288xf32>
    %c3 = arith.constant 3 : index
    %c0_23 = arith.constant 0 : index
    %33 = vector.load %arg4[%c3, %c0_23] : memref<4x288xf32, #tpu.memory_space<vmem>>, vector<1x288xf32>
    %34 = vector.broadcast %33 : vector<1x288xf32> to vector<64x288xf32>
    %35 = arith.mulf %34, %32 : vector<64x288xf32>
    %36 = arith.addf %31, %35 : vector<64x288xf32>
    %37 = arith.negf %36 : vector<64x288xf32>
    %38 = math.exp %37 : vector<64x288xf32>
    %cst_24 = arith.constant 1.000000e+00 : f32
    %39 = vector.broadcast %cst_24 : f32 to vector<64x288xf32>
    %40 = arith.addf %39, %38 : vector<64x288xf32>
    %41 = arith.divf %39, %40 : vector<64x288xf32>
    %42 = arith.mulf %36, %41 : vector<64x288xf32>
    %c0_25 = arith.constant 0 : index
    %c0_26 = arith.constant 0 : index
    %43 = vector.load %arg6[%c0_25, %c0_26] : memref<288x288xf32, #tpu.memory_space<vmem>>, vector<288x288xf32>
    %cst_27 = arith.constant dense<0.000000e+00> : vector<64x288xf32>
    %44 = tpu.matmul %42, %43, %cst_27 {dimension_numbers = #tpu.dot_dimension_numbers<[1], [0], [0], [1], [0, 0, 1, 1], [], []>} : vector<64x288xf32>, vector<288x288xf32>, vector<64x288xf32> -> vector<64x288xf32>
    %c0_28 = arith.constant 0 : index
    %c0_29 = arith.constant 0 : index
    %45 = vector.load %arg7[%c0_28, %c0_29] : memref<288x16xf32, #tpu.memory_space<vmem>>, vector<288x16xf32>
    %cst_30 = arith.constant dense<0.000000e+00> : vector<64x16xf32>
    %46 = tpu.matmul %42, %45, %cst_30 {dimension_numbers = #tpu.dot_dimension_numbers<[1], [0], [0], [1], [0, 0, 1, 1], [], []>} : vector<64x288xf32>, vector<288x16xf32>, vector<64x16xf32> -> vector<64x16xf32>
    %c0_31 = arith.constant 0 : index
    %c0_32 = arith.constant 0 : index
    %47 = vector.load %arg8[%c0_31, %c0_32] : memref<1x288xf32, #tpu.memory_space<vmem>>, vector<1x288xf32>
    %48 = vector.broadcast %47 : vector<1x288xf32> to vector<64x288xf32>
    %49 = arith.addf %44, %48 : vector<64x288xf32>
    %cst_33 = arith.constant 0.000000e+00 : f32
    %50 = vector.broadcast %cst_33 : f32 to vector<64x288xf32>
    %51 = arith.maximumf %49, %50 : vector<64x288xf32>
    %52 = vector.broadcast %cst_33 : f32 to vector<64x288xf32>
    %53 = arith.subf %49, %52 : vector<64x288xf32>
    %54 = arith.cmpf one, %53, %53 : vector<64x288xf32>
    %55 = vector.broadcast %cst_33 : f32 to vector<64x288xf32>
    %56 = arith.addf %49, %55 : vector<64x288xf32>
    %57 = math.absf %53 : vector<64x288xf32>
    %cst_34 = arith.constant 0.000000e+00 : f32
    %58 = vector.broadcast %cst_34 : f32 to vector<64x288xf32>
    %59 = arith.subf %58, %57 : vector<64x288xf32>
    %60 = math.exp %59 : vector<64x288xf32>
    %61 = math.log1p %60 : vector<64x288xf32>
    %62 = arith.addf %51, %61 : vector<64x288xf32>
    %63 = arith.select %54, %56, %62 : vector<64x288xi1>, vector<64x288xf32>
    %c0_35 = arith.constant 0 : index
    %c0_36 = arith.constant 0 : index
    %64 = vector.load %arg14[%c0_35, %c0_36] : memref<64x288xf32, #tpu.memory_space<vmem>>, vector<64x288xf32>
    tpu.vector_store %arg14[%c0_35, %c0_36], %63 {strides = array<i32>} : memref<64x288xf32, #tpu.memory_space<vmem>>, vector<64x288xf32>,
    %65 = arith.mulf %63, %42 : vector<64x288xf32>
    %c0_37 = arith.constant 0 : index
    %c0_38 = arith.constant 0 : index
    %66 = vector.load %arg15[%c0_37, %c0_38] : memref<64x288xf32, #tpu.memory_space<vmem>>, vector<64x288xf32>
    tpu.vector_store %arg15[%c0_37, %c0_38], %65 {strides = array<i32>} : memref<64x288xf32, #tpu.memory_space<vmem>>, vector<64x288xf32>,
    %c0_39 = arith.constant 0 : index
    %c0_40 = arith.constant 0 : index
    %67 = vector.load %arg16[%c0_39, %c0_40] : memref<64x288xf32, #tpu.memory_space<vmem>>, vector<64x288xf32>
    tpu.vector_store %arg16[%c0_39, %c0_40], %11 {strides = array<i32>} : memref<64x288xf32, #tpu.memory_space<vmem>>, vector<64x288xf32>,
    %c0_41 = arith.constant 0 : index
    %c0_42 = arith.constant 0 : index
    %68 = vector.load %arg10[%c0_41, %c0_42] : memref<1x288xf32, #tpu.memory_space<vmem>>, vector<1x288xf32>
    %69 = vector.broadcast %68 : vector<1x288xf32> to vector<64x288xf32>
    %70 = arith.mulf %69, %42 : vector<64x288xf32>
    %71 = arith.mulf %70, %11 : vector<64x288xf32>
    %c0_43 = arith.constant 0 : index
    %c0_44 = arith.constant 0 : index
    %72 = vector.load %arg17[%c0_43, %c0_44] : memref<64x288xf32, #tpu.memory_space<vmem>>, vector<64x288xf32>
    tpu.vector_store %arg17[%c0_43, %c0_44], %71 {strides = array<i32>} : memref<64x288xf32, #tpu.memory_space<vmem>>, vector<64x288xf32>,
    %c0_45 = arith.constant 0 : index
    %c0_46 = arith.constant 0 : index
    %73 = vector.load %arg18[%c0_45, %c0_46] : memref<64x16xf32, #tpu.memory_space<vmem>>, vector<64x16xf32>
    tpu.vector_store %arg18[%c0_45, %c0_46], %46 {strides = array<i32>} : memref<64x16xf32, #tpu.memory_space<vmem>>, vector<64x16xf32>,
    %c0_47 = arith.constant 0 : index
    %c0_48 = arith.constant 0 : index
    %74 = vector.load %arg9[%c0_47, %c0_48] : memref<8x288xf32, #tpu.memory_space<vmem>>, vector<8x288xf32>
    %75 = tpu.iota {dimensions = array<i32: 0>} : vector<16x16xi32>
    %76 = tpu.iota {dimensions = array<i32: 1>} : vector<16x16xi32>
    %77 = arith.cmpi eq, %75, %76 : vector<16x16xi32>
    %78 = arith.extui %77 : vector<16x16xi1> to vector<16x16xi32>
    %79 = arith.sitofp %78 : vector<16x16xi32> to vector<16x16xf32>
    %80 = tpu.iota {dimensions = array<i32: 0>} : vector<8x288xi32>
    %cst_49 = arith.constant 0.000000e+00 : f32
    %81 = vector.broadcast %cst_49 : f32 to vector<8x288xf32>
    %c0_i32 = arith.constant 0 : i32
    %c8_i32 = arith.constant 8 : i32
    %82 = arith.addi %c0_i32, %c8_i32 : i32
    %c1_i32 = arith.constant 1 : i32
    %83 = scf.for %arg20 = %c0_i32 to %82 step %c1_i32 iter_args(%arg21 = %81) -> (vector<8x288xf32>)  : i32 {
      %c8_i32_59 = arith.constant 8 : i32
      %90 = arith.muli %arg20, %c8_i32_59 : i32
      %91 = tpu.assume_multiple %90, 8 : i32
      %92 = arith.index_cast %91 : i32 to index
      %c0_60 = arith.constant 0 : index
      %93 = vector.load %arg14[%92, %c0_60] : memref<64x288xf32, #tpu.memory_space<vmem>>, vector<8x288xf32>
      %94 = arith.index_cast %91 : i32 to index
      %c0_61 = arith.constant 0 : index
      %95 = vector.load %arg15[%94, %c0_61] : memref<64x288xf32, #tpu.memory_space<vmem>>, vector<8x288xf32>
      %96 = arith.index_cast %91 : i32 to index
      %c0_62 = arith.constant 0 : index
      %97 = vector.load %arg18[%96, %c0_62] : memref<64x16xf32, #tpu.memory_space<vmem>>, vector<8x16xf32>
      %cst_63 = arith.constant dense<0.000000e+00> : vector<16x8xf32>
      %98 = tpu.matmul %79, %97, %cst_63 {dimension_numbers = #tpu.dot_dimension_numbers<[1], [1], [0], [0], [0, 0, 1, 0], [], []>} : vector<16x16xf32>, vector<8x16xf32>, vector<16x8xf32> -> vector<16x8xf32>
      %cst_64 = arith.constant 0.000000e+00 : f32
      %99 = vector.broadcast %cst_64 : f32 to vector<8x288xf32>
      %100 = vector.extract_strided_slice %93 {offsets = [0, 0], sizes = [1, 288], strides = [1, 1]} : vector<8x288xf32> to vector<1x288xf32>
      %101 = vector.extract_strided_slice %95 {offsets = [0, 0], sizes = [1, 288], strides = [1, 1]} : vector<8x288xf32> to vector<1x288xf32>
      %102 = vector.extract_strided_slice %98 {offsets = [0, 0], sizes = [8, 1], strides = [1, 1]} : vector<16x8xf32> to vector<8x1xf32>
      %103 = vector.extract_strided_slice %98 {offsets = [8, 0], sizes = [8, 1], strides = [1, 1]} : vector<16x8xf32> to vector<8x1xf32>
      %104 = vector.broadcast %100 : vector<1x288xf32> to vector<8x288xf32>
      %105 = arith.mulf %104, %74 : vector<8x288xf32>
      %106 = math.exp %105 : vector<8x288xf32>
      %107 = arith.mulf %106, %arg21 : vector<8x288xf32>
      %108 = vector.broadcast %102 : vector<8x1xf32> to vector<8x288xf32>
      %109 = vector.broadcast %101 : vector<1x288xf32> to vector<8x288xf32>
      %110 = arith.mulf %108, %109 : vector<8x288xf32>
      %111 = arith.addf %107, %110 : vector<8x288xf32>
      %112 = vector.broadcast %103 : vector<8x1xf32> to vector<8x288xf32>
      %113 = arith.mulf %111, %112 : vector<8x288xf32>
      %cst_65 = arith.constant dense<0.000000e+00> : vector<288xf32>
      %114 = vector.multi_reduction <add>, %113, %cst_65 [0] : vector<8x288xf32> to vector<288xf32>
      %115 = vector.shape_cast %114 : vector<288xf32> to vector<1x288xf32>
      %c0_i32_66 = arith.constant 0 : i32
      %116 = vector.broadcast %c0_i32_66 : i32 to vector<8x288xi32>
      %117 = arith.cmpi eq, %80, %116 : vector<8x288xi32>
      %cst_67 = arith.constant 0.000000e+00 : f32
      %118 = vector.shape_cast %115 : vector<1x288xf32> to vector<1x288xf32>
      %119 = vector.broadcast %118 : vector<1x288xf32> to vector<8x288xf32>
      %120 = vector.broadcast %cst_67 : f32 to vector<8x288xf32>
      %121 = arith.select %117, %119, %120 : vector<8x288xi1>, vector<8x288xf32>
      %122 = arith.addf %99, %121 : vector<8x288xf32>
      %123 = vector.extract_strided_slice %93 {offsets = [1, 0], sizes = [1, 288], strides = [1, 1]} : vector<8x288xf32> to vector<1x288xf32>
      %124 = vector.extract_strided_slice %95 {offsets = [1, 0], sizes = [1, 288], strides = [1, 1]} : vector<8x288xf32> to vector<1x288xf32>
      %125 = vector.extract_strided_slice %98 {offsets = [0, 1], sizes = [8, 1], strides = [1, 1]} : vector<16x8xf32> to vector<8x1xf32>
      %126 = vector.extract_strided_slice %98 {offsets = [8, 1], sizes = [8, 1], strides = [1, 1]} : vector<16x8xf32> to vector<8x1xf32>
      %127 = vector.broadcast %123 : vector<1x288xf32> to vector<8x288xf32>
      %128 = arith.mulf %127, %74 : vector<8x288xf32>
      %129 = math.exp %128 : vector<8x288xf32>
      %130 = arith.mulf %129, %111 : vector<8x288xf32>
      %131 = vector.broadcast %125 : vector<8x1xf32> to vector<8x288xf32>
      %132 = vector.broadcast %124 : vector<1x288xf32> to vector<8x288xf32>
      %133 = arith.mulf %131, %132 : vector<8x288xf32>
      %134 = arith.addf %130, %133 : vector<8x288xf32>
      %135 = vector.broadcast %126 : vector<8x1xf32> to vector<8x288xf32>
      %136 = arith.mulf %134, %135 : vector<8x288xf32>
      %cst_68 = arith.constant dense<0.000000e+00> : vector<288xf32>
      %137 = vector.multi_reduction <add>, %136, %cst_68 [0] : vector<8x288xf32> to vector<288xf32>
      %138 = vector.shape_cast %137 : vector<288xf32> to vector<1x288xf32>
      %c1_i32_69 = arith.constant 1 : i32
      %139 = vector.broadcast %c1_i32_69 : i32 to vector<8x288xi32>
      %140 = arith.cmpi eq, %80, %139 : vector<8x288xi32>
      %cst_70 = arith.constant 0.000000e+00 : f32
      %141 = vector.shape_cast %138 : vector<1x288xf32> to vector<1x288xf32>
      %142 = vector.broadcast %141 : vector<1x288xf32> to vector<8x288xf32>
      %143 = vector.broadcast %cst_70 : f32 to vector<8x288xf32>
      %144 = arith.select %140, %142, %143 : vector<8x288xi1>, vector<8x288xf32>
      %145 = arith.addf %122, %144 : vector<8x288xf32>
      %146 = vector.extract_strided_slice %93 {offsets = [2, 0], sizes = [1, 288], strides = [1, 1]} : vector<8x288xf32> to vector<1x288xf32>
      %147 = vector.extract_strided_slice %95 {offsets = [2, 0], sizes = [1, 288], strides = [1, 1]} : vector<8x288xf32> to vector<1x288xf32>
      %148 = vector.extract_strided_slice %98 {offsets = [0, 2], sizes = [8, 1], strides = [1, 1]} : vector<16x8xf32> to vector<8x1xf32>
      %149 = vector.extract_strided_slice %98 {offsets = [8, 2], sizes = [8, 1], strides = [1, 1]} : vector<16x8xf32> to vector<8x1xf32>
      %150 = vector.broadcast %146 : vector<1x288xf32> to vector<8x288xf32>
      %151 = arith.mulf %150, %74 : vector<8x288xf32>
      %152 = math.exp %151 : vector<8x288xf32>
      %153 = arith.mulf %152, %134 : vector<8x288xf32>
      %154 = vector.broadcast %148 : vector<8x1xf32> to vector<8x288xf32>
      %155 = vector.broadcast %147 : vector<1x288xf32> to vector<8x288xf32>
      %156 = arith.mulf %154, %155 : vector<8x288xf32>
      %157 = arith.addf %153, %156 : vector<8x288xf32>
      %158 = vector.broadcast %149 : vector<8x1xf32> to vector<8x288xf32>
      %159 = arith.mulf %157, %158 : vector<8x288xf32>
      %cst_71 = arith.constant dense<0.000000e+00> : vector<288xf32>
      %160 = vector.multi_reduction <add>, %159, %cst_71 [0] : vector<8x288xf32> to vector<288xf32>
      %161 = vector.shape_cast %160 : vector<288xf32> to vector<1x288xf32>
      %c2_i32 = arith.constant 2 : i32
      %162 = vector.broadcast %c2_i32 : i32 to vector<8x288xi32>
      %163 = arith.cmpi eq, %80, %162 : vector<8x288xi32>
      %cst_72 = arith.constant 0.000000e+00 : f32
      %164 = vector.shape_cast %161 : vector<1x288xf32> to vector<1x288xf32>
      %165 = vector.broadcast %164 : vector<1x288xf32> to vector<8x288xf32>
      %166 = vector.broadcast %cst_72 : f32 to vector<8x288xf32>
      %167 = arith.select %163, %165, %166 : vector<8x288xi1>, vector<8x288xf32>
      %168 = arith.addf %145, %167 : vector<8x288xf32>
      %169 = vector.extract_strided_slice %93 {offsets = [3, 0], sizes = [1, 288], strides = [1, 1]} : vector<8x288xf32> to vector<1x288xf32>
      %170 = vector.extract_strided_slice %95 {offsets = [3, 0], sizes = [1, 288], strides = [1, 1]} : vector<8x288xf32> to vector<1x288xf32>
      %171 = vector.extract_strided_slice %98 {offsets = [0, 3], sizes = [8, 1], strides = [1, 1]} : vector<16x8xf32> to vector<8x1xf32>
      %172 = vector.extract_strided_slice %98 {offsets = [8, 3], sizes = [8, 1], strides = [1, 1]} : vector<16x8xf32> to vector<8x1xf32>
      %173 = vector.broadcast %169 : vector<1x288xf32> to vector<8x288xf32>
      %174 = arith.mulf %173, %74 : vector<8x288xf32>
      %175 = math.exp %174 : vector<8x288xf32>
      %176 = arith.mulf %175, %157 : vector<8x288xf32>
      %177 = vector.broadcast %171 : vector<8x1xf32> to vector<8x288xf32>
      %178 = vector.broadcast %170 : vector<1x288xf32> to vector<8x288xf32>
      %179 = arith.mulf %177, %178 : vector<8x288xf32>
      %180 = arith.addf %176, %179 : vector<8x288xf32>
      %181 = vector.broadcast %172 : vector<8x1xf32> to vector<8x288xf32>
      %182 = arith.mulf %180, %181 : vector<8x288xf32>
      %cst_73 = arith.constant dense<0.000000e+00> : vector<288xf32>
      %183 = vector.multi_reduction <add>, %182, %cst_73 [0] : vector<8x288xf32> to vector<288xf32>
      %184 = vector.shape_cast %183 : vector<288xf32> to vector<1x288xf32>
      %c3_i32 = arith.constant 3 : i32
      %185 = vector.broadcast %c3_i32 : i32 to vector<8x288xi32>
      %186 = arith.cmpi eq, %80, %185 : vector<8x288xi32>
      %cst_74 = arith.constant 0.000000e+00 : f32
      %187 = vector.shape_cast %184 : vector<1x288xf32> to vector<1x288xf32>
      %188 = vector.broadcast %187 : vector<1x288xf32> to vector<8x288xf32>
      %189 = vector.broadcast %cst_74 : f32 to vector<8x288xf32>
      %190 = arith.select %186, %188, %189 : vector<8x288xi1>, vector<8x288xf32>
      %191 = arith.addf %168, %190 : vector<8x288xf32>
      %192 = vector.extract_strided_slice %93 {offsets = [4, 0], sizes = [1, 288], strides = [1, 1]} : vector<8x288xf32> to vector<1x288xf32>
      %193 = vector.extract_strided_slice %95 {offsets = [4, 0], sizes = [1, 288], strides = [1, 1]} : vector<8x288xf32> to vector<1x288xf32>
      %194 = vector.extract_strided_slice %98 {offsets = [0, 4], sizes = [8, 1], strides = [1, 1]} : vector<16x8xf32> to vector<8x1xf32>
      %195 = vector.extract_strided_slice %98 {offsets = [8, 4], sizes = [8, 1], strides = [1, 1]} : vector<16x8xf32> to vector<8x1xf32>
      %196 = vector.broadcast %192 : vector<1x288xf32> to vector<8x288xf32>
      %197 = arith.mulf %196, %74 : vector<8x288xf32>
      %198 = math.exp %197 : vector<8x288xf32>
      %199 = arith.mulf %198, %180 : vector<8x288xf32>
      %200 = vector.broadcast %194 : vector<8x1xf32> to vector<8x288xf32>
      %201 = vector.broadcast %193 : vector<1x288xf32> to vector<8x288xf32>
      %202 = arith.mulf %200, %201 : vector<8x288xf32>
      %203 = arith.addf %199, %202 : vector<8x288xf32>
      %204 = vector.broadcast %195 : vector<8x1xf32> to vector<8x288xf32>
      %205 = arith.mulf %203, %204 : vector<8x288xf32>
      %cst_75 = arith.constant dense<0.000000e+00> : vector<288xf32>
      %206 = vector.multi_reduction <add>, %205, %cst_75 [0] : vector<8x288xf32> to vector<288xf32>
      %207 = vector.shape_cast %206 : vector<288xf32> to vector<1x288xf32>
      %c4_i32 = arith.constant 4 : i32
      %208 = vector.broadcast %c4_i32 : i32 to vector<8x288xi32>
      %209 = arith.cmpi eq, %80, %208 : vector<8x288xi32>
      %cst_76 = arith.constant 0.000000e+00 : f32
      %210 = vector.shape_cast %207 : vector<1x288xf32> to vector<1x288xf32>
      %211 = vector.broadcast %210 : vector<1x288xf32> to vector<8x288xf32>
      %212 = vector.broadcast %cst_76 : f32 to vector<8x288xf32>
      %213 = arith.select %209, %211, %212 : vector<8x288xi1>, vector<8x288xf32>
      %214 = arith.addf %191, %213 : vector<8x288xf32>
      %215 = vector.extract_strided_slice %93 {offsets = [5, 0], sizes = [1, 288], strides = [1, 1]} : vector<8x288xf32> to vector<1x288xf32>
      %216 = vector.extract_strided_slice %95 {offsets = [5, 0], sizes = [1, 288], strides = [1, 1]} : vector<8x288xf32> to vector<1x288xf32>
      %217 = vector.extract_strided_slice %98 {offsets = [0, 5], sizes = [8, 1], strides = [1, 1]} : vector<16x8xf32> to vector<8x1xf32>
      %218 = vector.extract_strided_slice %98 {offsets = [8, 5], sizes = [8, 1], strides = [1, 1]} : vector<16x8xf32> to vector<8x1xf32>
      %219 = vector.broadcast %215 : vector<1x288xf32> to vector<8x288xf32>
      %220 = arith.mulf %219, %74 : vector<8x288xf32>
      %221 = math.exp %220 : vector<8x288xf32>
      %222 = arith.mulf %221, %203 : vector<8x288xf32>
      %223 = vector.broadcast %217 : vector<8x1xf32> to vector<8x288xf32>
      %224 = vector.broadcast %216 : vector<1x288xf32> to vector<8x288xf32>
      %225 = arith.mulf %223, %224 : vector<8x288xf32>
      %226 = arith.addf %222, %225 : vector<8x288xf32>
      %227 = vector.broadcast %218 : vector<8x1xf32> to vector<8x288xf32>
      %228 = arith.mulf %226, %227 : vector<8x288xf32>
      %cst_77 = arith.constant dense<0.000000e+00> : vector<288xf32>
      %229 = vector.multi_reduction <add>, %228, %cst_77 [0] : vector<8x288xf32> to vector<288xf32>
      %230 = vector.shape_cast %229 : vector<288xf32> to vector<1x288xf32>
      %c5_i32 = arith.constant 5 : i32
      %231 = vector.broadcast %c5_i32 : i32 to vector<8x288xi32>
      %232 = arith.cmpi eq, %80, %231 : vector<8x288xi32>
      %cst_78 = arith.constant 0.000000e+00 : f32
      %233 = vector.shape_cast %230 : vector<1x288xf32> to vector<1x288xf32>
      %234 = vector.broadcast %233 : vector<1x288xf32> to vector<8x288xf32>
      %235 = vector.broadcast %cst_78 : f32 to vector<8x288xf32>
      %236 = arith.select %232, %234, %235 : vector<8x288xi1>, vector<8x288xf32>
      %237 = arith.addf %214, %236 : vector<8x288xf32>
      %238 = vector.extract_strided_slice %93 {offsets = [6, 0], sizes = [1, 288], strides = [1, 1]} : vector<8x288xf32> to vector<1x288xf32>
      %239 = vector.extract_strided_slice %95 {offsets = [6, 0], sizes = [1, 288], strides = [1, 1]} : vector<8x288xf32> to vector<1x288xf32>
      %240 = vector.extract_strided_slice %98 {offsets = [0, 6], sizes = [8, 1], strides = [1, 1]} : vector<16x8xf32> to vector<8x1xf32>
      %241 = vector.extract_strided_slice %98 {offsets = [8, 6], sizes = [8, 1], strides = [1, 1]} : vector<16x8xf32> to vector<8x1xf32>
      %242 = vector.broadcast %238 : vector<1x288xf32> to vector<8x288xf32>
      %243 = arith.mulf %242, %74 : vector<8x288xf32>
      %244 = math.exp %243 : vector<8x288xf32>
      %245 = arith.mulf %244, %226 : vector<8x288xf32>
      %246 = vector.broadcast %240 : vector<8x1xf32> to vector<8x288xf32>
      %247 = vector.broadcast %239 : vector<1x288xf32> to vector<8x288xf32>
      %248 = arith.mulf %246, %247 : vector<8x288xf32>
      %249 = arith.addf %245, %248 : vector<8x288xf32>
      %250 = vector.broadcast %241 : vector<8x1xf32> to vector<8x288xf32>
      %251 = arith.mulf %249, %250 : vector<8x288xf32>
      %cst_79 = arith.constant dense<0.000000e+00> : vector<288xf32>
      %252 = vector.multi_reduction <add>, %251, %cst_79 [0] : vector<8x288xf32> to vector<288xf32>
      %253 = vector.shape_cast %252 : vector<288xf32> to vector<1x288xf32>
      %c6_i32 = arith.constant 6 : i32
      %254 = vector.broadcast %c6_i32 : i32 to vector<8x288xi32>
      %255 = arith.cmpi eq, %80, %254 : vector<8x288xi32>
      %cst_80 = arith.constant 0.000000e+00 : f32
      %256 = vector.shape_cast %253 : vector<1x288xf32> to vector<1x288xf32>
      %257 = vector.broadcast %256 : vector<1x288xf32> to vector<8x288xf32>
      %258 = vector.broadcast %cst_80 : f32 to vector<8x288xf32>
      %259 = arith.select %255, %257, %258 : vector<8x288xi1>, vector<8x288xf32>
      %260 = arith.addf %237, %259 : vector<8x288xf32>
      %261 = vector.extract_strided_slice %93 {offsets = [7, 0], sizes = [1, 288], strides = [1, 1]} : vector<8x288xf32> to vector<1x288xf32>
      %262 = vector.extract_strided_slice %95 {offsets = [7, 0], sizes = [1, 288], strides = [1, 1]} : vector<8x288xf32> to vector<1x288xf32>
      %263 = vector.extract_strided_slice %98 {offsets = [0, 7], sizes = [8, 1], strides = [1, 1]} : vector<16x8xf32> to vector<8x1xf32>
      %264 = vector.extract_strided_slice %98 {offsets = [8, 7], sizes = [8, 1], strides = [1, 1]} : vector<16x8xf32> to vector<8x1xf32>
      %265 = vector.broadcast %261 : vector<1x288xf32> to vector<8x288xf32>
      %266 = arith.mulf %265, %74 : vector<8x288xf32>
      %267 = math.exp %266 : vector<8x288xf32>
      %268 = arith.mulf %267, %249 : vector<8x288xf32>
      %269 = vector.broadcast %263 : vector<8x1xf32> to vector<8x288xf32>
      %270 = vector.broadcast %262 : vector<1x288xf32> to vector<8x288xf32>
      %271 = arith.mulf %269, %270 : vector<8x288xf32>
      %272 = arith.addf %268, %271 : vector<8x288xf32>
      %273 = vector.broadcast %264 : vector<8x1xf32> to vector<8x288xf32>
      %274 = arith.mulf %272, %273 : vector<8x288xf32>
      %cst_81 = arith.constant dense<0.000000e+00> : vector<288xf32>
      %275 = vector.multi_reduction <add>, %274, %cst_81 [0] : vector<8x288xf32> to vector<288xf32>
      %276 = vector.shape_cast %275 : vector<288xf32> to vector<1x288xf32>
      %c7_i32 = arith.constant 7 : i32
      %277 = vector.broadcast %c7_i32 : i32 to vector<8x288xi32>
      %278 = arith.cmpi eq, %80, %277 : vector<8x288xi32>
      %cst_82 = arith.constant 0.000000e+00 : f32
      %279 = vector.shape_cast %276 : vector<1x288xf32> to vector<1x288xf32>
      %280 = vector.broadcast %279 : vector<1x288xf32> to vector<8x288xf32>
      %281 = vector.broadcast %cst_82 : f32 to vector<8x288xf32>
      %282 = arith.select %278, %280, %281 : vector<8x288xi1>, vector<8x288xf32>
      %283 = arith.addf %260, %282 : vector<8x288xf32>
      %284 = arith.index_cast %91 : i32 to index
      %c0_83 = arith.constant 0 : index
      %285 = vector.load %arg16[%284, %c0_83] : memref<64x288xf32, #tpu.memory_space<vmem>>, vector<8x288xf32>
      %286 = arith.mulf %283, %285 : vector<8x288xf32>
      %287 = arith.index_cast %91 : i32 to index
      %c0_84 = arith.constant 0 : index
      %288 = vector.load %arg17[%287, %c0_84] : memref<64x288xf32, #tpu.memory_space<vmem>>, vector<8x288xf32>
      %289 = arith.addf %286, %288 : vector<8x288xf32>
      %290 = arith.index_cast %91 : i32 to index
      %c0_85 = arith.constant 0 : index
      %291 = vector.load %arg19[%290, %c0_85] : memref<64x288xf32, #tpu.memory_space<vmem>>, vector<8x288xf32>
      tpu.vector_store %arg19[%290, %c0_85], %289 {strides = array<i32>} : memref<64x288xf32, #tpu.memory_space<vmem>>, vector<8x288xf32>,
      scf.yield %272 : vector<8x288xf32>
    }
    %c8_i32_50 = arith.constant 8 : i32
    %c0_51 = arith.constant 0 : index
    %c0_52 = arith.constant 0 : index
    %84 = vector.load %arg19[%c0_51, %c0_52] : memref<64x288xf32, #tpu.memory_space<vmem>>, vector<64x288xf32>
    %c0_53 = arith.constant 0 : index
    %c0_54 = arith.constant 0 : index
    %85 = vector.load %arg11[%c0_53, %c0_54] : memref<288x144xf32, #tpu.memory_space<vmem>>, vector<288x144xf32>
    %cst_55 = arith.constant dense<0.000000e+00> : vector<64x144xf32>
    %86 = tpu.matmul %84, %85, %cst_55 {dimension_numbers = #tpu.dot_dimension_numbers<[1], [0], [0], [1], [0, 0, 1, 1], [], []>} : vector<64x288xf32>, vector<288x144xf32>, vector<64x144xf32> -> vector<64x144xf32>
    %c0_56 = arith.constant 0 : index
    %c0_57 = arith.constant 0 : index
    %c0_58 = arith.constant 0 : index
    %87 = vector.load %arg12[%c0_56, %c0_57, %c0_58] : memref<1x64x144xf32, #tpu.memory_space<vmem>>, vector<1x64x144xf32>
    %88 = vector.shape_cast %87 : vector<1x64x144xf32> to vector<64x144xf32>
    %89 = vector.shape_cast %86 : vector<64x144xf32> to vector<1x64x144xf32>
    tpu.vector_store %arg12[%c0_56, %c0_57, %c0_58], %89 {strides = array<i32>} : memref<1x64x144xf32, #tpu.memory_space<vmem>>, vector<1x64x144xf32>,
    return
  }
  func.func @transform_0(%arg0: i32) -> (i32, i32, i32) {
    %c0_i32 = arith.constant 0 : i32
    %c0_i32_0 = arith.constant 0 : i32
    %c0_i32_1 = arith.constant 0 : i32
    return %arg0, %c0_i32, %c0_i32_0 : i32, i32, i32
  }
  func.func @transform_1(%arg0: i32) -> (i32, i32) {
    %c0_i32 = arith.constant 0 : i32
    %c0_i32_0 = arith.constant 0 : i32
    %c0_i32_1 = arith.constant 0 : i32
    return %c0_i32, %c0_i32_0 : i32, i32
  }
  func.func @transform_2(%arg0: i32) -> (i32, i32) {
    %c0_i32 = arith.constant 0 : i32
    %c0_i32_0 = arith.constant 0 : i32
    %c0_i32_1 = arith.constant 0 : i32
    return %c0_i32, %c0_i32_0 : i32, i32
  }
  func.func @transform_3(%arg0: i32) -> (i32, i32) {
    %c0_i32 = arith.constant 0 : i32
    %c0_i32_0 = arith.constant 0 : i32
    %c0_i32_1 = arith.constant 0 : i32
    return %c0_i32, %c0_i32_0 : i32, i32
  }
  func.func @transform_4(%arg0: i32) -> (i32, i32) {
    %c0_i32 = arith.constant 0 : i32
    %c0_i32_0 = arith.constant 0 : i32
    %c0_i32_1 = arith.constant 0 : i32
    return %c0_i32, %c0_i32_0 : i32, i32
  }
  func.func @transform_5(%arg0: i32) -> (i32, i32) {
    %c0_i32 = arith.constant 0 : i32
    %c0_i32_0 = arith.constant 0 : i32
    %c0_i32_1 = arith.constant 0 : i32
    return %c0_i32, %c0_i32_0 : i32, i32
  }
  func.func @transform_6(%arg0: i32) -> (i32, i32) {
    %c0_i32 = arith.constant 0 : i32
    %c0_i32_0 = arith.constant 0 : i32
    %c0_i32_1 = arith.constant 0 : i32
    return %c0_i32, %c0_i32_0 : i32, i32
  }
  func.func @transform_7(%arg0: i32) -> (i32, i32) {
    %c0_i32 = arith.constant 0 : i32
    %c0_i32_0 = arith.constant 0 : i32
    %c0_i32_1 = arith.constant 0 : i32
    return %c0_i32, %c0_i32_0 : i32, i32
  }
  func.func @transform_8(%arg0: i32) -> (i32, i32) {
    %c0_i32 = arith.constant 0 : i32
    %c0_i32_0 = arith.constant 0 : i32
    %c0_i32_1 = arith.constant 0 : i32
    return %c0_i32, %c0_i32_0 : i32, i32
  }
  func.func @transform_9(%arg0: i32) -> (i32, i32) {
    %c0_i32 = arith.constant 0 : i32
    %c0_i32_0 = arith.constant 0 : i32
    %c0_i32_1 = arith.constant 0 : i32
    return %c0_i32, %c0_i32_0 : i32, i32
  }
  func.func @transform_10(%arg0: i32) -> (i32, i32) {
    %c0_i32 = arith.constant 0 : i32
    %c0_i32_0 = arith.constant 0 : i32
    %c0_i32_1 = arith.constant 0 : i32
    return %c0_i32, %c0_i32_0 : i32, i32
  }
  func.func @transform_11(%arg0: i32) -> (i32, i32, i32) {
    %c0_i32 = arith.constant 0 : i32
    %c0_i32_0 = arith.constant 0 : i32
    %c0_i32_1 = arith.constant 0 : i32
    return %arg0, %c0_i32, %c0_i32_0 : i32, i32, i32
  }
}

</mosaic_0001>

<llo_original>
// kernel: _lambda_.2
$region0: #{_lambda_.2}
  #allocation0 [shape = 'u32[]', space=smem, size = 0x4, offset = 0x4, fixed_abs, tag = 'smem constant byte address 0x4 - core index']
  #allocation1 [shape = 'u32[72,128]{1,0:T(1,128)}', space=vmem, size = 0x9000, scoped, tag = 'internal scratch']
  %s0 = inlined_call_operand.vmem [shape: f32[408,32], index: 0, kind: input, shape index: {}]
  %s1 = inlined_call_operand.vmem [shape: f32[32,128], index: 1, kind: input, shape index: {}]
  %s2 = inlined_call_operand.vmem [shape: f32[1,128], index: 2, kind: input, shape index: {}]
  %s3 = inlined_call_operand.vmem [shape: f32[1,128], index: 3, kind: input, shape index: {}]
  %s4 = inlined_call_operand.vmem [shape: f32[408,128], index: 4, kind: output, shape index: {}]
  %s5 = sld [smem:[#allocation0]]
  $region26: #{_lambda_.2} parent=0
    _
  %s7 = ssub.s32 1, %s5
  %s8 = scalar_select 0, %s7, %s5
  // Predicated region
  $region2: #{_lambda_.2} parent=0 // pred_check
    _
  $region3: #{_lambda_.2} parent=0 // pred_check_branch
    %10 = sbr.rel (0) target = $region5
  $region4: #{_lambda_.2} parent=0 // pred_region
    _
  $region5: #{_lambda_.2} parent=0 // pred_fallthru
    _
  // Predicated region
  $region6: #{_lambda_.2} parent=0 // pred_check
    _
  $region7: #{_lambda_.2} parent=0 // pred_check_branch
    %12 = sbr.rel (0) target = $region9
  $region8: #{_lambda_.2} parent=0 // pred_region
    _
  $region9: #{_lambda_.2} parent=0 // pred_fallthru
    _
  // Predicated region
  $region10: #{_lambda_.2} parent=0 // pred_check
    _
  $region11: #{_lambda_.2} parent=0 // pred_check_branch
    %14 = sbr.rel (0) target = $region13
  $region12: #{_lambda_.2} parent=0 // pred_region
    _
  $region13: #{_lambda_.2} parent=0 // pred_fallthru
    _
  // Predicated region
  $region14: #{_lambda_.2} parent=0 // pred_check
    _
  $region15: #{_lambda_.2} parent=0 // pred_check_branch
    %16 = sbr.rel (0) target = $region17
  $region16: #{_lambda_.2} parent=0 // pred_region
    _
  $region17: #{_lambda_.2} parent=0 // pred_fallthru
    _
  %v17 = vld [vmem:[%s0] sm:$0xff]
  %v18 = vld [vmem:[%s0 + $0x8] sm:$0xff]
  %v19 = vld [vmem:[%s0 + $0x10] sm:$0xff]
  %v20 = vld [vmem:[%s0 + $0x18] sm:$0xff]
  %v21 = vld [vmem:[%s0 + $0x20] sm:$0xff]
  %v22 = vld [vmem:[%s0 + $0x28] sm:$0xff]
  %v23 = vld [vmem:[%s0 + $0x30] sm:$0xff]
  %v24 = vld [vmem:[%s0 + $0x38] sm:$0xff]
  %v25 = vld [vmem:[%s0 + $0x40] sm:$0xff]
  %v26 = vld [vmem:[%s0 + $0x48] sm:$0xff]
  %v27 = vld [vmem:[%s0 + $0x50] sm:$0xff]
  %v28 = vld [vmem:[%s0 + $0x58] sm:$0xff]
  %v29 = vld [vmem:[%s0 + $0x60] sm:$0xff]
  %v30 = vld [vmem:[%s0 + $0x68] sm:$0xff]
  %v31 = vld [vmem:[%s0 + $0x70] sm:$0xff]
  %v32 = vld [vmem:[%s0 + $0x78] sm:$0xff]
  %v33 = vld [vmem:[%s0 + $0x80] sm:$0xff]
  %v34 = vld [vmem:[%s0 + $0x88] sm:$0xff]
  %v35 = vld [vmem:[%s0 + $0x90] sm:$0xff]
  %v36 = vld [vmem:[%s0 + $0x98] sm:$0xff]
  %v37 = vld [vmem:[%s0 + $0xa0] sm:$0xff]
  %v38 = vld [vmem:[%s0 + $0xa8] sm:$0xff]
  %v39 = vld [vmem:[%s0 + $0xb0] sm:$0xff]
  %v40 = vld [vmem:[%s0 + $0xb8] sm:$0xff]
  %v41 = vld [vmem:[%s0 + $0xc0] sm:$0xff]
  %v42 = vld [vmem:[%s0 + $0xc8] sm:$0xff]
  %v43 = vld [vmem:[%s0 + $0xd0] sm:$0xff]
  %v44 = vld [vmem:[%s0 + $0xd8] sm:$0xff]
  %v45 = vld [vmem:[%s0 + $0xe0] sm:$0xff]
  %v46 = vld [vmem:[%s0 + $0xe8] sm:$0xff]
  %v47 = vld [vmem:[%s0 + $0xf0] sm:$0xff]
  %v48 = vld [vmem:[%s0 + $0xf8] sm:$0xff]
  %v49 = vld [vmem:[%s0 + $0x100] sm:$0xff]
  %v50 = vld [vmem:[%s0 + $0x108] sm:$0xff]
  %v51 = vld [vmem:[%s0 + $0x110] sm:$0xff]
  %v52 = vld [vmem:[%s0 + $0x118] sm:$0xff]
  %v53 = vld [vmem:[%s0 + $0x120] sm:$0xff]
  %v54 = vld [vmem:[%s0 + $0x128] sm:$0xff]
  %v55 = vld [vmem:[%s0 + $0x130] sm:$0xff]
  %v56 = vld [vmem:[%s0 + $0x138] sm:$0xff]
  %v57 = vld [vmem:[%s0 + $0x140] sm:$0xff]
  %v58 = vld [vmem:[%s0 + $0x148] sm:$0xff]
  %v59 = vld [vmem:[%s0 + $0x150] sm:$0xff]
  %v60 = vld [vmem:[%s0 + $0x158] sm:$0xff]
  %v61 = vld [vmem:[%s0 + $0x160] sm:$0xff]
  %v62 = vld [vmem:[%s0 + $0x168] sm:$0xff]
  %v63 = vld [vmem:[%s0 + $0x170] sm:$0xff]
  %v64 = vld [vmem:[%s0 + $0x178] sm:$0xff]
  %v65 = vld [vmem:[%s0 + $0x180] sm:$0xff]
  %v66 = vld [vmem:[%s0 + $0x188] sm:$0xff]
  %v67 = vld [vmem:[%s0 + $0x190] sm:$0xff]
  %v68 = vld [vmem:[%s1] sm:$0xff]
  %v69 = vld [vmem:[%s1 + $0x8] sm:$0xff]
  %v70 = vld [vmem:[%s1 + $0x10] sm:$0xff]
  %v71 = vld [vmem:[%s1 + $0x18] sm:$0xff]
  %vm72 = vcmask 261120
  %v74 = vsel %vm72, %v17, 0
  %v77 = vsel %vm72, %v18, 0
  %v80 = vsel %vm72, %v19, 0
  %v83 = vsel %vm72, %v20, 0
  %v86 = vsel %vm72, %v21, 0
  %v89 = vsel %vm72, %v22, 0
  %v92 = vsel %vm72, %v23, 0
  %v95 = vsel %vm72, %v24, 0
  %v98 = vsel %vm72, %v25, 0
  %v101 = vsel %vm72, %v26, 0
  %v104 = vsel %vm72, %v27, 0
  %v107 = vsel %vm72, %v28, 0
  %v110 = vsel %vm72, %v29, 0
  %v113 = vsel %vm72, %v30, 0
  %v116 = vsel %vm72, %v31, 0
  %v119 = vsel %vm72, %v32, 0
  %v122 = vsel %vm72, %v33, 0
  %v125 = vsel %vm72, %v34, 0
  %v128 = vsel %vm72, %v35, 0
  %v131 = vsel %vm72, %v36, 0
  %v134 = vsel %vm72, %v37, 0
  %v137 = vsel %vm72, %v38, 0
  %v140 = vsel %vm72, %v39, 0
  %v143 = vsel %vm72, %v40, 0
  %v146 = vsel %vm72, %v41, 0
  %v149 = vsel %vm72, %v42, 0
  %v152 = vsel %vm72, %v43, 0
  %v155 = vsel %vm72, %v44, 0
  %v158 = vsel %vm72, %v45, 0
  %v161 = vsel %vm72, %v46, 0
  %v164 = vsel %vm72, %v47, 0
  %v167 = vsel %vm72, %v48, 0
  %v170 = vsel %vm72, %v49, 0
  %v173 = vsel %vm72, %v50, 0
  %v176 = vsel %vm72, %v51, 0
  %v179 = vsel %vm72, %v52, 0
  %v182 = vsel %vm72, %v53, 0
  %v185 = vsel %vm72, %v54, 0
  %v188 = vsel %vm72, %v55, 0
  %v191 = vsel %vm72, %v56, 0
  %v194 = vsel %vm72, %v57, 0
  %v197 = vsel %vm72, %v58, 0
  %v200 = vsel %vm72, %v59, 0
  %v203 = vsel %vm72, %v60, 0
  %v206 = vsel %vm72, %v61, 0
  %v209 = vsel %vm72, %v62, 0
  %v212 = vsel %vm72, %v63, 0
  %v215 = vsel %vm72, %v64, 0
  %v218 = vsel %vm72, %v65, 0
  %v221 = vsel %vm72, %v66, 0
  %v224 = vsel %vm72, %v67, 0
  %226 = vmatpush.msra.mxu0 0.0
  %227 = vmatpush.msra.mxu0 0.0
  %228 = vmatpush.msra.mxu0 0.0
  %229 = vmatpush.msra.mxu0 0.0
  %230 = vmatpush.msra.mxu0 0.0
  %231 = vmatpush.msra.mxu0 0.0
  %232 = vmatpush.msra.mxu0 0.0
  %233 = vmatpush.msra.mxu0 0.0
  %234 = vmatpush.msra.mxu0 0.0
  %235 = vmatpush.msra.mxu0 0.0
  %236 = vmatpush.msra.mxu0 0.0
  %237 = vmatpush.msra.mxu0 0.0
  %238 = vmatpush.msra.mxu0 %v71
  %239 = vmatpush.msra.mxu0 %v70
  %240 = vmatpush.msra.mxu0 %v69
  %241 = vmatpush.msra.mxu0 %v68
  %242 = vmatmul.f32.gmra.mxu0 %v74
  %v243 = vpop.f32.mrf.mxu0
  %v244 = vadd.f32 0.0, %v243
  %245 = vmatmul.f32.gmra.mxu0 %v77
  %v246 = vpop.f32.mrf.mxu0
  %v247 = vadd.f32 0.0, %v246
  %248 = vmatmul.f32.gmra.mxu0 %v80
  %v249 = vpop.f32.mrf.mxu0
  %v250 = vadd.f32 0.0, %v249
  %251 = vmatmul.f32.gmra.mxu0 %v83
  %v252 = vpop.f32.mrf.mxu0
  %v253 = vadd.f32 0.0, %v252
  %254 = vmatmul.f32.gmra.mxu0 %v86
  %v255 = vpop.f32.mrf.mxu0
  %v256 = vadd.f32 0.0, %v255
  %257 = vmatmul.f32.gmra.mxu0 %v89
  %v258 = vpop.f32.mrf.mxu0
  %v259 = vadd.f32 0.0, %v258
  %260 = vmatmul.f32.gmra.mxu0 %v92
  %v261 = vpop.f32.mrf.mxu0
  %v262 = vadd.f32 0.0, %v261
  %263 = vmatmul.f32.gmra.mxu0 %v95
  %v264 = vpop.f32.mrf.mxu0
  %v265 = vadd.f32 0.0, %v264
  %266 = vmatmul.f32.gmra.mxu0 %v98
  %v267 = vpop.f32.mrf.mxu0
  %v268 = vadd.f32 0.0, %v267
  %269 = vmatmul.f32.gmra.mxu0 %v101
  %v270 = vpop.f32.mrf.mxu0
  %v271 = vadd.f32 0.0, %v270
  %272 = vmatmul.f32.gmra.mxu0 %v104
  %v273 = vpop.f32.mrf.mxu0
  %v274 = vadd.f32 0.0, %v273
  %275 = vmatmul.f32.gmra.mxu0 %v107
  %v276 = vpop.f32.mrf.mxu0
  %v277 = vadd.f32 0.0, %v276
  %278 = vmatmul.f32.gmra.mxu0 %v110
  %v279 = vpop.f32.mrf.mxu0
  %v280 = vadd.f32 0.0, %v279
  %281 = vmatmul.f32.gmra.mxu0 %v113
  %v282 = vpop.f32.mrf.mxu0
  %v283 = vadd.f32 0.0, %v282
  %284 = vmatmul.f32.gmra.mxu0 %v116
  %v285 = vpop.f32.mrf.mxu0
  %v286 = vadd.f32 0.0, %v285
  %287 = vmatmul.f32.gmra.mxu0 %v119
  %v288 = vpop.f32.mrf.mxu0
  %v289 = vadd.f32 0.0, %v288
  %290 = vmatmul.f32.gmra.mxu0 %v122
  %v291 = vpop.f32.mrf.mxu0
  %v292 = vadd.f32 0.0, %v291
  %293 = vmatmul.f32.gmra.mxu0 %v125
  %v294 = vpop.f32.mrf.mxu0
  %v295 = vadd.f32 0.0, %v294
  %296 = vmatmul.f32.gmra.mxu0 %v128
  %v297 = vpop.f32.mrf.mxu0
  %v298 = vadd.f32 0.0, %v297
  %299 = vmatmul.f32.gmra.mxu0 %v131
  %v300 = vpop.f32.mrf.mxu0
  %v301 = vadd.f32 0.0, %v300
  %302 = vmatmul.f32.gmra.mxu0 %v134
  %v303 = vpop.f32.mrf.mxu0
  %v304 = vadd.f32 0.0, %v303
  %305 = vmatmul.f32.gmra.mxu0 %v137
  %v306 = vpop.f32.mrf.mxu0
  %v307 = vadd.f32 0.0, %v306
  %308 = vmatmul.f32.gmra.mxu0 %v140
  %v309 = vpop.f32.mrf.mxu0
  %v310 = vadd.f32 0.0, %v309
  %311 = vmatmul.f32.gmra.mxu0 %v143
  %v312 = vpop.f32.mrf.mxu0
  %v313 = vadd.f32 0.0, %v312
  %314 = vmatmul.f32.gmra.mxu0 %v146
  %v315 = vpop.f32.mrf.mxu0
  %v316 = vadd.f32 0.0, %v315
  %317 = vmatmul.f32.gmra.mxu0 %v149
  %v318 = vpop.f32.mrf.mxu0
  %v319 = vadd.f32 0.0, %v318
  %320 = vmatmul.f32.gmra.mxu0 %v152
  %v321 = vpop.f32.mrf.mxu0
  %v322 = vadd.f32 0.0, %v321
  %323 = vmatmul.f32.gmra.mxu0 %v155
  %v324 = vpop.f32.mrf.mxu0
  %v325 = vadd.f32 0.0, %v324
  %326 = vmatmul.f32.gmra.mxu0 %v158
  %v327 = vpop.f32.mrf.mxu0
  %v328 = vadd.f32 0.0, %v327
  %329 = vmatmul.f32.gmra.mxu0 %v161
  %v330 = vpop.f32.mrf.mxu0
  %v331 = vadd.f32 0.0, %v330
  %332 = vmatmul.f32.gmra.mxu0 %v164
  %v333 = vpop.f32.mrf.mxu0
  %v334 = vadd.f32 0.0, %v333
  %335 = vmatmul.f32.gmra.mxu0 %v167
  %v336 = vpop.f32.mrf.mxu0
  %v337 = vadd.f32 0.0, %v336
  %338 = vmatmul.f32.gmra.mxu0 %v170
  %v339 = vpop.f32.mrf.mxu0
  %v340 = vadd.f32 0.0, %v339
  %341 = vmatmul.f32.gmra.mxu0 %v173
  %v342 = vpop.f32.mrf.mxu0
  %v343 = vadd.f32 0.0, %v342
  %344 = vmatmul.f32.gmra.mxu0 %v176
  %v345 = vpop.f32.mrf.mxu0
  %v346 = vadd.f32 0.0, %v345
  %347 = vmatmul.f32.gmra.mxu0 %v179
  %v348 = vpop.f32.mrf.mxu0
  %v349 = vadd.f32 0.0, %v348
  %350 = vmatmul.f32.gmra.mxu0 %v182
  %v351 = vpop.f32.mrf.mxu0
  %v352 = vadd.f32 0.0, %v351
  %353 = vmatmul.f32.gmra.mxu0 %v185
  %v354 = vpop.f32.mrf.mxu0
  %v355 = vadd.f32 0.0, %v354
  %356 = vmatmul.f32.gmra.mxu0 %v188
  %v357 = vpop.f32.mrf.mxu0
  %v358 = vadd.f32 0.0, %v357
  %359 = vmatmul.f32.gmra.mxu0 %v191
  %v360 = vpop.f32.mrf.mxu0
  %v361 = vadd.f32 0.0, %v360
  %362 = vmatmul.f32.gmra.mxu0 %v194
  %v363 = vpop.f32.mrf.mxu0
  %v364 = vadd.f32 0.0, %v363
  %365 = vmatmul.f32.gmra.mxu0 %v197
  %v366 = vpop.f32.mrf.mxu0
  %v367 = vadd.f32 0.0, %v366
  %368 = vmatmul.f32.gmra.mxu0 %v200
  %v369 = vpop.f32.mrf.mxu0
  %v370 = vadd.f32 0.0, %v369
  %371 = vmatmul.f32.gmra.mxu0 %v203
  %v372 = vpop.f32.mrf.mxu0
  %v373 = vadd.f32 0.0, %v372
  %374 = vmatmul.f32.gmra.mxu0 %v206
  %v375 = vpop.f32.mrf.mxu0
  %v376 = vadd.f32 0.0, %v375
  %377 = vmatmul.f32.gmra.mxu0 %v209
  %v378 = vpop.f32.mrf.mxu0
  %v379 = vadd.f32 0.0, %v378
  %380 = vmatmul.f32.gmra.mxu0 %v212
  %v381 = vpop.f32.mrf.mxu0
  %v382 = vadd.f32 0.0, %v381
  %383 = vmatmul.f32.gmra.mxu0 %v215
  %v384 = vpop.f32.mrf.mxu0
  %v385 = vadd.f32 0.0, %v384
  %386 = vmatmul.f32.gmra.mxu0 %v218
  %v387 = vpop.f32.mrf.mxu0
  %v388 = vadd.f32 0.0, %v387
  %389 = vmatmul.f32.gmra.mxu0 %v221
  %v390 = vpop.f32.mrf.mxu0
  %v391 = vadd.f32 0.0, %v390
  %392 = vmatmul.f32.gmra.mxu0 %v224
  %v393 = vpop.f32.mrf.mxu0
  %v394 = vadd.f32 0.0, %v393
  %395 = vdwg.mxu0
  %v396 = vld [vmem:[%s2] sm:$0x1]
  %v398 = vperm.slane %v396, 0
  %v400 = vmul.f32 %v244, %v398
  %v401 = vmul.f32 %v247, %v398
  %v402 = vmul.f32 %v250, %v398
  %v403 = vmul.f32 %v253, %v398
  %v404 = vmul.f32 %v256, %v398
  %v405 = vmul.f32 %v259, %v398
  %v406 = vmul.f32 %v262, %v398
  %v407 = vmul.f32 %v265, %v398
  %v408 = vmul.f32 %v268, %v398
  %v409 = vmul.f32 %v271, %v398
  %v410 = vmul.f32 %v274, %v398
  %v411 = vmul.f32 %v277, %v398
  %v412 = vmul.f32 %v280, %v398
  %v413 = vmul.f32 %v283, %v398
  %v414 = vmul.f32 %v286, %v398
  %v415 = vmul.f32 %v289, %v398
  %v416 = vmul.f32 %v292, %v398
  %v417 = vmul.f32 %v295, %v398
  %v418 = vmul.f32 %v298, %v398
  %v419 = vmul.f32 %v301, %v398
  %v420 = vmul.f32 %v304, %v398
  %v421 = vmul.f32 %v307, %v398
  %v422 = vmul.f32 %v310, %v398
  %v423 = vmul.f32 %v313, %v398
  %v424 = vmul.f32 %v316, %v398
  %v425 = vmul.f32 %v319, %v398
  %v426 = vmul.f32 %v322, %v398
  %v427 = vmul.f32 %v325, %v398
  %v428 = vmul.f32 %v328, %v398
  %v429 = vmul.f32 %v331, %v398
  %v430 = vmul.f32 %v334, %v398
  %v431 = vmul.f32 %v337, %v398
  %v432 = vmul.f32 %v340, %v398
  %v433 = vmul.f32 %v343, %v398
  %v434 = vmul.f32 %v346, %v398
  %v435 = vmul.f32 %v349, %v398
  %v436 = vmul.f32 %v352, %v398
  %v437 = vmul.f32 %v355, %v398
  %v438 = vmul.f32 %v358, %v398
  %v439 = vmul.f32 %v361, %v398
  %v440 = vmul.f32 %v364, %v398
  %v441 = vmul.f32 %v367, %v398
  %v442 = vmul.f32 %v370, %v398
  %v443 = vmul.f32 %v373, %v398
  %v444 = vmul.f32 %v376, %v398
  %v445 = vmul.f32 %v379, %v398
  %v446 = vmul.f32 %v382, %v398
  %v447 = vmul.f32 %v385, %v398
  %v448 = vmul.f32 %v388, %v398
  %v449 = vmul.f32 %v391, %v398
  %v450 = vmul.f32 %v394, %v398
  %v451 = vld [vmem:[%s3] sm:$0x1]
  %v453 = vperm.slane %v451, 0
  %v455 = vadd.f32 %v400, %v453
  %v456 = vadd.f32 %v401, %v453
  %v457 = vadd.f32 %v402, %v453
  %v458 = vadd.f32 %v403, %v453
  %v459 = vadd.f32 %v404, %v453
  %v460 = vadd.f32 %v405, %v453
  %v461 = vadd.f32 %v406, %v453
  %v462 = vadd.f32 %v407, %v453
  %v463 = vadd.f32 %v408, %v453
  %v464 = vadd.f32 %v409, %v453
  %v465 = vadd.f32 %v410, %v453
  %v466 = vadd.f32 %v411, %v453
  %v467 = vadd.f32 %v412, %v453
  %v468 = vadd.f32 %v413, %v453
  %v469 = vadd.f32 %v414, %v453
  %v470 = vadd.f32 %v415, %v453
  %v471 = vadd.f32 %v416, %v453
  %v472 = vadd.f32 %v417, %v453
  %v473 = vadd.f32 %v418, %v453
  %v474 = vadd.f32 %v419, %v453
  %v475 = vadd.f32 %v420, %v453
  %v476 = vadd.f32 %v421, %v453
  %v477 = vadd.f32 %v422, %v453
  %v478 = vadd.f32 %v423, %v453
  %v479 = vadd.f32 %v424, %v453
  %v480 = vadd.f32 %v425, %v453
  %v481 = vadd.f32 %v426, %v453
  %v482 = vadd.f32 %v427, %v453
  %v483 = vadd.f32 %v428, %v453
  %v484 = vadd.f32 %v429, %v453
  %v485 = vadd.f32 %v430, %v453
  %v486 = vadd.f32 %v431, %v453
  %v487 = vadd.f32 %v432, %v453
  %v488 = vadd.f32 %v433, %v453
  %v489 = vadd.f32 %v434, %v453
  %v490 = vadd.f32 %v435, %v453
  %v491 = vadd.f32 %v436, %v453
  %v492 = vadd.f32 %v437, %v453
  %v493 = vadd.f32 %v438, %v453
  %v494 = vadd.f32 %v439, %v453
  %v495 = vadd.f32 %v440, %v453
  %v496 = vadd.f32 %v441, %v453
  %v497 = vadd.f32 %v442, %v453
  %v498 = vadd.f32 %v443, %v453
  %v499 = vadd.f32 %v444, %v453
  %v500 = vadd.f32 %v445, %v453
  %v501 = vadd.f32 %v446, %v453
  %v502 = vadd.f32 %v447, %v453
  %v503 = vadd.f32 %v448, %v453
  %v504 = vadd.f32 %v449, %v453
  %v505 = vadd.f32 %v450, %v453
  %v506 = vmax.f32 %v455, 0.0
  %v507 = vmax.f32 %v456, 0.0
  %v508 = vmax.f32 %v457, 0.0
  %v509 = vmax.f32 %v458, 0.0
  %v510 = vmax.f32 %v459, 0.0
  %v511 = vmax.f32 %v460, 0.0
  %v512 = vmax.f32 %v461, 0.0
  %v513 = vmax.f32 %v462, 0.0
  %v514 = vmax.f32 %v463, 0.0
  %v515 = vmax.f32 %v464, 0.0
  %v516 = vmax.f32 %v465, 0.0
  %v517 = vmax.f32 %v466, 0.0
  %v518 = vmax.f32 %v467, 0.0
  %v519 = vmax.f32 %v468, 0.0
  %v520 = vmax.f32 %v469, 0.0
  %v521 = vmax.f32 %v470, 0.0
  %v522 = vmax.f32 %v471, 0.0
  %v523 = vmax.f32 %v472, 0.0
  %v524 = vmax.f32 %v473, 0.0
  %v525 = vmax.f32 %v474, 0.0
  %v526 = vmax.f32 %v475, 0.0
  %v527 = vmax.f32 %v476, 0.0
  %v528 = vmax.f32 %v477, 0.0
  %v529 = vmax.f32 %v478, 0.0
  %v530 = vmax.f32 %v479, 0.0
  %v531 = vmax.f32 %v480, 0.0
  %v532 = vmax.f32 %v481, 0.0
  %v533 = vmax.f32 %v482, 0.0
  %v534 = vmax.f32 %v483, 0.0
  %v535 = vmax.f32 %v484, 0.0
  %v536 = vmax.f32 %v485, 0.0
  %v537 = vmax.f32 %v486, 0.0
  %v538 = vmax.f32 %v487, 0.0
  %v539 = vmax.f32 %v488, 0.0
  %v540 = vmax.f32 %v489, 0.0
  %v541 = vmax.f32 %v490, 0.0
  %v542 = vmax.f32 %v491, 0.0
  %v543 = vmax.f32 %v492, 0.0
  %v544 = vmax.f32 %v493, 0.0
  %v545 = vmax.f32 %v494, 0.0
  %v546 = vmax.f32 %v495, 0.0
  %v547 = vmax.f32 %v496, 0.0
  %v548 = vmax.f32 %v497, 0.0
  %v549 = vmax.f32 %v498, 0.0
  %v550 = vmax.f32 %v499, 0.0
  %v551 = vmax.f32 %v500, 0.0
  %v552 = vmax.f32 %v501, 0.0
  %v553 = vmax.f32 %v502, 0.0
  %v554 = vmax.f32 %v503, 0.0
  %v555 = vmax.f32 %v504, 0.0
  %v556 = vmax.f32 %v505, 0.0
  %v557 = vmin.f32 %v506, 6.0
  %v558 = vmin.f32 %v507, 6.0
  %v559 = vmin.f32 %v508, 6.0
  %v560 = vmin.f32 %v509, 6.0
  %v561 = vmin.f32 %v510, 6.0
  %v562 = vmin.f32 %v511, 6.0
  %v563 = vmin.f32 %v512, 6.0
  %v564 = vmin.f32 %v513, 6.0
  %v565 = vmin.f32 %v514, 6.0
  %v566 = vmin.f32 %v515, 6.0
  %v567 = vmin.f32 %v516, 6.0
  %v568 = vmin.f32 %v517, 6.0
  %v569 = vmin.f32 %v518, 6.0
  %v570 = vmin.f32 %v519, 6.0
  %v571 = vmin.f32 %v520, 6.0
  %v572 = vmin.f32 %v521, 6.0
  %v573 = vmin.f32 %v522, 6.0
  %v574 = vmin.f32 %v523, 6.0
  %v575 = vmin.f32 %v524, 6.0
  %v576 = vmin.f32 %v525, 6.0
  %v577 = vmin.f32 %v526, 6.0
  %v578 = vmin.f32 %v527, 6.0
  %v579 = vmin.f32 %v528, 6.0
  %v580 = vmin.f32 %v529, 6.0
  %v581 = vmin.f32 %v530, 6.0
  %v582 = vmin.f32 %v531, 6.0
  %v583 = vmin.f32 %v532, 6.0
  %v584 = vmin.f32 %v533, 6.0
  %v585 = vmin.f32 %v534, 6.0
  %v586 = vmin.f32 %v535, 6.0
  %v587 = vmin.f32 %v536, 6.0
  %v588 = vmin.f32 %v537, 6.0
  %v589 = vmin.f32 %v538, 6.0
  %v590 = vmin.f32 %v539, 6.0
  %v591 = vmin.f32 %v540, 6.0
  %v592 = vmin.f32 %v541, 6.0
  %v593 = vmin.f32 %v542, 6.0
  %v594 = vmin.f32 %v543, 6.0
  %v595 = vmin.f32 %v544, 6.0
  %v596 = vmin.f32 %v545, 6.0
  %v597 = vmin.f32 %v546, 6.0
  %v598 = vmin.f32 %v547, 6.0
  %v599 = vmin.f32 %v548, 6.0
  %v600 = vmin.f32 %v549, 6.0
  %v601 = vmin.f32 %v550, 6.0
  %v602 = vmin.f32 %v551, 6.0
  %v603 = vmin.f32 %v552, 6.0
  %v604 = vmin.f32 %v553, 6.0
  %v605 = vmin.f32 %v554, 6.0
  %v606 = vmin.f32 %v555, 6.0
  %v607 = vmin.f32 %v556, 6.0
  %608 = vst [vmem:[%s4] sm:$0xff] %v557
  %609 = vst [vmem:[%s4 + $0x8] sm:$0xff] %v558
  %610 = vst [vmem:[%s4 + $0x10] sm:$0xff] %v559
  %611 = vst [vmem:[%s4 + $0x18] sm:$0xff] %v560
  %612 = vst [vmem:[%s4 + $0x20] sm:$0xff] %v561
  %613 = vst [vmem:[%s4 + $0x28] sm:$0xff] %v562
  %614 = vst [vmem:[%s4 + $0x30] sm:$0xff] %v563
  %615 = vst [vmem:[%s4 + $0x38] sm:$0xff] %v564
  %616 = vst [vmem:[%s4 + $0x40] sm:$0xff] %v565
  %617 = vst [vmem:[%s4 + $0x48] sm:$0xff] %v566
  %618 = vst [vmem:[%s4 + $0x50] sm:$0xff] %v567
  %619 = vst [vmem:[%s4 + $0x58] sm:$0xff] %v568
  %620 = vst [vmem:[%s4 + $0x60] sm:$0xff] %v569
  %621 = vst [vmem:[%s4 + $0x68] sm:$0xff] %v570
  %622 = vst [vmem:[%s4 + $0x70] sm:$0xff] %v571
  %623 = vst [vmem:[%s4 + $0x78] sm:$0xff] %v572
  %624 = vst [vmem:[%s4 + $0x80] sm:$0xff] %v573
  %625 = vst [vmem:[%s4 + $0x88] sm:$0xff] %v574
  %626 = vst [vmem:[%s4 + $0x90] sm:$0xff] %v575
  %627 = vst [vmem:[%s4 + $0x98] sm:$0xff] %v576
  %628 = vst [vmem:[%s4 + $0xa0] sm:$0xff] %v577
  %629 = vst [vmem:[%s4 + $0xa8] sm:$0xff] %v578
  %630 = vst [vmem:[%s4 + $0xb0] sm:$0xff] %v579
  %631 = vst [vmem:[%s4 + $0xb8] sm:$0xff] %v580
  %632 = vst [vmem:[%s4 + $0xc0] sm:$0xff] %v581
  %633 = vst [vmem:[%s4 + $0xc8] sm:$0xff] %v582
  %634 = vst [vmem:[%s4 + $0xd0] sm:$0xff] %v583
  %635 = vst [vmem:[%s4 + $0xd8] sm:$0xff] %v584
  %636 = vst [vmem:[%s4 + $0xe0] sm:$0xff] %v585
  %637 = vst [vmem:[%s4 + $0xe8] sm:$0xff] %v586
  %638 = vst [vmem:[%s4 + $0xf0] sm:$0xff] %v587
  %639 = vst [vmem:[%s4 + $0xf8] sm:$0xff] %v588
  %640 = vst [vmem:[%s4 + $0x100] sm:$0xff] %v589
  %641 = vst [vmem:[%s4 + $0x108] sm:$0xff] %v590
  %642 = vst [vmem:[%s4 + $0x110] sm:$0xff] %v591
  %643 = vst [vmem:[%s4 + $0x118] sm:$0xff] %v592
  %644 = vst [vmem:[%s4 + $0x120] sm:$0xff] %v593
  %645 = vst [vmem:[%s4 + $0x128] sm:$0xff] %v594
  %646 = vst [vmem:[%s4 + $0x130] sm:$0xff] %v595
  %647 = vst [vmem:[%s4 + $0x138] sm:$0xff] %v596
  %648 = vst [vmem:[%s4 + $0x140] sm:$0xff] %v597
  %649 = vst [vmem:[%s4 + $0x148] sm:$0xff] %v598
  %650 = vst [vmem:[%s4 + $0x150] sm:$0xff] %v599
  %651 = vst [vmem:[%s4 + $0x158] sm:$0xff] %v600
  %652 = vst [vmem:[%s4 + $0x160] sm:$0xff] %v601
  %653 = vst [vmem:[%s4 + $0x168] sm:$0xff] %v602
  %654 = vst [vmem:[%s4 + $0x170] sm:$0xff] %v603
  %655 = vst [vmem:[%s4 + $0x178] sm:$0xff] %v604
  %656 = vst [vmem:[%s4 + $0x180] sm:$0xff] %v605
  %657 = vst [vmem:[%s4 + $0x188] sm:$0xff] %v606
  %658 = vst [vmem:[%s4 + $0x190] sm:$0xff] %v607
  // Predicated region
  $region18: #{_lambda_.2} parent=0 // pred_check
    _
  $region19: #{_lambda_.2} parent=0 // pred_check_branch
    %660 = sbr.rel (0) target = $region21
  $region20: #{_lambda_.2} parent=0 // pred_region
    _
  $region21: #{_lambda_.2} parent=0 // pred_fallthru
    _
  // Predicated region
  $region22: #{_lambda_.2} parent=0 // pred_check
    _
  $region23: #{_lambda_.2} parent=0 // pred_check_branch
    %662 = sbr.rel (0) target = $region25
  $region24: #{_lambda_.2} parent=0 // pred_region
    _
  $region25: #{_lambda_.2} parent=0 // pred_fallthru
    _

// kernel: _lambda_.3
$region0: #{_lambda_.3}
  #allocation0 [shape = 'u32[]', space=smem, size = 0x4, offset = 0x4, fixed_abs, tag = 'smem constant byte address 0x4 - core index']
  #allocation1 [shape = 'u32[72,128]{1,0:T(1,128)}', space=vmem, size = 0x9000, scoped, tag = 'internal scratch']
  #allocation2 [shape = 'f32[72,288]{1,0:T(8,128)}', space=vmem, size = 0x1b000, scoped, tag = 'scratch operand']
  #allocation3 [shape = 'f32[64,288]{1,0:T(8,128)}', space=vmem, size = 0x18000, scoped, tag = 'scratch operand']
  #allocation4 [shape = 'f32[64,288]{1,0:T(8,128)}', space=vmem, size = 0x18000, scoped, tag = 'scratch operand']
  #allocation5 [shape = 'f32[64,288]{1,0:T(8,128)}', space=vmem, size = 0x18000, scoped, tag = 'scratch operand']
  #allocation6 [shape = 'f32[64,288]{1,0:T(8,128)}', space=vmem, size = 0x18000, scoped, tag = 'scratch operand']
  #allocation7 [shape = 'f32[64,16]{1,0:T(8,128)}', space=vmem, size = 0x8000, scoped, tag = 'scratch operand']
  #allocation8 [shape = 'f32[64,288]{1,0:T(8,128)}', space=vmem, size = 0x18000, scoped, tag = 'scratch operand']
  %s0 = inlined_call_operand.vmem [shape: f32[2,64,144], index: 0, kind: input, shape index: {}]
  %s1 = inlined_call_operand.vmem [shape: f32[144,288], index: 1, kind: input, shape index: {}]
  %s2 = inlined_call_operand.vmem [shape: f32[144,288], index: 2, kind: input, shape index: {}]
  %s3 = inlined_call_operand.vmem [shape: f32[4,288], index: 3, kind: input, shape index: {}]
  %s4 = inlined_call_operand.vmem [shape: f32[1,288], index: 4, kind: input, shape index: {}]
  %s5 = inlined_call_operand.vmem [shape: f32[288,288], index: 5, kind: input, shape index: {}]
  %s6 = inlined_call_operand.vmem [shape: f32[288,16], index: 6, kind: input, shape index: {}]
  %s7 = inlined_call_operand.vmem [shape: f32[1,288], index: 7, kind: input, shape index: {}]
  %s8 = inlined_call_operand.vmem [shape: f32[8,288], index: 8, kind: input, shape index: {}]
  %s9 = inlined_call_operand.vmem [shape: f32[1,288], index: 9, kind: input, shape index: {}]
  %s10 = inlined_call_operand.vmem [shape: f32[288,144], index: 10, kind: input, shape index: {}]
  %s11 = inlined_call_operand.hbm [shape: f32[2,64,144], index: 11, kind: output, shape index: {}]
  %s12 = sld [smem:[#allocation0]]
  $region84: #{_lambda_.3} parent=0
    _
  %s14 = ssub.s32 1, %s12
  %s15 = scalar_select 0, %s14, %s12
  $region1: #{_lambda_.3} parent=0
    #allocation9 [shape = 'u8[131072]{0}', space=vmem, size = 0x20000, scoped, tag = 'output window, operand 0']
    #allocation10 [shape = 's32[2]{0}', space=sflag, size = 0x8, scoped, tag = 'scoped memory for _lambda_.3']
    %16 = vsyncpa [#allocation10], 0
    %s17 = scalar_lea.sflag [#allocation10], 1
    %18 = vsyncpa %s17, 0
    loop: start=0, step=1, limit=4
    $region2: #{_lambda_.3} parent=1 // loop_pre_header
      _
    $region3: #{_lambda_.3} parent=1 // loop_header
      %s20 = sphi 0, %s24
      %p21 = scmp.ge.s32.totalorder %s20, 4
      %s30 = sphi 0, %s32
      %s33 = sphi 0, %s30
      %s34 = sphi 0, %s33
      %s50 = sphi 0, %s34
      %s54 = sphi 0, %s54
      %s56 = sphi 0, %s54
      %s57 = sphi 0, %s56
      %s71 = sphi 0, %s57
      %s75 = sphi 0, %s75
      %s77 = sphi 0, %s75
      %s78 = sphi 0, %s77
      %s92 = sphi 0, %s78
      %s96 = sphi 0, %s96
      %s98 = sphi 0, %s96
      %s99 = sphi 0, %s98
      %s113 = sphi 0, %s99
      %s117 = sphi 0, %s117
      %s119 = sphi 0, %s117
      %s120 = sphi 0, %s119
      %s134 = sphi 0, %s120
      %s138 = sphi 0, %s138
      %s140 = sphi 0, %s138
      %s141 = sphi 0, %s140
      %s155 = sphi 0, %s141
      %s159 = sphi 0, %s159
      %s161 = sphi 0, %s159
      %s162 = sphi 0, %s161
      %s176 = sphi 0, %s162
      %s180 = sphi 0, %s180
      %s182 = sphi 0, %s180
      %s183 = sphi 0, %s182
      %s197 = sphi 0, %s183
      %s201 = sphi 0, %s201
      %s203 = sphi 0, %s201
      %s204 = sphi 0, %s203
      %s218 = sphi 0, %s204
      %s222 = sphi 0, %s222
      %s224 = sphi 0, %s222
      %s225 = sphi 0, %s224
      %s239 = sphi 0, %s225
      %s243 = sphi 0, %s243
      %s245 = sphi 0, %s243
      %s246 = sphi 0, %s245
      %s260 = sphi 0, %s246
      %s266 = sphi 0, %s268
      %s269 = sphi 0, %s266
      %s270 = sphi 0, %s269
      %s286 = sphi 0, %s270
    $region4: #{_lambda_.3} parent=1 // loop_header_branch
      %23 = sbr.rel (%p21) target = $region8
    $region5: #{_lambda_.3} parent=1 // loop_body
      %s25 = ssub.s32 %s20, 1
      %s26 = ssub.s32 %s20, 2
      %s27 = sadd.s32 %s20, 1
      %s28 = ssub.s32 %s20, %s27
      %p29 = scmp.eq.s32.totalorder %s28, 0
      %s31 = sadd.s32 %s30, 1
      %s32 = scalar_select %p29, %s30, %s31
      %p35 = pneg %p29
      %p36 = scmp.eq.s32.totalorder %s20, 1
      %p37 = por %p35, %p36
      %p38 = scmp.ne.s32.totalorder %s30, %s33
      %p39 = scmp.eq.s32.totalorder %s20, 0
      %p40 = por %p38, %p39
      %p41 = scmp.ne.s32.totalorder %s30, %s33
      %p42 = scmp.eq.s32.totalorder %s25, 1
      %p43 = por %p41, %p42
      %p44 = scmp.ne.s32.totalorder %s33, %s34
      %p45 = scmp.eq.s32.totalorder %s25, 0
      %p46 = por %p44, %p45
      %p47 = scmp.ne.s32.totalorder %s33, %s34
      %p48 = scmp.eq.s32.totalorder %s26, 1
      %p49 = por %p47, %p48
      %p51 = scmp.ne.s32.totalorder %s34, %s50
      %p52 = scmp.eq.s32.totalorder %s26, 0
      %p53 = por %p51, %p52
      %s55 = sadd.s32 %s54, 1
      %p58 = scmp.eq.s32.totalorder %s20, 1
      %p59 = scmp.ne.s32.totalorder %s54, %s56
      %p60 = scmp.eq.s32.totalorder %s20, 0
      %p61 = por %p59, %p60
      %p62 = scmp.ne.s32.totalorder %s54, %s56
      %p63 = scmp.eq.s32.totalorder %s25, 1
      %p64 = por %p62, %p63
      %p65 = scmp.ne.s32.totalorder %s56, %s57
      %p66 = scmp.eq.s32.totalorder %s25, 0
      %p67 = por %p65, %p66
      %p68 = scmp.ne.s32.totalorder %s56, %s57
      %p69 = scmp.eq.s32.totalorder %s26, 1
      %p70 = por %p68, %p69
      %p72 = scmp.ne.s32.totalorder %s57, %s71
      %p73 = scmp.eq.s32.totalorder %s26, 0
      %p74 = por %p72, %p73
      %s76 = sadd.s32 %s75, 1
      %p79 = scmp.eq.s32.totalorder %s20, 1
      %p80 = scmp.ne.s32.totalorder %s75, %s77
      %p81 = scmp.eq.s32.totalorder %s20, 0
      %p82 = por %p80, %p81
      %p83 = scmp.ne.s32.totalorder %s75, %s77
      %p84 = scmp.eq.s32.totalorder %s25, 1
      %p85 = por %p83, %p84
      %p86 = scmp.ne.s32.totalorder %s77, %s78
      %p87 = scmp.eq.s32.totalorder %s25, 0
      %p88 = por %p86, %p87
      %p89 = scmp.ne.s32.totalorder %s77, %s78
      %p90 = scmp.eq.s32.totalorder %s26, 1
      %p91 = por %p89, %p90
      %p93 = scmp.ne.s32.totalorder %s78, %s92
      %p94 = scmp.eq.s32.totalorder %s26, 0
      %p95 = por %p93, %p94
      %s97 = sadd.s32 %s96, 1
      %p100 = scmp.eq.s32.totalorder %s20, 1
      %p101 = scmp.ne.s32.totalorder %s96, %s98
      %p102 = scmp.eq.s32.totalorder %s20, 0
      %p103 = por %p101, %p102
      %p104 = scmp.ne.s32.totalorder %s96, %s98
      %p105 = scmp.eq.s32.totalorder %s25, 1
      %p106 = por %p104, %p105
      %p107 = scmp.ne.s32.totalorder %s98, %s99
      %p108 = scmp.eq.s32.totalorder %s25, 0
      %p109 = por %p107, %p108
      %p110 = scmp.ne.s32.totalorder %s98, %s99
      %p111 = scmp.eq.s32.totalorder %s26, 1
      %p112 = por %p110, %p111
      %p114 = scmp.ne.s32.totalorder %s99, %s113
      %p115 = scmp.eq.s32.totalorder %s26, 0
      %p116 = por %p114, %p115
      %s118 = sadd.s32 %s117, 1
      %p121 = scmp.eq.s32.totalorder %s20, 1
      %p122 = scmp.ne.s32.totalorder %s117, %s119
      %p123 = scmp.eq.s32.totalorder %s20, 0
      %p124 = por %p122, %p123
      %p125 = scmp.ne.s32.totalorder %s117, %s119
      %p126 = scmp.eq.s32.totalorder %s25, 1
      %p127 = por %p125, %p126
      %p128 = scmp.ne.s32.totalorder %s119, %s120
      %p129 = scmp.eq.s32.totalorder %s25, 0
      %p130 = por %p128, %p129
      %p131 = scmp.ne.s32.totalorder %s119, %s120
      %p132 = scmp.eq.s32.totalorder %s26, 1
      %p133 = por %p131, %p132
      %p135 = scmp.ne.s32.totalorder %s120, %s134
      %p136 = scmp.eq.s32.totalorder %s26, 0
      %p137 = por %p135, %p136
      %s139 = sadd.s32 %s138, 1
      %p142 = scmp.eq.s32.totalorder %s20, 1
      %p143 = scmp.ne.s32.totalorder %s138, %s140
      %p144 = scmp.eq.s32.totalorder %s20, 0
      %p145 = por %p143, %p144
      %p146 = scmp.ne.s32.totalorder %s138, %s140
      %p147 = scmp.eq.s32.totalorder %s25, 1
      %p148 = por %p146, %p147
      %p149 = scmp.ne.s32.totalorder %s140, %s141
      %p150 = scmp.eq.s32.totalorder %s25, 0
      %p151 = por %p149, %p150
      %p152 = scmp.ne.s32.totalorder %s140, %s141
      %p153 = scmp.eq.s32.totalorder %s26, 1
      %p154 = por %p152, %p153
      %p156 = scmp.ne.s32.totalorder %s141, %s155
      %p157 = scmp.eq.s32.totalorder %s26, 0
      %p158 = por %p156, %p157
      %s160 = sadd.s32 %s159, 1
      %p163 = scmp.eq.s32.totalorder %s20, 1
      %p164 = scmp.ne.s32.totalorder %s159, %s161
      %p165 = scmp.eq.s32.totalorder %s20, 0
      %p166 = por %p164, %p165
      %p167 = scmp.ne.s32.totalorder %s159, %s161
      %p168 = scmp.eq.s32.totalorder %s25, 1
      %p169 = por %p167, %p168
      %p170 = scmp.ne.s32.totalorder %s161, %s162
      %p171 = scmp.eq.s32.totalorder %s25, 0
      %p172 = por %p170, %p171
      %p173 = scmp.ne.s32.totalorder %s161, %s162
      %p174 = scmp.eq.s32.totalorder %s26, 1
      %p175 = por %p173, %p174
      %p177 = scmp.ne.s32.totalorder %s162, %s176
      %p178 = scmp.eq.s32.totalorder %s26, 0
      %p179 = por %p177, %p178
      %s181 = sadd.s32 %s180, 1
      %p184 = scmp.eq.s32.totalorder %s20, 1
      %p185 = scmp.ne.s32.totalorder %s180, %s182
      %p186 = scmp.eq.s32.totalorder %s20, 0
      %p187 = por %p185, %p186
      %p188 = scmp.ne.s32.totalorder %s180, %s182
      %p189 = scmp.eq.s32.totalorder %s25, 1
      %p190 = por %p188, %p189
      %p191 = scmp.ne.s32.totalorder %s182, %s183
      %p192 = scmp.eq.s32.totalorder %s25, 0
      %p193 = por %p191, %p192
      %p194 = scmp.ne.s32.totalorder %s182, %s183
      %p195 = scmp.eq.s32.totalorder %s26, 1
      %p196 = por %p194, %p195
      %p198 = scmp.ne.s32.totalorder %s183, %s197
      %p199 = scmp.eq.s32.totalorder %s26, 0
      %p200 = por %p198, %p199
      %s202 = sadd.s32 %s201, 1
      %p205 = scmp.eq.s32.totalorder %s20, 1
      %p206 = scmp.ne.s32.totalorder %s201, %s203
      %p207 = scmp.eq.s32.totalorder %s20, 0
      %p208 = por %p206, %p207
      %p209 = scmp.ne.s32.totalorder %s201, %s203
      %p210 = scmp.eq.s32.totalorder %s25, 1
      %p211 = por %p209, %p210
      %p212 = scmp.ne.s32.totalorder %s203, %s204
      %p213 = scmp.eq.s32.totalorder %s25, 0
      %p214 = por %p212, %p213
      %p215 = scmp.ne.s32.totalorder %s203, %s204
      %p216 = scmp.eq.s32.totalorder %s26, 1
      %p217 = por %p215, %p216
      %p219 = scmp.ne.s32.totalorder %s204, %s218
      %p220 = scmp.eq.s32.totalorder %s26, 0
      %p221 = por %p219, %p220
      %s223 = sadd.s32 %s222, 1
      %p226 = scmp.eq.s32.totalorder %s20, 1
      %p227 = scmp.ne.s32.totalorder %s222, %s224
      %p228 = scmp.eq.s32.totalorder %s20, 0
      %p229 = por %p227, %p228
      %p230 = scmp.ne.s32.totalorder %s222, %s224
      %p231 = scmp.eq.s32.totalorder %s25, 1
      %p232 = por %p230, %p231
      %p233 = scmp.ne.s32.totalorder %s224, %s225
      %p234 = scmp.eq.s32.totalorder %s25, 0
      %p235 = por %p233, %p234
      %p236 = scmp.ne.s32.totalorder %s224, %s225
      %p237 = scmp.eq.s32.totalorder %s26, 1
      %p238 = por %p236, %p237
      %p240 = scmp.ne.s32.totalorder %s225, %s239
      %p241 = scmp.eq.s32.totalorder %s26, 0
      %p242 = por %p240, %p241
      %s244 = sadd.s32 %s243, 1
      %p247 = scmp.eq.s32.totalorder %s20, 1
      %p248 = scmp.ne.s32.totalorder %s243, %s245
      %p249 = scmp.eq.s32.totalorder %s20, 0
      %p250 = por %p248, %p249
      %p251 = scmp.ne.s32.totalorder %s243, %s245
      %p252 = scmp.eq.s32.totalorder %s25, 1
      %p253 = por %p251, %p252
      %p254 = scmp.ne.s32.totalorder %s245, %s246
      %p255 = scmp.eq.s32.totalorder %s25, 0
      %p256 = por %p254, %p255
      %p257 = scmp.ne.s32.totalorder %s245, %s246
      %p258 = scmp.eq.s32.totalorder %s26, 1
      %p259 = por %p257, %p258
      %p261 = scmp.ne.s32.totalorder %s246, %s260
      %p262 = scmp.eq.s32.totalorder %s26, 0
      %p263 = por %p261, %p262
      %s264 = ssub.s32 %s20, %s27
      %p265 = scmp.eq.s32.totalorder %s264, 0
      %s267 = sadd.s32 %s266, 1
      %s268 = scalar_select %p265, %s266, %s267
      %p271 = pneg %p265
      %p272 = scmp.eq.s32.totalorder %s20, 1
      %p273 = por %p271, %p272
      %p274 = scmp.ne.s32.totalorder %s266, %s269
      %p275 = scmp.eq.s32.totalorder %s20, 0
      %p276 = por %p274, %p275
      %p277 = scmp.ne.s32.totalorder %s266, %s269
      %p278 = scmp.eq.s32.totalorder %s25, 1
      %p279 = por %p277, %p278
      %p280 = scmp.ne.s32.totalorder %s269, %s270
      %p281 = scmp.eq.s32.totalorder %s25, 0
      %p282 = por %p280, %p281
      %p283 = scmp.ne.s32.totalorder %s269, %s270
      %p284 = scmp.eq.s32.totalorder %s26, 1
      %p285 = por %p283, %p284
      %p287 = scmp.ne.s32.totalorder %s270, %s286
      %p288 = scmp.eq.s32.totalorder %s26, 0
      %p289 = por %p287, %p288
      %p290 = scmp.le.s32.totalorder 1, %s20
      %p291 = scmp.lt.s32.totalorder %s20, 3
      %p292 = pnand %p290, %p291
      %p293 = pneg %p292
      // Predicated region
      $region9: #{_lambda_.3} parent=5 // pred_check
        _
      $region10: #{_lambda_.3} parent=5 // pred_check_branch
        %295 = sbr.rel (%p292) target = $region12
      $region11: #{_lambda_.3} parent=5 // pred_region
        %s296 = ssub.s32 %s20, 1
        // Predicated region
        $region13: #{_lambda_.3} parent=11 // pred_check
          %p297 = pneg %p67
        $region14: #{_lambda_.3} parent=11 // pred_check_branch
          %299 = sbr.rel (%p297) target = $region16
        $region15: #{_lambda_.3} parent=11 // pred_region
          _
        $region16: #{_lambda_.3} parent=11 // pred_fallthru
          _
        // Predicated region
        $region17: #{_lambda_.3} parent=11 // pred_check
          %p300 = pneg %p88
        $region18: #{_lambda_.3} parent=11 // pred_check_branch
          %302 = sbr.rel (%p300) target = $region20
        $region19: #{_lambda_.3} parent=11 // pred_region
          _
        $region20: #{_lambda_.3} parent=11 // pred_fallthru
          _
        // Predicated region
        $region21: #{_lambda_.3} parent=11 // pred_check
          %p303 = pneg %p109
        $region22: #{_lambda_.3} parent=11 // pred_check_branch
          %305 = sbr.rel (%p303) target = $region24
        $region23: #{_lambda_.3} parent=11 // pred_region
          _
        $region24: #{_lambda_.3} parent=11 // pred_fallthru
          _
        // Predicated region
        $region25: #{_lambda_.3} parent=11 // pred_check
          %p306 = pneg %p130
        $region26: #{_lambda_.3} parent=11 // pred_check_branch
          %308 = sbr.rel (%p306) target = $region28
        $region27: #{_lambda_.3} parent=11 // pred_region
          _
        $region28: #{_lambda_.3} parent=11 // pred_fallthru
          _
        // Predicated region
        $region29: #{_lambda_.3} parent=11 // pred_check
          %p309 = pneg %p151
        $region30: #{_lambda_.3} parent=11 // pred_check_branch
          %311 = sbr.rel (%p309) target = $region32
        $region31: #{_lambda_.3} parent=11 // pred_region
          _
        $region32: #{_lambda_.3} parent=11 // pred_fallthru
          _
        // Predicated region
        $region33: #{_lambda_.3} parent=11 // pred_check
          %p312 = pneg %p172
        $region34: #{_lambda_.3} parent=11 // pred_check_branch
          %314 = sbr.rel (%p312) target = $region36
        $region35: #{_lambda_.3} parent=11 // pred_region
          _
        $region36: #{_lambda_.3} parent=11 // pred_fallthru
          _
        // Predicated region
        $region37: #{_lambda_.3} parent=11 // pred_check
          %p315 = pneg %p193
        $region38: #{_lambda_.3} parent=11 // pred_check_branch
          %317 = sbr.rel (%p315) target = $region40
        $region39: #{_lambda_.3} parent=11 // pred_region
          _
        $region40: #{_lambda_.3} parent=11 // pred_fallthru
          _
        // Predicated region
        $region41: #{_lambda_.3} parent=11 // pred_check
          %p318 = pneg %p214
        $region42: #{_lambda_.3} parent=11 // pred_check_branch
          %320 = sbr.rel (%p318) target = $region44
        $region43: #{_lambda_.3} parent=11 // pred_region
          _
        $region44: #{_lambda_.3} parent=11 // pred_fallthru
          _
        // Predicated region
        $region45: #{_lambda_.3} parent=11 // pred_check
          %p321 = pneg %p235
        $region46: #{_lambda_.3} parent=11 // pred_check_branch
          %323 = sbr.rel (%p321) target = $region48
        $region47: #{_lambda_.3} parent=11 // pred_region
          _
        $region48: #{_lambda_.3} parent=11 // pred_fallthru
          _
        // Predicated region
        $region49: #{_lambda_.3} parent=11 // pred_check
          %p324 = pneg %p256
        $region50: #{_lambda_.3} parent=11 // pred_check_branch
          %326 = sbr.rel (%p324) target = $region52
        $region51: #{_lambda_.3} parent=11 // pred_region
          _
        $region52: #{_lambda_.3} parent=11 // pred_fallthru
          _
      $region12: #{_lambda_.3} parent=5 // pred_fallthru
        _
      %p327 = scmp.lt.s32.totalorder %s20, 2
      // Predicated region
      $region53: #{_lambda_.3} parent=5 // pred_check
        %p328 = pneg %p327
      $region54: #{_lambda_.3} parent=5 // pred_check_branch
        %330 = sbr.rel (%p328) target = $region56
      $region55: #{_lambda_.3} parent=5 // pred_region
        // Predicated region
        $region57: #{_lambda_.3} parent=55 // pred_check
          %p331 = pneg %p40
        $region58: #{_lambda_.3} parent=55 // pred_check_branch
          %333 = sbr.rel (%p331) target = $region60
        $region59: #{_lambda_.3} parent=55 // pred_region
          %p334 = scmp.lt.s32.totalorder %s20, 1
          %s335 = scalar_select %p334, %s20, 1
          %s336 = smul.addr %s335, 16
          %s337 = smul.addr %s336, 8
          %s338 = scalar_lea.vmem %s0, %s337
        $region60: #{_lambda_.3} parent=55 // pred_fallthru
          _
      $region56: #{_lambda_.3} parent=5 // pred_fallthru
        _
      %p339 = scmp.le.s32.totalorder 1, %s20
      %p340 = scmp.lt.s32.totalorder %s20, 3
      %p341 = pnand %p339, %p340
      %p342 = pneg %p341
      // Predicated region
      $region61: #{_lambda_.3} parent=5 // pred_check
        _
      $region62: #{_lambda_.3} parent=5 // pred_check_branch
        %344 = sbr.rel (%p341) target = $region64
      $region63: #{_lambda_.3} parent=5 // pred_region
        %s345 = ssub.s32 %s20, 1
        %p346 = scmp.lt.s32.totalorder %s25, 1
        %s347 = scalar_select %p346, %s25, 1
        %s348 = smul.addr %s347, 16
        %s349 = smul.addr %s348, 8
        %s350 = scalar_lea.vmem %s0, %s349
        %p351 = pneg %p46
        %p352 = pneg %p43
        %p353 = pneg %p67
        %p354 = pneg %p64
        %p355 = pneg %p88
        %p356 = pneg %p85
        %p357 = pneg %p109
        %p358 = pneg %p106
        %p359 = pneg %p130
        %p360 = pneg %p127
        %p361 = pneg %p151
        %p362 = pneg %p148
        %p363 = pneg %p172
        %p364 = pneg %p169
        %p365 = pneg %p193
        %p366 = pneg %p190
        %p367 = pneg %p214
        %p368 = pneg %p211
        %p369 = pneg %p235
        %p370 = pneg %p232
        %p371 = pneg %p256
        %p372 = pneg %p253
        %p373 = pneg %p282
        %p374 = pneg %p279
        %s375 = sand.u32 %s269, 1
        %s376 = scalar_lea.sflag [#allocation10], %s375
        %s377 = sand.u32 %s269, 1
        %s378 = smul.addr %s377, 128
        %s379 = scalar_lea.vmem [#allocation9], %s378
        %p380 = scmp.lt.s32.totalorder %s25, 1
        %s381 = scalar_select %p380, %s25, 1
        %s382 = smul.addr %s381, 16
        %s383 = smul.addr %s382, 8
        %s384 = scalar_lea.vmem %s0, %s383
        %v385 = vld [vmem:[%s384] sm:$0xff]
        %v386 = vld [vmem:[%s384 + $0x8] sm:$0xff]
        %v387 = vld [vmem:[%s384 + $0x10] sm:$0xff]
        %v388 = vld [vmem:[%s384 + $0x18] sm:$0xff]
        %v389 = vld [vmem:[%s384 + $0x20] sm:$0xff]
        %v390 = vld [vmem:[%s384 + $0x28] sm:$0xff]
        %v391 = vld [vmem:[%s384 + $0x30] sm:$0xff]
        %v392 = vld [vmem:[%s384 + $0x38] sm:$0xff]
        %v393 = vld [vmem:[%s384 + $0x40] sm:$0xff]
        %v394 = vld [vmem:[%s384 + $0x48] sm:$0xff]
        %v395 = vld [vmem:[%s384 + $0x50] sm:$0xff]
        %v396 = vld [vmem:[%s384 + $0x58] sm:$0xff]
        %v397 = vld [vmem:[%s384 + $0x60] sm:$0xff]
        %v398 = vld [vmem:[%s384 + $0x68] sm:$0xff]
        %v399 = vld [vmem:[%s384 + $0x70] sm:$0xff]
        %v400 = vld [vmem:[%s384 + $0x78] sm:$0xff]
        %v401 = vld [vmem:[%s1] sm:$0xff]
        %v402 = vld [vmem:[%s1 + $0x8] sm:$0xff]
        %v403 = vld [vmem:[%s1 + $0x10] sm:$0xff]
        %v404 = vld [vmem:[%s1 + $0x18] sm:$0xff]
        %v405 = vld [vmem:[%s1 + $0x20] sm:$0xff]
        %v406 = vld [vmem:[%s1 + $0x28] sm:$0xff]
        %v407 = vld [vmem:[%s1 + $0x30] sm:$0xff]
        %v408 = vld [vmem:[%s1 + $0x38] sm:$0xff]
        %v409 = vld [vmem:[%s1 + $0x40] sm:$0xff]
        %v410 = vld [vmem:[%s1 + $0x48] sm:$0xff]
        %v411 = vld [vmem:[%s1 + $0x50] sm:$0xff]
        %v412 = vld [vmem:[%s1 + $0x58] sm:$0xff]
        %v413 = vld [vmem:[%s1 + $0x60] sm:$0xff]
        %v414 = vld [vmem:[%s1 + $0x68] sm:$0xff]
        %v415 = vld [vmem:[%s1 + $0x70] sm:$0xff]
        %v416 = vld [vmem:[%s1 + $0x78] sm:$0xff]
        %v417 = vld [vmem:[%s1 + $0x80] sm:$0xff]
        %v418 = vld [vmem:[%s1 + $0x88] sm:$0xff]
        %v419 = vld [vmem:[%s1 + $0x90] sm:$0xff]
        %v420 = vld [vmem:[%s1 + $0x98] sm:$0xff]
        %v421 = vld [vmem:[%s1 + $0xa0] sm:$0xff]
        %v422 = vld [vmem:[%s1 + $0xa8] sm:$0xff]
        %v423 = vld [vmem:[%s1 + $0xb0] sm:$0xff]
        %v424 = vld [vmem:[%s1 + $0xb8] sm:$0xff]
        %v425 = vld [vmem:[%s1 + $0xc0] sm:$0xff]
        %v426 = vld [vmem:[%s1 + $0xc8] sm:$0xff]
        %v427 = vld [vmem:[%s1 + $0xd0] sm:$0xff]
        %v428 = vld [vmem:[%s1 + $0xd8] sm:$0xff]
        %v429 = vld [vmem:[%s1 + $0xe0] sm:$0xff]
        %v430 = vld [vmem:[%s1 + $0xe8] sm:$0xff]
        %v431 = vld [vmem:[%s1 + $0xf0] sm:$0xff]
        %v432 = vld [vmem:[%s1 + $0xf8] sm:$0xff]
        %v433 = vld [vmem:[%s1 + $0x100] sm:$0xff]
        %v434 = vld [vmem:[%s1 + $0x108] sm:$0xff]
        %v435 = vld [vmem:[%s1 + $0x110] sm:$0xff]
        %v436 = vld [vmem:[%s1 + $0x118] sm:$0xff]
        %v437 = vld [vmem:[%s1 + $0x120] sm:$0xff]
        %v438 = vld [vmem:[%s1 + $0x128] sm:$0xff]
        %v439 = vld [vmem:[%s1 + $0x130] sm:$0xff]
        %v440 = vld [vmem:[%s1 + $0x138] sm:$0xff]
        %v441 = vld [vmem:[%s1 + $0x140] sm:$0xff]
        %v442 = vld [vmem:[%s1 + $0x148] sm:$0xff]
        %v443 = vld [vmem:[%s1 + $0x150] sm:$0xff]
        %v444 = vld [vmem:[%s1 + $0x158] sm:$0xff]
        %v445 = vld [vmem:[%s1 + $0x160] sm:$0xff]
        %v446 = vld [vmem:[%s1 + $0x168] sm:$0xff]
        %v447 = vld [vmem:[%s1 + $0x170] sm:$0xff]
        %v448 = vld [vmem:[%s1 + $0x178] sm:$0xff]
        %v449 = vld [vmem:[%s1 + $0x180] sm:$0xff]
        %v450 = vld [vmem:[%s1 + $0x188] sm:$0xff]
        %v451 = vld [vmem:[%s1 + $0x190] sm:$0xff]
        %v452 = vld [vmem:[%s1 + $0x198] sm:$0xff]
        %v453 = vld [vmem:[%s1 + $0x1a0] sm:$0xff]
        %v454 = vld [vmem:[%s1 + $0x1a8] sm:$0xff]
        %vm455 = vcmask 130048
        %v457 = vsel %vm455, %v386, 0
        %v460 = vsel %vm455, %v388, 0
        %v463 = vsel %vm455, %v390, 0
        %v466 = vsel %vm455, %v392, 0
        %v469 = vsel %vm455, %v394, 0
        %v472 = vsel %vm455, %v396, 0
        %v475 = vsel %vm455, %v398, 0
        %v478 = vsel %vm455, %v400, 0
        %480 = vmatpush.msra.mxu0 %v446
        %481 = vmatpush.msra.mxu0 %v443
        %482 = vmatpush.msra.mxu0 %v440
        %483 = vmatpush.msra.mxu0 %v437
        %484 = vmatpush.msra.mxu0 %v434
        %485 = vmatpush.msra.mxu0 %v431
        %486 = vmatpush.msra.mxu0 %v428
        %487 = vmatpush.msra.mxu0 %v425
        %488 = vmatpush.msra.mxu0 %v422
        %489 = vmatpush.msra.mxu0 %v419
        %490 = vmatpush.msra.mxu0 %v416
        %491 = vmatpush.msra.mxu0 %v413
        %492 = vmatpush.msra.mxu0 %v410
        %493 = vmatpush.msra.mxu0 %v407
        %494 = vmatpush.msra.mxu0 %v404
        %495 = vmatpush.msra.mxu0 %v401
        %496 = vmatmul.f32.gmra.mxu0 %v385
        %v497 = vpop.f32.mrf.mxu0
        %v498 = vadd.f32 0.0, %v497
        %499 = vmatmul.f32.gmra.mxu0 %v387
        %v500 = vpop.f32.mrf.mxu0
        %v501 = vadd.f32 0.0, %v500
        %502 = vmatmul.f32.gmra.mxu0 %v389
        %v503 = vpop.f32.mrf.mxu0
        %v504 = vadd.f32 0.0, %v503
        %505 = vmatmul.f32.gmra.mxu0 %v391
        %v506 = vpop.f32.mrf.mxu0
        %v507 = vadd.f32 0.0, %v506
        %508 = vmatmul.f32.gmra.mxu0 %v393
        %v509 = vpop.f32.mrf.mxu0
        %v510 = vadd.f32 0.0, %v509
        %511 = vmatmul.f32.gmra.mxu0 %v395
        %v512 = vpop.f32.mrf.mxu0
        %v513 = vadd.f32 0.0, %v512
        %514 = vmatmul.f32.gmra.mxu0 %v397
        %v515 = vpop.f32.mrf.mxu0
        %v516 = vadd.f32 0.0, %v515
        %517 = vmatmul.f32.gmra.mxu0 %v399
        %v518 = vpop.f32.mrf.mxu0
        %v519 = vadd.f32 0.0, %v518
        %520 = vdwg.mxu0
        %521 = vmatpush.msra.mxu0 0.0
        %522 = vmatpush.msra.mxu0 0.0
        %523 = vmatpush.msra.mxu0 0.0
        %524 = vmatpush.msra.mxu0 0.0
        %525 = vmatpush.msra.mxu0 0.0
        %526 = vmatpush.msra.mxu0 0.0
        %527 = vmatpush.msra.mxu0 0.0
        %528 = vmatpush.msra.mxu0 0.0
        %529 = vmatpush.msra.mxu0 0.0
        %530 = vmatpush.msra.mxu0 0.0
        %531 = vmatpush.msra.mxu0 0.0
        %532 = vmatpush.msra.mxu0 0.0
        %533 = vmatpush.msra.mxu0 0.0
        %534 = vmatpush.msra.mxu0 0.0
        %535 = vmatpush.msra.mxu0 %v452
        %536 = vmatpush.msra.mxu0 %v449
        %537 = vmatmul.f32.gmra.mxu0 %v457
        %v538 = vpop.f32.mrf.mxu0
        %v539 = vadd.f32 %v498, %v538
        %540 = vmatmul.f32.gmra.mxu0 %v460
        %v541 = vpop.f32.mrf.mxu0
        %v542 = vadd.f32 %v501, %v541
        %543 = vmatmul.f32.gmra.mxu0 %v463
        %v544 = vpop.f32.mrf.mxu0
        %v545 = vadd.f32 %v504, %v544
        %546 = vmatmul.f32.gmra.mxu0 %v466
        %v547 = vpop.f32.mrf.mxu0
        %v548 = vadd.f32 %v507, %v547
        %549 = vmatmul.f32.gmra.mxu0 %v469
        %v550 = vpop.f32.mrf.mxu0
        %v551 = vadd.f32 %v510, %v550
        %552 = vmatmul.f32.gmra.mxu0 %v472
        %v553 = vpop.f32.mrf.mxu0
        %v554 = vadd.f32 %v513, %v553
        %555 = vmatmul.f32.gmra.mxu0 %v475
        %v556 = vpop.f32.mrf.mxu0
        %v557 = vadd.f32 %v516, %v556
        %558 = vmatmul.f32.gmra.mxu0 %v478
        %v559 = vpop.f32.mrf.mxu0
        %v560 = vadd.f32 %v519, %v559
        %561 = vdwg.mxu0
        %562 = vmatpush.msra.mxu0 %v447
        %563 = vmatpush.msra.mxu0 %v444
        %564 = vmatpush.msra.mxu0 %v441
        %565 = vmatpush.msra.mxu0 %v438
        %566 = vmatpush.msra.mxu0 %v435
        %567 = vmatpush.msra.mxu0 %v432
        %568 = vmatpush.msra.mxu0 %v429
        %569 = vmatpush.msra.mxu0 %v426
        %570 = vmatpush.msra.mxu0 %v423
        %571 = vmatpush.msra.mxu0 %v420
        %572 = vmatpush.msra.mxu0 %v417
        %573 = vmatpush.msra.mxu0 %v414
        %574 = vmatpush.msra.mxu0 %v411
        %575 = vmatpush.msra.mxu0 %v408
        %576 = vmatpush.msra.mxu0 %v405
        %577 = vmatpush.msra.mxu0 %v402
        %578 = vmatmul.f32.gmra.mxu0 %v385
        %v579 = vpop.f32.mrf.mxu0
        %v580 = vadd.f32 0.0, %v579
        %581 = vmatmul.f32.gmra.mxu0 %v387
        %v582 = vpop.f32.mrf.mxu0
        %v583 = vadd.f32 0.0, %v582
        %584 = vmatmul.f32.gmra.mxu0 %v389
        %v585 = vpop.f32.mrf.mxu0
        %v586 = vadd.f32 0.0, %v585
        %587 = vmatmul.f32.gmra.mxu0 %v391
        %v588 = vpop.f32.mrf.mxu0
        %v589 = vadd.f32 0.0, %v588
        %590 = vmatmul.f32.gmra.mxu0 %v393
        %v591 = vpop.f32.mrf.mxu0
        %v592 = vadd.f32 0.0, %v591
        %593 = vmatmul.f32.gmra.mxu0 %v395
        %v594 = vpop.f32.mrf.mxu0
        %v595 = vadd.f32 0.0, %v594
        %596 = vmatmul.f32.gmra.mxu0 %v397
        %v597 = vpop.f32.mrf.mxu0
        %v598 = vadd.f32 0.0, %v597
        %599 = vmatmul.f32.gmra.mxu0 %v399
        %v600 = vpop.f32.mrf.mxu0
        %v601 = vadd.f32 0.0, %v600
        %602 = vdwg.mxu0
        %603 = vmatpush.msra.mxu0 0.0
        %604 = vmatpush.msra.mxu0 0.0
        %605 = vmatpush.msra.mxu0 0.0
        %606 = vmatpush.msra.mxu0 0.0
        %607 = vmatpush.msra.mxu0 0.0
        %608 = vmatpush.msra.mxu0 0.0
        %609 = vmatpush.msra.mxu0 0.0
        %610 = vmatpush.msra.mxu0 0.0
        %611 = vmatpush.msra.mxu0 0.0
        %612 = vmatpush.msra.mxu0 0.0
        %613 = vmatpush.msra.mxu0 0.0
        %614 = vmatpush.msra.mxu0 0.0
        %615 = vmatpush.msra.mxu0 0.0
        %616 = vmatpush.msra.mxu0 0.0
        %617 = vmatpush.msra.mxu0 %v453
        %618 = vmatpush.msra.mxu0 %v450
        %619 = vmatmul.f32.gmra.mxu0 %v457
        %v620 = vpop.f32.mrf.mxu0
        %v621 = vadd.f32 %v580, %v620
        %622 = vmatmul.f32.gmra.mxu0 %v460
        %v623 = vpop.f32.mrf.mxu0
        %v624 = vadd.f32 %v583, %v623
        %625 = vmatmul.f32.gmra.mxu0 %v463
        %v626 = vpop.f32.mrf.mxu0
        %v627 = vadd.f32 %v586, %v626
        %628 = vmatmul.f32.gmra.mxu0 %v466
        %v629 = vpop.f32.mrf.mxu0
        %v630 = vadd.f32 %v589, %v629
        %631 = vmatmul.f32.gmra.mxu0 %v469
        %v632 = vpop.f32.mrf.mxu0
        %v633 = vadd.f32 %v592, %v632
        %634 = vmatmul.f32.gmra.mxu0 %v472
        %v635 = vpop.f32.mrf.mxu0
        %v636 = vadd.f32 %v595, %v635
        %637 = vmatmul.f32.gmra.mxu0 %v475
        %v638 = vpop.f32.mrf.mxu0
        %v639 = vadd.f32 %v598, %v638
        %640 = vmatmul.f32.gmra.mxu0 %v478
        %v641 = vpop.f32.mrf.mxu0
        %v642 = vadd.f32 %v601, %v641
        %643 = vdwg.mxu0
        %644 = vmatpush.msra.mxu0 %v448
        %645 = vmatpush.msra.mxu0 %v445
        %646 = vmatpush.msra.mxu0 %v442
        %647 = vmatpush.msra.mxu0 %v439
        %648 = vmatpush.msra.mxu0 %v436
        %649 = vmatpush.msra.mxu0 %v433
        %650 = vmatpush.msra.mxu0 %v430
        %651 = vmatpush.msra.mxu0 %v427
        %652 = vmatpush.msra.mxu0 %v424
        %653 = vmatpush.msra.mxu0 %v421
        %654 = vmatpush.msra.mxu0 %v418
        %655 = vmatpush.msra.mxu0 %v415
        %656 = vmatpush.msra.mxu0 %v412
        %657 = vmatpush.msra.mxu0 %v409
        %658 = vmatpush.msra.mxu0 %v406
        %659 = vmatpush.msra.mxu0 %v403
        %660 = vmatmul.f32.gmra.mxu0 %v385
        %v661 = vpop.f32.mrf.mxu0
        %v662 = vadd.f32 0.0, %v661
        %663 = vmatmul.f32.gmra.mxu0 %v387
        %v664 = vpop.f32.mrf.mxu0
        %v665 = vadd.f32 0.0, %v664
        %666 = vmatmul.f32.gmra.mxu0 %v389
        %v667 = vpop.f32.mrf.mxu0
        %v668 = vadd.f32 0.0, %v667
        %669 = vmatmul.f32.gmra.mxu0 %v391
        %v670 = vpop.f32.mrf.mxu0
        %v671 = vadd.f32 0.0, %v670
        %672 = vmatmul.f32.gmra.mxu0 %v393
        %v673 = vpop.f32.mrf.mxu0
        %v674 = vadd.f32 0.0, %v673
        %675 = vmatmul.f32.gmra.mxu0 %v395
        %v676 = vpop.f32.mrf.mxu0
        %v677 = vadd.f32 0.0, %v676
        %678 = vmatmul.f32.gmra.mxu0 %v397
        %v679 = vpop.f32.mrf.mxu0
        %v680 = vadd.f32 0.0, %v679
        %681 = vmatmul.f32.gmra.mxu0 %v399
        %v682 = vpop.f32.mrf.mxu0
        %v683 = vadd.f32 0.0, %v682
        %684 = vdwg.mxu0
        %685 = vmatpush.msra.mxu0 0.0
        %686 = vmatpush.msra.mxu0 0.0
        %687 = vmatpush.msra.mxu0 0.0
        %688 = vmatpush.msra.mxu0 0.0
        %689 = vmatpush.msra.mxu0 0.0
        %690 = vmatpush.msra.mxu0 0.0
        %691 = vmatpush.msra.mxu0 0.0
        %692 = vmatpush.msra.mxu0 0.0
        %693 = vmatpush.msra.mxu0 0.0
        %694 = vmatpush.msra.mxu0 0.0
        %695 = vmatpush.msra.mxu0 0.0
        %696 = vmatpush.msra.mxu0 0.0
        %697 = vmatpush.msra.mxu0 0.0
        %698 = vmatpush.msra.mxu0 0.0
        %699 = vmatpush.msra.mxu0 %v454
        %700 = vmatpush.msra.mxu0 %v451
        %701 = vmatmul.f32.gmra.mxu0 %v457
        %v702 = vpop.f32.mrf.mxu0
        %v703 = vadd.f32 %v662, %v702
        %704 = vmatmul.f32.gmra.mxu0 %v460
        %v705 = vpop.f32.mrf.mxu0
        %v706 = vadd.f32 %v665, %v705
        %707 = vmatmul.f32.gmra.mxu0 %v463
        %v708 = vpop.f32.mrf.mxu0
        %v709 = vadd.f32 %v668, %v708
        %710 = vmatmul.f32.gmra.mxu0 %v466
        %v711 = vpop.f32.mrf.mxu0
        %v712 = vadd.f32 %v671, %v711
        %713 = vmatmul.f32.gmra.mxu0 %v469
        %v714 = vpop.f32.mrf.mxu0
        %v715 = vadd.f32 %v674, %v714
        %716 = vmatmul.f32.gmra.mxu0 %v472
        %v717 = vpop.f32.mrf.mxu0
        %v718 = vadd.f32 %v677, %v717
        %719 = vmatmul.f32.gmra.mxu0 %v475
        %v720 = vpop.f32.mrf.mxu0
        %v721 = vadd.f32 %v680, %v720
        %722 = vmatmul.f32.gmra.mxu0 %v478
        %v723 = vpop.f32.mrf.mxu0
        %v724 = vadd.f32 %v683, %v723
        %725 = vdwg.mxu0
        %v726 = vld [vmem:[%s2] sm:$0xff]
        %v727 = vld [vmem:[%s2 + $0x8] sm:$0xff]
        %v728 = vld [vmem:[%s2 + $0x10] sm:$0xff]
        %v729 = vld [vmem:[%s2 + $0x18] sm:$0xff]
        %v730 = vld [vmem:[%s2 + $0x20] sm:$0xff]
        %v731 = vld [vmem:[%s2 + $0x28] sm:$0xff]
        %v732 = vld [vmem:[%s2 + $0x30] sm:$0xff]
        %v733 = vld [vmem:[%s2 + $0x38] sm:$0xff]
        %v734 = vld [vmem:[%s2 + $0x40] sm:$0xff]
        %v735 = vld [vmem:[%s2 + $0x48] sm:$0xff]
        %v736 = vld [vmem:[%s2 + $0x50] sm:$0xff]
        %v737 = vld [vmem:[%s2 + $0x58] sm:$0xff]
        %v738 = vld [vmem:[%s2 + $0x60] sm:$0xff]
        %v739 = vld [vmem:[%s2 + $0x68] sm:$0xff]
        %v740 = vld [vmem:[%s2 + $0x70] sm:$0xff]
        %v741 = vld [vmem:[%s2 + $0x78] sm:$0xff]
        %v742 = vld [vmem:[%s2 + $0x80] sm:$0xff]
        %v743 = vld [vmem:[%s2 + $0x88] sm:$0xff]
        %v744 = vld [vmem:[%s2 + $0x90] sm:$0xff]
        %v745 = vld [vmem:[%s2 + $0x98] sm:$0xff]
        %v746 = vld [vmem:[%s2 + $0xa0] sm:$0xff]
        %v747 = vld [vmem:[%s2 + $0xa8] sm:$0xff]
        %v748 = vld [vmem:[%s2 + $0xb0] sm:$0xff]
        %v749 = vld [vmem:[%s2 + $0xb8] sm:$0xff]
        %v750 = vld [vmem:[%s2 + $0xc0] sm:$0xff]
        %v751 = vld [vmem:[%s2 + $0xc8] sm:$0xff]
        %v752 = vld [vmem:[%s2 + $0xd0] sm:$0xff]
        %v753 = vld [vmem:[%s2 + $0xd8] sm:$0xff]
        %v754 = vld [vmem:[%s2 + $0xe0] sm:$0xff]
        %v755 = vld [vmem:[%s2 + $0xe8] sm:$0xff]
        %v756 = vld [vmem:[%s2 + $0xf0] sm:$0xff]
        %v757 = vld [vmem:[%s2 + $0xf8] sm:$0xff]
        %v758 = vld [vmem:[%s2 + $0x100] sm:$0xff]
        %v759 = vld [vmem:[%s2 + $0x108] sm:$0xff]
        %v760 = vld [vmem:[%s2 + $0x110] sm:$0xff]
        %v761 = vld [vmem:[%s2 + $0x118] sm:$0xff]
        %v762 = vld [vmem:[%s2 + $0x120] sm:$0xff]
        %v763 = vld [vmem:[%s2 + $0x128] sm:$0xff]
        %v764 = vld [vmem:[%s2 + $0x130] sm:$0xff]
        %v765 = vld [vmem:[%s2 + $0x138] sm:$0xff]
        %v766 = vld [vmem:[%s2 + $0x140] sm:$0xff]
        %v767 = vld [vmem:[%s2 + $0x148] sm:$0xff]
        %v768 = vld [vmem:[%s2 + $0x150] sm:$0xff]
        %v769 = vld [vmem:[%s2 + $0x158] sm:$0xff]
        %v770 = vld [vmem:[%s2 + $0x160] sm:$0xff]
        %v771 = vld [vmem:[%s2 + $0x168] sm:$0xff]
        %v772 = vld [vmem:[%s2 + $0x170] sm:$0xff]
        %v773 = vld [vmem:[%s2 + $0x178] sm:$0xff]
        %v774 = vld [vmem:[%s2 + $0x180] sm:$0xff]
        %v775 = vld [vmem:[%s2 + $0x188] sm:$0xff]
        %v776 = vld [vmem:[%s2 + $0x190] sm:$0xff]
        %v777 = vld [vmem:[%s2 + $0x198] sm:$0xff]
        %v778 = vld [vmem:[%s2 + $0x1a0] sm:$0xff]
        %v779 = vld [vmem:[%s2 + $0x1a8] sm:$0xff]
        %780 = vmatpush.msra.mxu0 %v771
        %781 = vmatpush.msra.mxu0 %v768
        %782 = vmatpush.msra.mxu0 %v765
        %783 = vmatpush.msra.mxu0 %v762
        %784 = vmatpush.msra.mxu0 %v759
        %785 = vmatpush.msra.mxu0 %v756
        %786 = vmatpush.msra.mxu0 %v753
        %787 = vmatpush.msra.mxu0 %v750
        %788 = vmatpush.msra.mxu0 %v747
        %789 = vmatpush.msra.mxu0 %v744
        %790 = vmatpush.msra.mxu0 %v741
        %791 = vmatpush.msra.mxu0 %v738
        %792 = vmatpush.msra.mxu0 %v735
        %793 = vmatpush.msra.mxu0 %v732
        %794 = vmatpush.msra.mxu0 %v729
        %795 = vmatpush.msra.mxu0 %v726
        %796 = vmatmul.f32.gmra.mxu0 %v385
        %v797 = vpop.f32.mrf.mxu0
        %v798 = vadd.f32 0.0, %v797
        %799 = vmatmul.f32.gmra.mxu0 %v387
        %v800 = vpop.f32.mrf.mxu0
        %v801 = vadd.f32 0.0, %v800
        %802 = vmatmul.f32.gmra.mxu0 %v389
        %v803 = vpop.f32.mrf.mxu0
        %v804 = vadd.f32 0.0, %v803
        %805 = vmatmul.f32.gmra.mxu0 %v391
        %v806 = vpop.f32.mrf.mxu0
        %v807 = vadd.f32 0.0, %v806
        %808 = vmatmul.f32.gmra.mxu0 %v393
        %v809 = vpop.f32.mrf.mxu0
        %v810 = vadd.f32 0.0, %v809
        %811 = vmatmul.f32.gmra.mxu0 %v395
        %v812 = vpop.f32.mrf.mxu0
        %v813 = vadd.f32 0.0, %v812
        %814 = vmatmul.f32.gmra.mxu0 %v397
        %v815 = vpop.f32.mrf.mxu0
        %v816 = vadd.f32 0.0, %v815
        %817 = vmatmul.f32.gmra.mxu0 %v399
        %v818 = vpop.f32.mrf.mxu0
        %v819 = vadd.f32 0.0, %v818
        %820 = vdwg.mxu0
        %821 = vmatpush.msra.mxu0 0.0
        %822 = vmatpush.msra.mxu0 0.0
        %823 = vmatpush.msra.mxu0 0.0
        %824 = vmatpush.msra.mxu0 0.0
        %825 = vmatpush.msra.mxu0 0.0
        %826 = vmatpush.msra.mxu0 0.0
        %827 = vmatpush.msra.mxu0 0.0
        %828 = vmatpush.msra.mxu0 0.0
        %829 = vmatpush.msra.mxu0 0.0
        %830 = vmatpush.msra.mxu0 0.0
        %831 = vmatpush.msra.mxu0 0.0
        %832 = vmatpush.msra.mxu0 0.0
        %833 = vmatpush.msra.mxu0 0.0
        %834 = vmatpush.msra.mxu0 0.0
        %835 = vmatpush.msra.mxu0 %v777
        %836 = vmatpush.msra.mxu0 %v774
        %837 = vmatmul.f32.gmra.mxu0 %v457
        %v838 = vpop.f32.mrf.mxu0
        %v839 = vadd.f32 %v798, %v838
        %840 = vmatmul.f32.gmra.mxu0 %v460
        %v841 = vpop.f32.mrf.mxu0
        %v842 = vadd.f32 %v801, %v841
        %843 = vmatmul.f32.gmra.mxu0 %v463
        %v844 = vpop.f32.mrf.mxu0
        %v845 = vadd.f32 %v804, %v844
        %846 = vmatmul.f32.gmra.mxu0 %v466
        %v847 = vpop.f32.mrf.mxu0
        %v848 = vadd.f32 %v807, %v847
        %849 = vmatmul.f32.gmra.mxu0 %v469
        %v850 = vpop.f32.mrf.mxu0
        %v851 = vadd.f32 %v810, %v850
        %852 = vmatmul.f32.gmra.mxu0 %v472
        %v853 = vpop.f32.mrf.mxu0
        %v854 = vadd.f32 %v813, %v853
        %855 = vmatmul.f32.gmra.mxu0 %v475
        %v856 = vpop.f32.mrf.mxu0
        %v857 = vadd.f32 %v816, %v856
        %858 = vmatmul.f32.gmra.mxu0 %v478
        %v859 = vpop.f32.mrf.mxu0
        %v860 = vadd.f32 %v819, %v859
        %861 = vdwg.mxu0
        %862 = vmatpush.msra.mxu0 %v772
        %863 = vmatpush.msra.mxu0 %v769
        %864 = vmatpush.msra.mxu0 %v766
        %865 = vmatpush.msra.mxu0 %v763
        %866 = vmatpush.msra.mxu0 %v760
        %867 = vmatpush.msra.mxu0 %v757
        %868 = vmatpush.msra.mxu0 %v754
        %869 = vmatpush.msra.mxu0 %v751
        %870 = vmatpush.msra.mxu0 %v748
        %871 = vmatpush.msra.mxu0 %v745
        %872 = vmatpush.msra.mxu0 %v742
        %873 = vmatpush.msra.mxu0 %v739
        %874 = vmatpush.msra.mxu0 %v736
        %875 = vmatpush.msra.mxu0 %v733
        %876 = vmatpush.msra.mxu0 %v730
        %877 = vmatpush.msra.mxu0 %v727
        %878 = vmatmul.f32.gmra.mxu0 %v385
        %v879 = vpop.f32.mrf.mxu0
        %v880 = vadd.f32 0.0, %v879
        %881 = vmatmul.f32.gmra.mxu0 %v387
        %v882 = vpop.f32.mrf.mxu0
        %v883 = vadd.f32 0.0, %v882
        %884 = vmatmul.f32.gmra.mxu0 %v389
        %v885 = vpop.f32.mrf.mxu0
        %v886 = vadd.f32 0.0, %v885
        %887 = vmatmul.f32.gmra.mxu0 %v391
        %v888 = vpop.f32.mrf.mxu0
        %v889 = vadd.f32 0.0, %v888
        %890 = vmatmul.f32.gmra.mxu0 %v393
        %v891 = vpop.f32.mrf.mxu0
        %v892 = vadd.f32 0.0, %v891
        %893 = vmatmul.f32.gmra.mxu0 %v395
        %v894 = vpop.f32.mrf.mxu0
        %v895 = vadd.f32 0.0, %v894
        %896 = vmatmul.f32.gmra.mxu0 %v397
        %v897 = vpop.f32.mrf.mxu0
        %v898 = vadd.f32 0.0, %v897
        %899 = vmatmul.f32.gmra.mxu0 %v399
        %v900 = vpop.f32.mrf.mxu0
        %v901 = vadd.f32 0.0, %v900
        %902 = vdwg.mxu0
        %903 = vmatpush.msra.mxu0 0.0
        %904 = vmatpush.msra.mxu0 0.0
        %905 = vmatpush.msra.mxu0 0.0
        %906 = vmatpush.msra.mxu0 0.0
        %907 = vmatpush.msra.mxu0 0.0
        %908 = vmatpush.msra.mxu0 0.0
        %909 = vmatpush.msra.mxu0 0.0
        %910 = vmatpush.msra.mxu0 0.0
        %911 = vmatpush.msra.mxu0 0.0
        %912 = vmatpush.msra.mxu0 0.0
        %913 = vmatpush.msra.mxu0 0.0
        %914 = vmatpush.msra.mxu0 0.0
        %915 = vmatpush.msra.mxu0 0.0
        %916 = vmatpush.msra.mxu0 0.0
        %917 = vmatpush.msra.mxu0 %v778
        %918 = vmatpush.msra.mxu0 %v775
        %919 = vmatmul.f32.gmra.mxu0 %v457
        %v920 = vpop.f32.mrf.mxu0
        %v921 = vadd.f32 %v880, %v920
        %922 = vmatmul.f32.gmra.mxu0 %v460
        %v923 = vpop.f32.mrf.mxu0
        %v924 = vadd.f32 %v883, %v923
        %925 = vmatmul.f32.gmra.mxu0 %v463
        %v926 = vpop.f32.mrf.mxu0
        %v927 = vadd.f32 %v886, %v926
        %928 = vmatmul.f32.gmra.mxu0 %v466
        %v929 = vpop.f32.mrf.mxu0
        %v930 = vadd.f32 %v889, %v929
        %931 = vmatmul.f32.gmra.mxu0 %v469
        %v932 = vpop.f32.mrf.mxu0
        %v933 = vadd.f32 %v892, %v932
        %934 = vmatmul.f32.gmra.mxu0 %v472
        %v935 = vpop.f32.mrf.mxu0
        %v936 = vadd.f32 %v895, %v935
        %937 = vmatmul.f32.gmra.mxu0 %v475
        %v938 = vpop.f32.mrf.mxu0
        %v939 = vadd.f32 %v898, %v938
        %940 = vmatmul.f32.gmra.mxu0 %v478
        %v941 = vpop.f32.mrf.mxu0
        %v942 = vadd.f32 %v901, %v941
        %943 = vdwg.mxu0
        %944 = vmatpush.msra.mxu0 %v773
        %945 = vmatpush.msra.mxu0 %v770
        %946 = vmatpush.msra.mxu0 %v767
        %947 = vmatpush.msra.mxu0 %v764
        %948 = vmatpush.msra.mxu0 %v761
        %949 = vmatpush.msra.mxu0 %v758
        %950 = vmatpush.msra.mxu0 %v755
        %951 = vmatpush.msra.mxu0 %v752
        %952 = vmatpush.msra.mxu0 %v749
        %953 = vmatpush.msra.mxu0 %v746
        %954 = vmatpush.msra.mxu0 %v743
        %955 = vmatpush.msra.mxu0 %v740
        %956 = vmatpush.msra.mxu0 %v737
        %957 = vmatpush.msra.mxu0 %v734
        %958 = vmatpush.msra.mxu0 %v731
        %959 = vmatpush.msra.mxu0 %v728
        %960 = vmatmul.f32.gmra.mxu0 %v385
        %v961 = vpop.f32.mrf.mxu0
        %v962 = vadd.f32 0.0, %v961
        %963 = vmatmul.f32.gmra.mxu0 %v387
        %v964 = vpop.f32.mrf.mxu0
        %v965 = vadd.f32 0.0, %v964
        %966 = vmatmul.f32.gmra.mxu0 %v389
        %v967 = vpop.f32.mrf.mxu0
        %v968 = vadd.f32 0.0, %v967
        %969 = vmatmul.f32.gmra.mxu0 %v391
        %v970 = vpop.f32.mrf.mxu0
        %v971 = vadd.f32 0.0, %v970
        %972 = vmatmul.f32.gmra.mxu0 %v393
        %v973 = vpop.f32.mrf.mxu0
        %v974 = vadd.f32 0.0, %v973
        %975 = vmatmul.f32.gmra.mxu0 %v395
        %v976 = vpop.f32.mrf.mxu0
        %v977 = vadd.f32 0.0, %v976
        %978 = vmatmul.f32.gmra.mxu0 %v397
        %v979 = vpop.f32.mrf.mxu0
        %v980 = vadd.f32 0.0, %v979
        %981 = vmatmul.f32.gmra.mxu0 %v399
        %v982 = vpop.f32.mrf.mxu0
        %v983 = vadd.f32 0.0, %v982
        %984 = vdwg.mxu0
        %985 = vmatpush.msra.mxu0 0.0
        %986 = vmatpush.msra.mxu0 0.0
        %987 = vmatpush.msra.mxu0 0.0
        %988 = vmatpush.msra.mxu0 0.0
        %989 = vmatpush.msra.mxu0 0.0
        %990 = vmatpush.msra.mxu0 0.0
        %991 = vmatpush.msra.mxu0 0.0
        %992 = vmatpush.msra.mxu0 0.0
        %993 = vmatpush.msra.mxu0 0.0
        %994 = vmatpush.msra.mxu0 0.0
        %995 = vmatpush.msra.mxu0 0.0
        %996 = vmatpush.msra.mxu0 0.0
        %997 = vmatpush.msra.mxu0 0.0
        %998 = vmatpush.msra.mxu0 0.0
        %999 = vmatpush.msra.mxu0 %v779
        %1000 = vmatpush.msra.mxu0 %v776
        %1001 = vmatmul.f32.gmra.mxu0 %v457
        %v1002 = vpop.f32.mrf.mxu0
        %v1003 = vadd.f32 %v962, %v1002
        %1004 = vmatmul.f32.gmra.mxu0 %v460
        %v1005 = vpop.f32.mrf.mxu0
        %v1006 = vadd.f32 %v965, %v1005
        %1007 = vmatmul.f32.gmra.mxu0 %v463
        %v1008 = vpop.f32.mrf.mxu0
        %v1009 = vadd.f32 %v968, %v1008
        %1010 = vmatmul.f32.gmra.mxu0 %v466
        %v1011 = vpop.f32.mrf.mxu0
        %v1012 = vadd.f32 %v971, %v1011
        %1013 = vmatmul.f32.gmra.mxu0 %v469
        %v1014 = vpop.f32.mrf.mxu0
        %v1015 = vadd.f32 %v974, %v1014
        %1016 = vmatmul.f32.gmra.mxu0 %v472
        %v1017 = vpop.f32.mrf.mxu0
        %v1018 = vadd.f32 %v977, %v1017
        %1019 = vmatmul.f32.gmra.mxu0 %v475
        %v1020 = vpop.f32.mrf.mxu0
        %v1021 = vadd.f32 %v980, %v1020
        %1022 = vmatmul.f32.gmra.mxu0 %v478
        %v1023 = vpop.f32.mrf.mxu0
        %v1024 = vadd.f32 %v983, %v1023
        %1025 = vdwg.mxu0
        %v1026 = vxor.u32 %v839, 2147483648
        %v1027 = vxor.u32 %v921, 2147483648
        %v1028 = vxor.u32 %v1003, 2147483648
        %v1029 = vxor.u32 %v842, 2147483648
        %v1030 = vxor.u32 %v924, 2147483648
        %v1031 = vxor.u32 %v1006, 2147483648
        %v1032 = vxor.u32 %v845, 2147483648
        %v1033 = vxor.u32 %v927, 2147483648
        %v1034 = vxor.u32 %v1009, 2147483648
        %v1035 = vxor.u32 %v848, 2147483648
        %v1036 = vxor.u32 %v930, 2147483648
        %v1037 = vxor.u32 %v1012, 2147483648
        %v1038 = vxor.u32 %v851, 2147483648
        %v1039 = vxor.u32 %v933, 2147483648
        %v1040 = vxor.u32 %v1015, 2147483648
        %v1041 = vxor.u32 %v854, 2147483648
        %v1042 = vxor.u32 %v936, 2147483648
        %v1043 = vxor.u32 %v1018, 2147483648
        %v1044 = vxor.u32 %v857, 2147483648
        %v1045 = vxor.u32 %v939, 2147483648
        %v1046 = vxor.u32 %v1021, 2147483648
        %v1047 = vxor.u32 %v860, 2147483648
        %v1048 = vxor.u32 %v942, 2147483648
        %v1049 = vxor.u32 %v1024, 2147483648
        %v1050 = vmul.f32 %v1026, 1.442695
        %v1051 = vpow.pop %v1050
        %v1052 = vmul.f32 %v1027, 1.442695
        %v1053 = vpow.pop %v1052
        %v1054 = vmul.f32 %v1028, 1.442695
        %v1055 = vpow.pop %v1054
        %v1056 = vmul.f32 %v1029, 1.442695
        %v1057 = vpow.pop %v1056
        %v1058 = vmul.f32 %v1030, 1.442695
        %v1059 = vpow.pop %v1058
        %v1060 = vmul.f32 %v1031, 1.442695
        %v1061 = vpow.pop %v1060
        %v1062 = vmul.f32 %v1032, 1.442695
        %v1063 = vpow.pop %v1062
        %v1064 = vmul.f32 %v1033, 1.442695
        %v1065 = vpow.pop %v1064
        %v1066 = vmul.f32 %v1034, 1.442695
        %v1067 = vpow.pop %v1066
        %v1068 = vmul.f32 %v1035, 1.442695
        %v1069 = vpow.pop %v1068
        %v1070 = vmul.f32 %v1036, 1.442695
        %v1071 = vpow.pop %v1070
        %v1072 = vmul.f32 %v1037, 1.442695
        %v1073 = vpow.pop %v1072
        %v1074 = vmul.f32 %v1038, 1.442695
        %v1075 = vpow.pop %v1074
        %v1076 = vmul.f32 %v1039, 1.442695
        %v1077 = vpow.pop %v1076
        %v1078 = vmul.f32 %v1040, 1.442695
        %v1079 = vpow.pop %v1078
        %v1080 = vmul.f32 %v1041, 1.442695
        %v1081 = vpow.pop %v1080
        %v1082 = vmul.f32 %v1042, 1.442695
        %v1083 = vpow.pop %v1082
        %v1084 = vmul.f32 %v1043, 1.442695
        %v1085 = vpow.pop %v1084
        %v1086 = vmul.f32 %v1044, 1.442695
        %v1087 = vpow.pop %v1086
        %v1088 = vmul.f32 %v1045, 1.442695
        %v1089 = vpow.pop %v1088
        %v1090 = vmul.f32 %v1046, 1.442695
        %v1091 = vpow.pop %v1090
        %v1092 = vmul.f32 %v1047, 1.442695
        %v1093 = vpow.pop %v1092
        %v1094 = vmul.f32 %v1048, 1.442695
        %v1095 = vpow.pop %v1094
        %v1096 = vmul.f32 %v1049, 1.442695
        %v1097 = vpow.pop %v1096
        %v1098 = vadd.f32 %v1051, 1.0
        %v1099 = vadd.f32 %v1053, 1.0
        %v1100 = vadd.f32 %v1055, 1.0
        %v1101 = vadd.f32 %v1057, 1.0
        %v1102 = vadd.f32 %v1059, 1.0
        %v1103 = vadd.f32 %v1061, 1.0
        %v1104 = vadd.f32 %v1063, 1.0
        %v1105 = vadd.f32 %v1065, 1.0
        %v1106 = vadd.f32 %v1067, 1.0
        %v1107 = vadd.f32 %v1069, 1.0
        %v1108 = vadd.f32 %v1071, 1.0
        %v1109 = vadd.f32 %v1073, 1.0
        %v1110 = vadd.f32 %v1075, 1.0
        %v1111 = vadd.f32 %v1077, 1.0
        %v1112 = vadd.f32 %v1079, 1.0
        %v1113 = vadd.f32 %v1081, 1.0
        %v1114 = vadd.f32 %v1083, 1.0
        %v1115 = vadd.f32 %v1085, 1.0
        %v1116 = vadd.f32 %v1087, 1.0
        %v1117 = vadd.f32 %v1089, 1.0
        %v1118 = vadd.f32 %v1091, 1.0
        %v1119 = vadd.f32 %v1093, 1.0
        %v1120 = vadd.f32 %v1095, 1.0
        %v1121 = vadd.f32 %v1097, 1.0
        %v1122 = vrcp.pop %v1098
        %v1123 = vmul.f32 %v1098, %v1122
        %v1124 = vsub.f32 1.0, %v1123
        %v1125 = vmul.f32 %v1122, %v1124
        %v1126 = vadd.f32 %v1122, %v1125
        %vm1127 = vweird.f32 %v1098
        %vm1128 = vweird.f32 %v1122
        %vm1129 = vmor %vm1127, %vm1128
        %v1130 = vsel %vm1129, %v1122, %v1126
        %v1131 = vand.u32 2147483647, %v1098
        %vm1132 = vcmp.eq.f32.partialorder %v1131, 8.507059e+37
        %v1133 = vand.u32 %v1098, 2147483648
        %v1134 = vor.u32 1.1754944e-38, %v1133
        %v1135 = vsel %vm1132, %v1134, %v1130
        %v1136 = vmul.f32 1.0, %v1135
        %v1137 = vrcp.pop %v1099
        %v1138 = vmul.f32 %v1099, %v1137
        %v1139 = vsub.f32 1.0, %v1138
        %v1140 = vmul.f32 %v1137, %v1139
        %v1141 = vadd.f32 %v1137, %v1140
        %vm1142 = vweird.f32 %v1099
        %vm1143 = vweird.f32 %v1137
        %vm1144 = vmor %vm1142, %vm1143
        %v1145 = vsel %vm1144, %v1137, %v1141
        %v1146 = vand.u32 2147483647, %v1099
        %vm1147 = vcmp.eq.f32.partialorder %v1146, 8.507059e+37
        %v1148 = vand.u32 %v1099, 2147483648
        %v1149 = vor.u32 1.1754944e-38, %v1148
        %v1150 = vsel %vm1147, %v1149, %v1145
        %v1151 = vmul.f32 1.0, %v1150
        %v1152 = vrcp.pop %v1100
        %v1153 = vmul.f32 %v1100, %v1152
        %v1154 = vsub.f32 1.0, %v1153
        %v1155 = vmul.f32 %v1152, %v1154
        %v1156 = vadd.f32 %v1152, %v1155
        %vm1157 = vweird.f32 %v1100
        %vm1158 = vweird.f32 %v1152
        %vm1159 = vmor %vm1157, %vm1158
        %v1160 = vsel %vm1159, %v1152, %v1156
        %v1161 = vand.u32 2147483647, %v1100
        %vm1162 = vcmp.eq.f32.partialorder %v1161, 8.507059e+37
        %v1163 = vand.u32 %v1100, 2147483648
        %v1164 = vor.u32 1.1754944e-38, %v1163
        %v1165 = vsel %vm1162, %v1164, %v1160
        %v1166 = vmul.f32 1.0, %v1165
        %v1167 = vrcp.pop %v1101
        %v1168 = vmul.f32 %v1101, %v1167
        %v1169 = vsub.f32 1.0, %v1168
        %v1170 = vmul.f32 %v1167, %v1169
        %v1171 = vadd.f32 %v1167, %v1170
        %vm1172 = vweird.f32 %v1101
        %vm1173 = vweird.f32 %v1167
        %vm1174 = vmor %vm1172, %vm1173
        %v1175 = vsel %vm1174, %v1167, %v1171
        %v1176 = vand.u32 2147483647, %v1101
        %vm1177 = vcmp.eq.f32.partialorder %v1176, 8.507059e+37
        %v1178 = vand.u32 %v1101, 2147483648
        %v1179 = vor.u32 1.1754944e-38, %v1178
        %v1180 = vsel %vm1177, %v1179, %v1175
        %v1181 = vmul.f32 1.0, %v1180
        %v1182 = vrcp.pop %v1102
        %v1183 = vmul.f32 %v1102, %v1182
        %v1184 = vsub.f32 1.0, %v1183
        %v1185 = vmul.f32 %v1182, %v1184
        %v1186 = vadd.f32 %v1182, %v1185
        %vm1187 = vweird.f32 %v1102
        %vm1188 = vweird.f32 %v1182
        %vm1189 = vmor %vm1187, %vm1188
        %v1190 = vsel %vm1189, %v1182, %v1186
        %v1191 = vand.u32 2147483647, %v1102
        %vm1192 = vcmp.eq.f32.partialorder %v1191, 8.507059e+37
        %v1193 = vand.u32 %v1102, 2147483648
        %v1194 = vor.u32 1.1754944e-38, %v1193
        %v1195 = vsel %vm1192, %v1194, %v1190
        %v1196 = vmul.f32 1.0, %v1195
        %v1197 = vrcp.pop %v1103
        %v1198 = vmul.f32 %v1103, %v1197
        %v1199 = vsub.f32 1.0, %v1198
        %v1200 = vmul.f32 %v1197, %v1199
        %v1201 = vadd.f32 %v1197, %v1200
        %vm1202 = vweird.f32 %v1103
        %vm1203 = vweird.f32 %v1197
        %vm1204 = vmor %vm1202, %vm1203
        %v1205 = vsel %vm1204, %v1197, %v1201
        %v1206 = vand.u32 2147483647, %v1103
        %vm1207 = vcmp.eq.f32.partialorder %v1206, 8.507059e+37
        %v1208 = vand.u32 %v1103, 2147483648
        %v1209 = vor.u32 1.1754944e-38, %v1208
        %v1210 = vsel %vm1207, %v1209, %v1205
        %v1211 = vmul.f32 1.0, %v1210
        %v1212 = vrcp.pop %v1104
        %v1213 = vmul.f32 %v1104, %v1212
        %v1214 = vsub.f32 1.0, %v1213
        %v1215 = vmul.f32 %v1212, %v1214
        %v1216 = vadd.f32 %v1212, %v1215
        %vm1217 = vweird.f32 %v1104
        %vm1218 = vweird.f32 %v1212
        %vm1219 = vmor %vm1217, %vm1218
        %v1220 = vsel %vm1219, %v1212, %v1216
        %v1221 = vand.u32 2147483647, %v1104
        %vm1222 = vcmp.eq.f32.partialorder %v1221, 8.507059e+37
        %v1223 = vand.u32 %v1104, 2147483648
        %v1224 = vor.u32 1.1754944e-38, %v1223
        %v1225 = vsel %vm1222, %v1224, %v1220
        %v1226 = vmul.f32 1.0, %v1225
        %v1227 = vrcp.pop %v1105
        %v1228 = vmul.f32 %v1105, %v1227
        %v1229 = vsub.f32 1.0, %v1228
        %v1230 = vmul.f32 %v1227, %v1229
        %v1231 = vadd.f32 %v1227, %v1230
        %vm1232 = vweird.f32 %v1105
        %vm1233 = vweird.f32 %v1227
        %vm1234 = vmor %vm1232, %vm1233
        %v1235 = vsel %vm1234, %v1227, %v1231
        %v1236 = vand.u32 2147483647, %v1105
        %vm1237 = vcmp.eq.f32.partialorder %v1236, 8.507059e+37
        %v1238 = vand.u32 %v1105, 2147483648
        %v1239 = vor.u32 1.1754944e-38, %v1238
        %v1240 = vsel %vm1237, %v1239, %v1235
        %v1241 = vmul.f32 1.0, %v1240
        %v1242 = vrcp.pop %v1106
        %v1243 = vmul.f32 %v1106, %v1242
        %v1244 = vsub.f32 1.0, %v1243
        %v1245 = vmul.f32 %v1242, %v1244
        %v1246 = vadd.f32 %v1242, %v1245
        %vm1247 = vweird.f32 %v1106
        %vm1248 = vweird.f32 %v1242
        %vm1249 = vmor %vm1247, %vm1248
        %v1250 = vsel %vm1249, %v1242, %v1246
        %v1251 = vand.u32 2147483647, %v1106
        %vm1252 = vcmp.eq.f32.partialorder %v1251, 8.507059e+37
        %v1253 = vand.u32 %v1106, 2147483648
        %v1254 = vor.u32 1.1754944e-38, %v1253
        %v1255 = vsel %vm1252, %v1254, %v1250
        %v1256 = vmul.f32 1.0, %v1255
        %v1257 = vrcp.pop %v1107
        %v1258 = vmul.f32 %v1107, %v1257
        %v1259 = vsub.f32 1.0, %v1258
        %v1260 = vmul.f32 %v1257, %v1259
        %v1261 = vadd.f32 %v1257, %v1260
        %vm1262 = vweird.f32 %v1107
        %vm1263 = vweird.f32 %v1257
        %vm1264 = vmor %vm1262, %vm1263
        %v1265 = vsel %vm1264, %v1257, %v1261
        %v1266 = vand.u32 2147483647, %v1107
        %vm1267 = vcmp.eq.f32.partialorder %v1266, 8.507059e+37
        %v1268 = vand.u32 %v1107, 2147483648
        %v1269 = vor.u32 1.1754944e-38, %v1268
        %v1270 = vsel %vm1267, %v1269, %v1265
        %v1271 = vmul.f32 1.0, %v1270
        %v1272 = vrcp.pop %v1108
        %v1273 = vmul.f32 %v1108, %v1272
        %v1274 = vsub.f32 1.0, %v1273
        %v1275 = vmul.f32 %v1272, %v1274
        %v1276 = vadd.f32 %v1272, %v1275
        %vm1277 = vweird.f32 %v1108
        %vm1278 = vweird.f32 %v1272
        %vm1279 = vmor %vm1277, %vm1278
        %v1280 = vsel %vm1279, %v1272, %v1276
        %v1281 = vand.u32 2147483647, %v1108
        %vm1282 = vcmp.eq.f32.partialorder %v1281, 8.507059e+37
        %v1283 = vand.u32 %v1108, 2147483648
        %v1284 = vor.u32 1.1754944e-38, %v1283
        %v1285 = vsel %vm1282, %v1284, %v1280
        %v1286 = vmul.f32 1.0, %v1285
        %v1287 = vrcp.pop %v1109
        %v1288 = vmul.f32 %v1109, %v1287
        %v1289 = vsub.f32 1.0, %v1288
        %v1290 = vmul.f32 %v1287, %v1289
        %v1291 = vadd.f32 %v1287, %v1290
        %vm1292 = vweird.f32 %v1109
        %vm1293 = vweird.f32 %v1287
        %vm1294 = vmor %vm1292, %vm1293
        %v1295 = vsel %vm1294, %v1287, %v1291
        %v1296 = vand.u32 2147483647, %v1109
        %vm1297 = vcmp.eq.f32.partialorder %v1296, 8.507059e+37
        %v1298 = vand.u32 %v1109, 2147483648
        %v1299 = vor.u32 1.1754944e-38, %v1298
        %v1300 = vsel %vm1297, %v1299, %v1295
        %v1301 = vmul.f32 1.0, %v1300
        %v1302 = vrcp.pop %v1110
        %v1303 = vmul.f32 %v1110, %v1302
        %v1304 = vsub.f32 1.0, %v1303
        %v1305 = vmul.f32 %v1302, %v1304
        %v1306 = vadd.f32 %v1302, %v1305
        %vm1307 = vweird.f32 %v1110
        %vm1308 = vweird.f32 %v1302
        %vm1309 = vmor %vm1307, %vm1308
        %v1310 = vsel %vm1309, %v1302, %v1306
        %v1311 = vand.u32 2147483647, %v1110
        %vm1312 = vcmp.eq.f32.partialorder %v1311, 8.507059e+37
        %v1313 = vand.u32 %v1110, 2147483648
        %v1314 = vor.u32 1.1754944e-38, %v1313
        %v1315 = vsel %vm1312, %v1314, %v1310
        %v1316 = vmul.f32 1.0, %v1315
        %v1317 = vrcp.pop %v1111
        %v1318 = vmul.f32 %v1111, %v1317
        %v1319 = vsub.f32 1.0, %v1318
        %v1320 = vmul.f32 %v1317, %v1319
        %v1321 = vadd.f32 %v1317, %v1320
        %vm1322 = vweird.f32 %v1111
        %vm1323 = vweird.f32 %v1317
        %vm1324 = vmor %vm1322, %vm1323
        %v1325 = vsel %vm1324, %v1317, %v1321
        %v1326 = vand.u32 2147483647, %v1111
        %vm1327 = vcmp.eq.f32.partialorder %v1326, 8.507059e+37
        %v1328 = vand.u32 %v1111, 2147483648
        %v1329 = vor.u32 1.1754944e-38, %v1328
        %v1330 = vsel %vm1327, %v1329, %v1325
        %v1331 = vmul.f32 1.0, %v1330
        %v1332 = vrcp.pop %v1112
        %v1333 = vmul.f32 %v1112, %v1332
        %v1334 = vsub.f32 1.0, %v1333
        %v1335 = vmul.f32 %v1332, %v1334
        %v1336 = vadd.f32 %v1332, %v1335
        %vm1337 = vweird.f32 %v1112
        %vm1338 = vweird.f32 %v1332
        %vm1339 = vmor %vm1337, %vm1338
        %v1340 = vsel %vm1339, %v1332, %v1336
        %v1341 = vand.u32 2147483647, %v1112
        %vm1342 = vcmp.eq.f32.partialorder %v1341, 8.507059e+37
        %v1343 = vand.u32 %v1112, 2147483648
        %v1344 = vor.u32 1.1754944e-38, %v1343
        %v1345 = vsel %vm1342, %v1344, %v1340
        %v1346 = vmul.f32 1.0, %v1345
        %v1347 = vrcp.pop %v1113
        %v1348 = vmul.f32 %v1113, %v1347
        %v1349 = vsub.f32 1.0, %v1348
        %v1350 = vmul.f32 %v1347, %v1349
        %v1351 = vadd.f32 %v1347, %v1350
        %vm1352 = vweird.f32 %v1113
        %vm1353 = vweird.f32 %v1347
        %vm1354 = vmor %vm1352, %vm1353
        %v1355 = vsel %vm1354, %v1347, %v1351
        %v1356 = vand.u32 2147483647, %v1113
        %vm1357 = vcmp.eq.f32.partialorder %v1356, 8.507059e+37
        %v1358 = vand.u32 %v1113, 2147483648
        %v1359 = vor.u32 1.1754944e-38, %v1358
        %v1360 = vsel %vm1357, %v1359, %v1355
        %v1361 = vmul.f32 1.0, %v1360
        %v1362 = vrcp.pop %v1114
        %v1363 = vmul.f32 %v1114, %v1362
        %v1364 = vsub.f32 1.0, %v1363
        %v1365 = vmul.f32 %v1362, %v1364
        %v1366 = vadd.f32 %v1362, %v1365
        %vm1367 = vweird.f32 %v1114
        %vm1368 = vweird.f32 %v1362
        %vm1369 = vmor %vm1367, %vm1368
        %v1370 = vsel %vm1369, %v1362, %v1366
        %v1371 = vand.u32 2147483647, %v1114
        %vm1372 = vcmp.eq.f32.partialorder %v1371, 8.507059e+37
        %v1373 = vand.u32 %v1114, 2147483648
        %v1374 = vor.u32 1.1754944e-38, %v1373
        %v1375 = vsel %vm1372, %v1374, %v1370
        %v1376 = vmul.f32 1.0, %v1375
        %v1377 = vrcp.pop %v1115
        %v1378 = vmul.f32 %v1115, %v1377
        %v1379 = vsub.f32 1.0, %v1378
        %v1380 = vmul.f32 %v1377, %v1379
        %v1381 = vadd.f32 %v1377, %v1380
        %vm1382 = vweird.f32 %v1115
        %vm1383 = vweird.f32 %v1377
        %vm1384 = vmor %vm1382, %vm1383
        %v1385 = vsel %vm1384, %v1377, %v1381
        %v1386 = vand.u32 2147483647, %v1115
        %vm1387 = vcmp.eq.f32.partialorder %v1386, 8.507059e+37
        %v1388 = vand.u32 %v1115, 2147483648
        %v1389 = vor.u32 1.1754944e-38, %v1388
        %v1390 = vsel %vm1387, %v1389, %v1385
        %v1391 = vmul.f32 1.0, %v1390
        %v1392 = vrcp.pop %v1116
        %v1393 = vmul.f32 %v1116, %v1392
        %v1394 = vsub.f32 1.0, %v1393
        %v1395 = vmul.f32 %v1392, %v1394
        %v1396 = vadd.f32 %v1392, %v1395
        %vm1397 = vweird.f32 %v1116
        %vm1398 = vweird.f32 %v1392
        %vm1399 = vmor %vm1397, %vm1398
        %v1400 = vsel %vm1399, %v1392, %v1396
        %v1401 = vand.u32 2147483647, %v1116
        %vm1402 = vcmp.eq.f32.partialorder %v1401, 8.507059e+37
        %v1403 = vand.u32 %v1116, 2147483648
        %v1404 = vor.u32 1.1754944e-38, %v1403
        %v1405 = vsel %vm1402, %v1404, %v1400
        %v1406 = vmul.f32 1.0, %v1405
        %v1407 = vrcp.pop %v1117
        %v1408 = vmul.f32 %v1117, %v1407
        %v1409 = vsub.f32 1.0, %v1408
        %v1410 = vmul.f32 %v1407, %v1409
        %v1411 = vadd.f32 %v1407, %v1410
        %vm1412 = vweird.f32 %v1117
        %vm1413 = vweird.f32 %v1407
        %vm1414 = vmor %vm1412, %vm1413
        %v1415 = vsel %vm1414, %v1407, %v1411
        %v1416 = vand.u32 2147483647, %v1117
        %vm1417 = vcmp.eq.f32.partialorder %v1416, 8.507059e+37
        %v1418 = vand.u32 %v1117, 2147483648
        %v1419 = vor.u32 1.1754944e-38, %v1418
        %v1420 = vsel %vm1417, %v1419, %v1415
        %v1421 = vmul.f32 1.0, %v1420
        %v1422 = vrcp.pop %v1118
        %v1423 = vmul.f32 %v1118, %v1422
        %v1424 = vsub.f32 1.0, %v1423
        %v1425 = vmul.f32 %v1422, %v1424
        %v1426 = vadd.f32 %v1422, %v1425
        %vm1427 = vweird.f32 %v1118
        %vm1428 = vweird.f32 %v1422
        %vm1429 = vmor %vm1427, %vm1428
        %v1430 = vsel %vm1429, %v1422, %v1426
        %v1431 = vand.u32 2147483647, %v1118
        %vm1432 = vcmp.eq.f32.partialorder %v1431, 8.507059e+37
        %v1433 = vand.u32 %v1118, 2147483648
        %v1434 = vor.u32 1.1754944e-38, %v1433
        %v1435 = vsel %vm1432, %v1434, %v1430
        %v1436 = vmul.f32 1.0, %v1435
        %v1437 = vrcp.pop %v1119
        %v1438 = vmul.f32 %v1119, %v1437
        %v1439 = vsub.f32 1.0, %v1438
        %v1440 = vmul.f32 %v1437, %v1439
        %v1441 = vadd.f32 %v1437, %v1440
        %vm1442 = vweird.f32 %v1119
        %vm1443 = vweird.f32 %v1437
        %vm1444 = vmor %vm1442, %vm1443
        %v1445 = vsel %vm1444, %v1437, %v1441
        %v1446 = vand.u32 2147483647, %v1119
        %vm1447 = vcmp.eq.f32.partialorder %v1446, 8.507059e+37
        %v1448 = vand.u32 %v1119, 2147483648
        %v1449 = vor.u32 1.1754944e-38, %v1448
        %v1450 = vsel %vm1447, %v1449, %v1445
        %v1451 = vmul.f32 1.0, %v1450
        %v1452 = vrcp.pop %v1120
        %v1453 = vmul.f32 %v1120, %v1452
        %v1454 = vsub.f32 1.0, %v1453
        %v1455 = vmul.f32 %v1452, %v1454
        %v1456 = vadd.f32 %v1452, %v1455
        %vm1457 = vweird.f32 %v1120
        %vm1458 = vweird.f32 %v1452
        %vm1459 = vmor %vm1457, %vm1458
        %v1460 = vsel %vm1459, %v1452, %v1456
        %v1461 = vand.u32 2147483647, %v1120
        %vm1462 = vcmp.eq.f32.partialorder %v1461, 8.507059e+37
        %v1463 = vand.u32 %v1120, 2147483648
        %v1464 = vor.u32 1.1754944e-38, %v1463
        %v1465 = vsel %vm1462, %v1464, %v1460
        %v1466 = vmul.f32 1.0, %v1465
        %v1467 = vrcp.pop %v1121
        %v1468 = vmul.f32 %v1121, %v1467
        %v1469 = vsub.f32 1.0, %v1468
        %v1470 = vmul.f32 %v1467, %v1469
        %v1471 = vadd.f32 %v1467, %v1470
        %vm1472 = vweird.f32 %v1121
        %vm1473 = vweird.f32 %v1467
        %vm1474 = vmor %vm1472, %vm1473
        %v1475 = vsel %vm1474, %v1467, %v1471
        %v1476 = vand.u32 2147483647, %v1121
        %vm1477 = vcmp.eq.f32.partialorder %v1476, 8.507059e+37
        %v1478 = vand.u32 %v1121, 2147483648
        %v1479 = vor.u32 1.1754944e-38, %v1478
        %v1480 = vsel %vm1477, %v1479, %v1475
        %v1481 = vmul.f32 1.0, %v1480
        %v1482 = vmul.f32 %v839, %v1136
        %v1483 = vmul.f32 %v921, %v1151
        %v1484 = vmul.f32 %v1003, %v1166
        %v1485 = vmul.f32 %v842, %v1181
        %v1486 = vmul.f32 %v924, %v1196
        %v1487 = vmul.f32 %v1006, %v1211
        %v1488 = vmul.f32 %v845, %v1226
        %v1489 = vmul.f32 %v927, %v1241
        %v1490 = vmul.f32 %v1009, %v1256
        %v1491 = vmul.f32 %v848, %v1271
        %v1492 = vmul.f32 %v930, %v1286
        %v1493 = vmul.f32 %v1012, %v1301
        %v1494 = vmul.f32 %v851, %v1316
        %v1495 = vmul.f32 %v933, %v1331
        %v1496 = vmul.f32 %v1015, %v1346
        %v1497 = vmul.f32 %v854, %v1361
        %v1498 = vmul.f32 %v936, %v1376
        %v1499 = vmul.f32 %v1018, %v1391
        %v1500 = vmul.f32 %v857, %v1406
        %v1501 = vmul.f32 %v939, %v1421
        %v1502 = vmul.f32 %v1021, %v1436
        %v1503 = vmul.f32 %v860, %v1451
        %v1504 = vmul.f32 %v942, %v1466
        %v1505 = vmul.f32 %v1024, %v1481
        %1506 = vst [vmem:[#allocation2] sm:$0xff] 0.0
        %1507 = vst [vmem:[#allocation2 + $0x8] sm:$0xff] 0.0
        %vm1508 = vcmask 261120
        %1509 = vst.msk [vmem:[#allocation2 + $0x10] sm:$0xff] %vm1508, 0.0
        %1510 = vst [vmem:[#allocation2 + $0x18] sm:$0xff] %v539
        %1511 = vst [vmem:[#allocation2 + $0x20] sm:$0xff] %v621
        %1512 = vst.msk [vmem:[#allocation2 + $0x28] sm:$0xff] %vm1508, %v703
        %1513 = vst [vmem:[#allocation2 + $0x30] sm:$0xff] %v542
        %1514 = vst [vmem:[#allocation2 + $0x38] sm:$0xff] %v624
        %1515 = vst.msk [vmem:[#allocation2 + $0x40] sm:$0xff] %vm1508, %v706
        %1516 = vst [vmem:[#allocation2 + $0x48] sm:$0xff] %v545
        %1517 = vst [vmem:[#allocation2 + $0x50] sm:$0xff] %v627
        %1518 = vst.msk [vmem:[#allocation2 + $0x58] sm:$0xff] %vm1508, %v709
        %1519 = vst [vmem:[#allocation2 + $0x60] sm:$0xff] %v548
        %1520 = vst [vmem:[#allocation2 + $0x68] sm:$0xff] %v630
        %1521 = vst.msk [vmem:[#allocation2 + $0x70] sm:$0xff] %vm1508, %v712
        %1522 = vst [vmem:[#allocation2 + $0x78] sm:$0xff] %v551
        %1523 = vst [vmem:[#allocation2 + $0x80] sm:$0xff] %v633
        %1524 = vst.msk [vmem:[#allocation2 + $0x88] sm:$0xff] %vm1508, %v715
        %1525 = vst [vmem:[#allocation2 + $0x90] sm:$0xff] %v554
        %1526 = vst [vmem:[#allocation2 + $0x98] sm:$0xff] %v636
        %1527 = vst.msk [vmem:[#allocation2 + $0xa0] sm:$0xff] %vm1508, %v718
        %1528 = vst [vmem:[#allocation2 + $0xa8] sm:$0xff] %v557
        %1529 = vst [vmem:[#allocation2 + $0xb0] sm:$0xff] %v639
        %1530 = vst.msk [vmem:[#allocation2 + $0xb8] sm:$0xff] %vm1508, %v721
        %1531 = vst [vmem:[#allocation2 + $0xc0] sm:$0xff] %v560
        %1532 = vst [vmem:[#allocation2 + $0xc8] sm:$0xff] %v642
        %1533 = vst.msk [vmem:[#allocation2 + $0xd0] sm:$0xff] %vm1508, %v724
        %v1534 = vld [vmem:[%s4] sm:$0x7]
        %v1535 = vld [vmem:[#allocation2] sm:$0xe0]
        %v1536 = vld [vmem:[#allocation2 + $0x8] sm:$0xe0]
        %v1537 = vld [vmem:[#allocation2 + $0x10] sm:$0xe0]
        %v1538 = vld [vmem:[#allocation2 + $0x18] sm:$0xff]
        %v1539 = vld [vmem:[#allocation2 + $0x20] sm:$0xff]
        %v1540 = vld [vmem:[#allocation2 + $0x28] sm:$0xff]
        %v1541 = vld [vmem:[#allocation2 + $0x30] sm:$0xff]
        %v1542 = vld [vmem:[#allocation2 + $0x38] sm:$0xff]
        %v1543 = vld [vmem:[#allocation2 + $0x40] sm:$0xff]
        %v1544 = vld [vmem:[#allocation2 + $0x48] sm:$0xff]
        %v1545 = vld [vmem:[#allocation2 + $0x50] sm:$0xff]
        %v1546 = vld [vmem:[#allocation2 + $0x58] sm:$0xff]
        %v1547 = vld [vmem:[#allocation2 + $0x60] sm:$0xff]
        %v1548 = vld [vmem:[#allocation2 + $0x68] sm:$0xff]
        %v1549 = vld [vmem:[#allocation2 + $0x70] sm:$0xff]
        %v1550 = vld [vmem:[#allocation2 + $0x78] sm:$0xff]
        %v1551 = vld [vmem:[#allocation2 + $0x80] sm:$0xff]
        %v1552 = vld [vmem:[#allocation2 + $0x88] sm:$0xff]
        %v1553 = vld [vmem:[#allocation2 + $0x90] sm:$0xff]
        %v1554 = vld [vmem:[#allocation2 + $0x98] sm:$0xff]
        %v1555 = vld [vmem:[#allocation2 + $0xa0] sm:$0xff]
        %v1556 = vld [vmem:[#allocation2 + $0xa8] sm:$0xff]
        %v1557 = vld [vmem:[#allocation2 + $0xb0] sm:$0xff]
        %v1558 = vld [vmem:[#allocation2 + $0xb8] sm:$0xff]
        %v1559 = vld [vmem:[#allocation2 + $0xc0] sm:$0x1f]
        %v1560 = vld [vmem:[#allocation2 + $0xc8] sm:$0x1f]
        %v1561 = vld [vmem:[#allocation2 + $0xd0] sm:$0x1f]
        %v1562 = vld [vmem:[%s3] ss:$4 sm:$0x7]
        %v1564 = vperm.slane %v1562, 0
        %v1565 = vperm.slane %v1562, 1
        %v1566 = vperm.slane %v1562, 2
        %v1570 = vmul.f32 %v1564, %v1535
        %v1571 = vmul.f32 %v1565, %v1536
        %v1572 = vmul.f32 %v1566, %v1537
        %v1573 = vmul.f32 %v1564, %v1538
        %v1574 = vmul.f32 %v1565, %v1539
        %v1575 = vmul.f32 %v1566, %v1540
        %v1576 = vmul.f32 %v1564, %v1541
        %v1577 = vmul.f32 %v1565, %v1542
        %v1578 = vmul.f32 %v1566, %v1543
        %v1579 = vmul.f32 %v1564, %v1544
        %v1580 = vmul.f32 %v1565, %v1545
        %v1581 = vmul.f32 %v1566, %v1546
        %v1582 = vmul.f32 %v1564, %v1547
        %v1583 = vmul.f32 %v1565, %v1548
        %v1584 = vmul.f32 %v1566, %v1549
        %v1585 = vmul.f32 %v1564, %v1550
        %v1586 = vmul.f32 %v1565, %v1551
        %v1587 = vmul.f32 %v1566, %v1552
        %v1588 = vmul.f32 %v1564, %v1553
        %v1589 = vmul.f32 %v1565, %v1554
        %v1590 = vmul.f32 %v1566, %v1555
        %v1591 = vmul.f32 %v1564, %v1556
        %v1592 = vmul.f32 %v1565, %v1557
        %v1593 = vmul.f32 %v1566, %v1558
        %v1594 = vmul.f32 %v1564, %v1559
        %v1595 = vmul.f32 %v1565, %v1560
        %v1596 = vmul.f32 %v1566, %v1561
        %v1598 = vperm.slane %v1534, 0
        %v1599 = vperm.slane %v1534, 1
        %v1600 = vperm.slane %v1534, 2
        %v1604 = vadd.f32 %v1598, %v1570
        %v1605 = vadd.f32 %v1599, %v1571
        %v1606 = vadd.f32 %v1600, %v1572
        %v1607 = vadd.f32 %v1598, %v1573
        %v1608 = vadd.f32 %v1599, %v1574
        %v1609 = vadd.f32 %v1600, %v1575
        %v1610 = vadd.f32 %v1598, %v1576
        %v1611 = vadd.f32 %v1599, %v1577
        %v1612 = vadd.f32 %v1600, %v1578
        %v1613 = vadd.f32 %v1598, %v1579
        %v1614 = vadd.f32 %v1599, %v1580
        %v1615 = vadd.f32 %v1600, %v1581
        %v1616 = vadd.f32 %v1598, %v1582
        %v1617 = vadd.f32 %v1599, %v1583
        %v1618 = vadd.f32 %v1600, %v1584
        %v1619 = vadd.f32 %v1598, %v1585
        %v1620 = vadd.f32 %v1599, %v1586
        %v1621 = vadd.f32 %v1600, %v1587
        %v1622 = vadd.f32 %v1598, %v1588
        %v1623 = vadd.f32 %v1599, %v1589
        %v1624 = vadd.f32 %v1600, %v1590
        %v1625 = vadd.f32 %v1598, %v1591
        %v1626 = vadd.f32 %v1599, %v1592
        %v1627 = vadd.f32 %v1600, %v1593
        %v1628 = vadd.f32 %v1598, %v1594
        %v1629 = vadd.f32 %v1599, %v1595
        %v1630 = vadd.f32 %v1600, %v1596
        %v1631 = vld [vmem:[#allocation2] sm:$0xc0]
        %v1632 = vld [vmem:[#allocation2 + $0x8] sm:$0xc0]
        %v1633 = vld [vmem:[#allocation2 + $0x10] sm:$0xc0]
        %v1634 = vld [vmem:[#allocation2 + $0xc0] sm:$0x3f]
        %v1635 = vld [vmem:[#allocation2 + $0xc8] sm:$0x3f]
        %v1636 = vld [vmem:[#allocation2 + $0xd0] sm:$0x3f]
        %s1637 = scalar_lea.vmem %s3, 1
        %v1638 = vld [vmem:[%s1637] ss:$4 sm:$0x7]
        %v1640 = vperm.slane %v1638, 0
        %v1641 = vperm.slane %v1638, 1
        %v1642 = vperm.slane %v1638, 2
        %v1646 = vmul.f32 %v1640, %v1631
        %v1647 = vmul.f32 %v1641, %v1632
        %v1648 = vmul.f32 %v1642, %v1633
        %v1649 = vmul.f32 %v1640, %v1538
        %v1650 = vmul.f32 %v1641, %v1539
        %v1651 = vmul.f32 %v1642, %v1540
        %v1652 = vmul.f32 %v1640, %v1541
        %v1653 = vmul.f32 %v1641, %v1542
        %v1654 = vmul.f32 %v1642, %v1543
        %v1655 = vmul.f32 %v1640, %v1544
        %v1656 = vmul.f32 %v1641, %v1545
        %v1657 = vmul.f32 %v1642, %v1546
        %v1658 = vmul.f32 %v1640, %v1547
        %v1659 = vmul.f32 %v1641, %v1548
        %v1660 = vmul.f32 %v1642, %v1549
        %v1661 = vmul.f32 %v1640, %v1550
        %v1662 = vmul.f32 %v1641, %v1551
        %v1663 = vmul.f32 %v1642, %v1552
        %v1664 = vmul.f32 %v1640, %v1553
        %v1665 = vmul.f32 %v1641, %v1554
        %v1666 = vmul.f32 %v1642, %v1555
        %v1667 = vmul.f32 %v1640, %v1556
        %v1668 = vmul.f32 %v1641, %v1557
        %v1669 = vmul.f32 %v1642, %v1558
        %v1670 = vmul.f32 %v1640, %v1634
        %v1671 = vmul.f32 %v1641, %v1635
        %v1672 = vmul.f32 %v1642, %v1636
        %vm1700 = vcmask 1046528
        %v1701 = vrot.slane %v1646, 1
        %v1702 = vrot.slane %v1649, 1
        %v1703 = vsel %vm1700, %v1701, %v1702
        %v1704 = vrot.slane %v1647, 1
        %v1705 = vrot.slane %v1650, 1
        %v1706 = vsel %vm1700, %v1704, %v1705
        %v1707 = vrot.slane %v1648, 1
        %v1708 = vrot.slane %v1651, 1
        %v1709 = vsel %vm1700, %v1707, %v1708
        %v1710 = vrot.slane %v1652, 1
        %v1711 = vsel %vm1700, %v1702, %v1710
        %v1712 = vrot.slane %v1653, 1
        %v1713 = vsel %vm1700, %v1705, %v1712
        %v1714 = vrot.slane %v1654, 1
        %v1715 = vsel %vm1700, %v1708, %v1714
        %v1716 = vrot.slane %v1655, 1
        %v1717 = vsel %vm1700, %v1710, %v1716
        %v1718 = vrot.slane %v1656, 1
        %v1719 = vsel %vm1700, %v1712, %v1718
        %v1720 = vrot.slane %v1657, 1
        %v1721 = vsel %vm1700, %v1714, %v1720
        %v1722 = vrot.slane %v1658, 1
        %v1723 = vsel %vm1700, %v1716, %v1722
        %v1724 = vrot.slane %v1659, 1
        %v1725 = vsel %vm1700, %v1718, %v1724
        %v1726 = vrot.slane %v1660, 1
        %v1727 = vsel %vm1700, %v1720, %v1726
        %v1728 = vrot.slane %v1661, 1
        %v1729 = vsel %vm1700, %v1722, %v1728
        %v1730 = vrot.slane %v1662, 1
        %v1731 = vsel %vm1700, %v1724, %v1730
        %v1732 = vrot.slane %v1663, 1
        %v1733 = vsel %vm1700, %v1726, %v1732
        %v1734 = vrot.slane %v1664, 1
        %v1735 = vsel %vm1700, %v1728, %v1734
        %v1736 = vrot.slane %v1665, 1
        %v1737 = vsel %vm1700, %v1730, %v1736
        %v1738 = vrot.slane %v1666, 1
        %v1739 = vsel %vm1700, %v1732, %v1738
        %v1740 = vrot.slane %v1667, 1
        %v1741 = vsel %vm1700, %v1734, %v1740
        %v1742 = vrot.slane %v1668, 1
        %v1743 = vsel %vm1700, %v1736, %v1742
        %v1744 = vrot.slane %v1669, 1
        %v1745 = vsel %vm1700, %v1738, %v1744
        %v1746 = vrot.slane %v1670, 1
        %v1747 = vsel %vm1700, %v1740, %v1746
        %v1748 = vrot.slane %v1671, 1
        %v1749 = vsel %vm1700, %v1742, %v1748
        %v1750 = vrot.slane %v1672, 1
        %v1751 = vsel %vm1700, %v1744, %v1750
        %v1779 = vadd.f32 %v1604, %v1703
        %v1780 = vadd.f32 %v1605, %v1706
        %v1781 = vadd.f32 %v1606, %v1709
        %v1782 = vadd.f32 %v1607, %v1711
        %v1783 = vadd.f32 %v1608, %v1713
        %v1784 = vadd.f32 %v1609, %v1715
        %v1785 = vadd.f32 %v1610, %v1717
        %v1786 = vadd.f32 %v1611, %v1719
        %v1787 = vadd.f32 %v1612, %v1721
        %v1788 = vadd.f32 %v1613, %v1723
        %v1789 = vadd.f32 %v1614, %v1725
        %v1790 = vadd.f32 %v1615, %v1727
        %v1791 = vadd.f32 %v1616, %v1729
        %v1792 = vadd.f32 %v1617, %v1731
        %v1793 = vadd.f32 %v1618, %v1733
        %v1794 = vadd.f32 %v1619, %v1735
        %v1795 = vadd.f32 %v1620, %v1737
        %v1796 = vadd.f32 %v1621, %v1739
        %v1797 = vadd.f32 %v1622, %v1741
        %v1798 = vadd.f32 %v1623, %v1743
        %v1799 = vadd.f32 %v1624, %v1745
        %v1800 = vadd.f32 %v1625, %v1747
        %v1801 = vadd.f32 %v1626, %v1749
        %v1802 = vadd.f32 %v1627, %v1751
        %v1803 = vadd.f32 %v1628, %v1746
        %v1804 = vadd.f32 %v1629, %v1748
        %v1805 = vadd.f32 %v1630, %v1750
        %v1806 = vld [vmem:[#allocation2] sm:$0x80]
        %v1807 = vld [vmem:[#allocation2 + $0x8] sm:$0x80]
        %v1808 = vld [vmem:[#allocation2 + $0x10] sm:$0x80]
        %v1809 = vld [vmem:[#allocation2 + $0xc0] sm:$0x7f]
        %v1810 = vld [vmem:[#allocation2 + $0xc8] sm:$0x7f]
        %v1811 = vld [vmem:[#allocation2 + $0xd0] sm:$0x7f]
        %s1812 = scalar_lea.vmem %s3, 2
        %v1813 = vld [vmem:[%s1812] ss:$4 sm:$0x7]
        %v1815 = vperm.slane %v1813, 0
        %v1816 = vperm.slane %v1813, 1
        %v1817 = vperm.slane %v1813, 2
        %v1821 = vmul.f32 %v1815, %v1806
        %v1822 = vmul.f32 %v1816, %v1807
        %v1823 = vmul.f32 %v1817, %v1808
        %v1824 = vmul.f32 %v1815, %v1538
        %v1825 = vmul.f32 %v1816, %v1539
        %v1826 = vmul.f32 %v1817, %v1540
        %v1827 = vmul.f32 %v1815, %v1541
        %v1828 = vmul.f32 %v1816, %v1542
        %v1829 = vmul.f32 %v1817, %v1543
        %v1830 = vmul.f32 %v1815, %v1544
        %v1831 = vmul.f32 %v1816, %v1545
        %v1832 = vmul.f32 %v1817, %v1546
        %v1833 = vmul.f32 %v1815, %v1547
        %v1834 = vmul.f32 %v1816, %v1548
        %v1835 = vmul.f32 %v1817, %v1549
        %v1836 = vmul.f32 %v1815, %v1550
        %v1837 = vmul.f32 %v1816, %v1551
        %v1838 = vmul.f32 %v1817, %v1552
        %v1839 = vmul.f32 %v1815, %v1553
        %v1840 = vmul.f32 %v1816, %v1554
        %v1841 = vmul.f32 %v1817, %v1555
        %v1842 = vmul.f32 %v1815, %v1556
        %v1843 = vmul.f32 %v1816, %v1557
        %v1844 = vmul.f32 %v1817, %v1558
        %v1845 = vmul.f32 %v1815, %v1809
        %v1846 = vmul.f32 %v1816, %v1810
        %v1847 = vmul.f32 %v1817, %v1811
        %vm1875 = vcmask 1045504
        %v1876 = vrot.slane %v1821, 2
        %v1877 = vrot.slane %v1824, 2
        %v1878 = vsel %vm1875, %v1876, %v1877
        %v1879 = vrot.slane %v1822, 2
        %v1880 = vrot.slane %v1825, 2
        %v1881 = vsel %vm1875, %v1879, %v1880
        %v1882 = vrot.slane %v1823, 2
        %v1883 = vrot.slane %v1826, 2
        %v1884 = vsel %vm1875, %v1882, %v1883
        %v1885 = vrot.slane %v1827, 2
        %v1886 = vsel %vm1875, %v1877, %v1885
        %v1887 = vrot.slane %v1828, 2
        %v1888 = vsel %vm1875, %v1880, %v1887
        %v1889 = vrot.slane %v1829, 2
        %v1890 = vsel %vm1875, %v1883, %v1889
        %v1891 = vrot.slane %v1830, 2
        %v1892 = vsel %vm1875, %v1885, %v1891
        %v1893 = vrot.slane %v1831, 2
        %v1894 = vsel %vm1875, %v1887, %v1893
        %v1895 = vrot.slane %v1832, 2
        %v1896 = vsel %vm1875, %v1889, %v1895
        %v1897 = vrot.slane %v1833, 2
        %v1898 = vsel %vm1875, %v1891, %v1897
        %v1899 = vrot.slane %v1834, 2
        %v1900 = vsel %vm1875, %v1893, %v1899
        %v1901 = vrot.slane %v1835, 2
        %v1902 = vsel %vm1875, %v1895, %v1901
        %v1903 = vrot.slane %v1836, 2
        %v1904 = vsel %vm1875, %v1897, %v1903
        %v1905 = vrot.slane %v1837, 2
        %v1906 = vsel %vm1875, %v1899, %v1905
        %v1907 = vrot.slane %v1838, 2
        %v1908 = vsel %vm1875, %v1901, %v1907
        %v1909 = vrot.slane %v1839, 2
        %v1910 = vsel %vm1875, %v1903, %v1909
        %v1911 = vrot.slane %v1840, 2
        %v1912 = vsel %vm1875, %v1905, %v1911
        %v1913 = vrot.slane %v1841, 2
        %v1914 = vsel %vm1875, %v1907, %v1913
        %v1915 = vrot.slane %v1842, 2
        %v1916 = vsel %vm1875, %v1909, %v1915
        %v1917 = vrot.slane %v1843, 2
        %v1918 = vsel %vm1875, %v1911, %v1917
        %v1919 = vrot.slane %v1844, 2
        %v1920 = vsel %vm1875, %v1913, %v1919
        %v1921 = vrot.slane %v1845, 2
        %v1922 = vsel %vm1875, %v1915, %v1921
        %v1923 = vrot.slane %v1846, 2
        %v1924 = vsel %vm1875, %v1917, %v1923
        %v1925 = vrot.slane %v1847, 2
        %v1926 = vsel %vm1875, %v1919, %v1925
        %v1954 = vadd.f32 %v1779, %v1878
        %v1955 = vadd.f32 %v1780, %v1881
        %v1956 = vadd.f32 %v1781, %v1884
        %v1957 = vadd.f32 %v1782, %v1886
        %v1958 = vadd.f32 %v1783, %v1888
        %v1959 = vadd.f32 %v1784, %v1890
        %v1960 = vadd.f32 %v1785, %v1892
        %v1961 = vadd.f32 %v1786, %v1894
        %v1962 = vadd.f32 %v1787, %v1896
        %v1963 = vadd.f32 %v1788, %v1898
        %v1964 = vadd.f32 %v1789, %v1900
        %v1965 = vadd.f32 %v1790, %v1902
        %v1966 = vadd.f32 %v1791, %v1904
        %v1967 = vadd.f32 %v1792, %v1906
        %v1968 = vadd.f32 %v1793, %v1908
        %v1969 = vadd.f32 %v1794, %v1910
        %v1970 = vadd.f32 %v1795, %v1912
        %v1971 = vadd.f32 %v1796, %v1914
        %v1972 = vadd.f32 %v1797, %v1916
        %v1973 = vadd.f32 %v1798, %v1918
        %v1974 = vadd.f32 %v1799, %v1920
        %v1975 = vadd.f32 %v1800, %v1922
        %v1976 = vadd.f32 %v1801, %v1924
        %v1977 = vadd.f32 %v1802, %v1926
        %v1978 = vadd.f32 %v1803, %v1921
        %v1979 = vadd.f32 %v1804, %v1923
        %v1980 = vadd.f32 %v1805, %v1925
        %v1981 = vld [vmem:[#allocation2 + $0xc0] sm:$0xff]
        %v1982 = vld [vmem:[#allocation2 + $0xc8] sm:$0xff]
        %v1983 = vld [vmem:[#allocation2 + $0xd0] sm:$0xff]
        %s1984 = scalar_lea.vmem %s3, 3
        %v1985 = vld [vmem:[%s1984] ss:$4 sm:$0x7]
        %v1987 = vperm.slane %v1985, 0
        %v1988 = vperm.slane %v1985, 1
        %v1989 = vperm.slane %v1985, 2
        %v1993 = vmul.f32 %v1987, %v1538
        %v1994 = vmul.f32 %v1988, %v1539
        %v1995 = vmul.f32 %v1989, %v1540
        %v1996 = vmul.f32 %v1987, %v1541
        %v1997 = vmul.f32 %v1988, %v1542
        %v1998 = vmul.f32 %v1989, %v1543
        %v1999 = vmul.f32 %v1987, %v1544
        %v2000 = vmul.f32 %v1988, %v1545
        %v2001 = vmul.f32 %v1989, %v1546
        %v2002 = vmul.f32 %v1987, %v1547
        %v2003 = vmul.f32 %v1988, %v1548
        %v2004 = vmul.f32 %v1989, %v1549
        %v2005 = vmul.f32 %v1987, %v1550
        %v2006 = vmul.f32 %v1988, %v1551
        %v2007 = vmul.f32 %v1989, %v1552
        %v2008 = vmul.f32 %v1987, %v1553
        %v2009 = vmul.f32 %v1988, %v1554
        %v2010 = vmul.f32 %v1989, %v1555
        %v2011 = vmul.f32 %v1987, %v1556
        %v2012 = vmul.f32 %v1988, %v1557
        %v2013 = vmul.f32 %v1989, %v1558
        %v2014 = vmul.f32 %v1987, %v1981
        %v2015 = vmul.f32 %v1988, %v1982
        %v2016 = vmul.f32 %v1989, %v1983
        %vm2041 = vcmask 1044480
        %v2042 = vrot.slane %v1993, 3
        %v2043 = vrot.slane %v1994, 3
        %v2044 = vrot.slane %v1995, 3
        %v2045 = vrot.slane %v1996, 3
        %v2046 = vsel %vm2041, %v2042, %v2045
        %v2047 = vrot.slane %v1997, 3
        %v2048 = vsel %vm2041, %v2043, %v2047
        %v2049 = vrot.slane %v1998, 3
        %v2050 = vsel %vm2041, %v2044, %v2049
        %v2051 = vrot.slane %v1999, 3
        %v2052 = vsel %vm2041, %v2045, %v2051
        %v2053 = vrot.slane %v2000, 3
        %v2054 = vsel %vm2041, %v2047, %v2053
        %v2055 = vrot.slane %v2001, 3
        %v2056 = vsel %vm2041, %v2049, %v2055
        %v2057 = vrot.slane %v2002, 3
        %v2058 = vsel %vm2041, %v2051, %v2057
        %v2059 = vrot.slane %v2003, 3
        %v2060 = vsel %vm2041, %v2053, %v2059
        %v2061 = vrot.slane %v2004, 3
        %v2062 = vsel %vm2041, %v2055, %v2061
        %v2063 = vrot.slane %v2005, 3
        %v2064 = vsel %vm2041, %v2057, %v2063
        %v2065 = vrot.slane %v2006, 3
        %v2066 = vsel %vm2041, %v2059, %v2065
        %v2067 = vrot.slane %v2007, 3
        %v2068 = vsel %vm2041, %v2061, %v2067
        %v2069 = vrot.slane %v2008, 3
        %v2070 = vsel %vm2041, %v2063, %v2069
        %v2071 = vrot.slane %v2009, 3
        %v2072 = vsel %vm2041, %v2065, %v2071
        %v2073 = vrot.slane %v2010, 3
        %v2074 = vsel %vm2041, %v2067, %v2073
        %v2075 = vrot.slane %v2011, 3
        %v2076 = vsel %vm2041, %v2069, %v2075
        %v2077 = vrot.slane %v2012, 3
        %v2078 = vsel %vm2041, %v2071, %v2077
        %v2079 = vrot.slane %v2013, 3
        %v2080 = vsel %vm2041, %v2073, %v2079
        %v2081 = vrot.slane %v2014, 3
        %v2082 = vsel %vm2041, %v2075, %v2081
        %v2083 = vrot.slane %v2015, 3
        %v2084 = vsel %vm2041, %v2077, %v2083
        %v2085 = vrot.slane %v2016, 3
        %v2086 = vsel %vm2041, %v2079, %v2085
        %v2114 = vadd.f32 %v1954, %v2042
        %v2115 = vadd.f32 %v1955, %v2043
        %v2116 = vadd.f32 %v1956, %v2044
        %v2117 = vadd.f32 %v1957, %v2046
        %v2118 = vadd.f32 %v1958, %v2048
        %v2119 = vadd.f32 %v1959, %v2050
        %v2120 = vadd.f32 %v1960, %v2052
        %v2121 = vadd.f32 %v1961, %v2054
        %v2122 = vadd.f32 %v1962, %v2056
        %v2123 = vadd.f32 %v1963, %v2058
        %v2124 = vadd.f32 %v1964, %v2060
        %v2125 = vadd.f32 %v1965, %v2062
        %v2126 = vadd.f32 %v1966, %v2064
        %v2127 = vadd.f32 %v1967, %v2066
        %v2128 = vadd.f32 %v1968, %v2068
        %v2129 = vadd.f32 %v1969, %v2070
        %v2130 = vadd.f32 %v1970, %v2072
        %v2131 = vadd.f32 %v1971, %v2074
        %v2132 = vadd.f32 %v1972, %v2076
        %v2133 = vadd.f32 %v1973, %v2078
        %v2134 = vadd.f32 %v1974, %v2080
        %v2135 = vadd.f32 %v1975, %v2082
        %v2136 = vadd.f32 %v1976, %v2084
        %v2137 = vadd.f32 %v1977, %v2086
        %v2138 = vadd.f32 %v1978, %v2081
        %v2139 = vadd.f32 %v1979, %v2083
        %v2140 = vadd.f32 %v1980, %v2085
        %v2141 = vxor.u32 %v2114, 2147483648
        %v2142 = vxor.u32 %v2115, 2147483648
        %v2143 = vxor.u32 %v2116, 2147483648
        %v2144 = vxor.u32 %v2117, 2147483648
        %v2145 = vxor.u32 %v2118, 2147483648
        %v2146 = vxor.u32 %v2119, 2147483648
        %v2147 = vxor.u32 %v2120, 2147483648
        %v2148 = vxor.u32 %v2121, 2147483648
        %v2149 = vxor.u32 %v2122, 2147483648
        %v2150 = vxor.u32 %v2123, 2147483648
        %v2151 = vxor.u32 %v2124, 2147483648
        %v2152 = vxor.u32 %v2125, 2147483648
        %v2153 = vxor.u32 %v2126, 2147483648
        %v2154 = vxor.u32 %v2127, 2147483648
        %v2155 = vxor.u32 %v2128, 2147483648
        %v2156 = vxor.u32 %v2129, 2147483648
        %v2157 = vxor.u32 %v2130, 2147483648
        %v2158 = vxor.u32 %v2131, 2147483648
        %v2159 = vxor.u32 %v2132, 2147483648
        %v2160 = vxor.u32 %v2133, 2147483648
        %v2161 = vxor.u32 %v2134, 2147483648
        %v2162 = vxor.u32 %v2135, 2147483648
        %v2163 = vxor.u32 %v2136, 2147483648
        %v2164 = vxor.u32 %v2137, 2147483648
        %v2165 = vxor.u32 %v2138, 2147483648
        %v2166 = vxor.u32 %v2139, 2147483648
        %v2167 = vxor.u32 %v2140, 2147483648
        %v2168 = vmul.f32 %v2141, 1.442695
        %v2169 = vpow.pop %v2168
        %v2170 = vmul.f32 %v2142, 1.442695
        %v2171 = vpow.pop %v2170
        %v2172 = vmul.f32 %v2143, 1.442695
        %v2173 = vpow.pop %v2172
        %v2174 = vmul.f32 %v2144, 1.442695
        %v2175 = vpow.pop %v2174
        %v2176 = vmul.f32 %v2145, 1.442695
        %v2177 = vpow.pop %v2176
        %v2178 = vmul.f32 %v2146, 1.442695
        %v2179 = vpow.pop %v2178
        %v2180 = vmul.f32 %v2147, 1.442695
        %v2181 = vpow.pop %v2180
        %v2182 = vmul.f32 %v2148, 1.442695
        %v2183 = vpow.pop %v2182
        %v2184 = vmul.f32 %v2149, 1.442695
        %v2185 = vpow.pop %v2184
        %v2186 = vmul.f32 %v2150, 1.442695
        %v2187 = vpow.pop %v2186
        %v2188 = vmul.f32 %v2151, 1.442695
        %v2189 = vpow.pop %v2188
        %v2190 = vmul.f32 %v2152, 1.442695
        %v2191 = vpow.pop %v2190
        %v2192 = vmul.f32 %v2153, 1.442695
        %v2193 = vpow.pop %v2192
        %v2194 = vmul.f32 %v2154, 1.442695
        %v2195 = vpow.pop %v2194
        %v2196 = vmul.f32 %v2155, 1.442695
        %v2197 = vpow.pop %v2196
        %v2198 = vmul.f32 %v2156, 1.442695
        %v2199 = vpow.pop %v2198
        %v2200 = vmul.f32 %v2157, 1.442695
        %v2201 = vpow.pop %v2200
        %v2202 = vmul.f32 %v2158, 1.442695
        %v2203 = vpow.pop %v2202
        %v2204 = vmul.f32 %v2159, 1.442695
        %v2205 = vpow.pop %v2204
        %v2206 = vmul.f32 %v2160, 1.442695
        %v2207 = vpow.pop %v2206
        %v2208 = vmul.f32 %v2161, 1.442695
        %v2209 = vpow.pop %v2208
        %v2210 = vmul.f32 %v2162, 1.442695
        %v2211 = vpow.pop %v2210
        %v2212 = vmul.f32 %v2163, 1.442695
        %v2213 = vpow.pop %v2212
        %v2214 = vmul.f32 %v2164, 1.442695
        %v2215 = vpow.pop %v2214
        %v2216 = vmul.f32 %v2165, 1.442695
        %v2217 = vpow.pop %v2216
        %v2218 = vmul.f32 %v2166, 1.442695
        %v2219 = vpow.pop %v2218
        %v2220 = vmul.f32 %v2167, 1.442695
        %v2221 = vpow.pop %v2220
        %v2222 = vadd.f32 %v2169, 1.0
        %v2223 = vadd.f32 %v2171, 1.0
        %v2224 = vadd.f32 %v2173, 1.0
        %v2225 = vadd.f32 %v2175, 1.0
        %v2226 = vadd.f32 %v2177, 1.0
        %v2227 = vadd.f32 %v2179, 1.0
        %v2228 = vadd.f32 %v2181, 1.0
        %v2229 = vadd.f32 %v2183, 1.0
        %v2230 = vadd.f32 %v2185, 1.0
        %v2231 = vadd.f32 %v2187, 1.0
        %v2232 = vadd.f32 %v2189, 1.0
        %v2233 = vadd.f32 %v2191, 1.0
        %v2234 = vadd.f32 %v2193, 1.0
        %v2235 = vadd.f32 %v2195, 1.0
        %v2236 = vadd.f32 %v2197, 1.0
        %v2237 = vadd.f32 %v2199, 1.0
        %v2238 = vadd.f32 %v2201, 1.0
        %v2239 = vadd.f32 %v2203, 1.0
        %v2240 = vadd.f32 %v2205, 1.0
        %v2241 = vadd.f32 %v2207, 1.0
        %v2242 = vadd.f32 %v2209, 1.0
        %v2243 = vadd.f32 %v2211, 1.0
        %v2244 = vadd.f32 %v2213, 1.0
        %v2245 = vadd.f32 %v2215, 1.0
        %v2246 = vadd.f32 %v2217, 1.0
        %v2247 = vadd.f32 %v2219, 1.0
        %v2248 = vadd.f32 %v2221, 1.0
        %v2249 = vrcp.pop %v2222
        %v2250 = vmul.f32 %v2222, %v2249
        %v2251 = vsub.f32 1.0, %v2250
        %v2252 = vmul.f32 %v2249, %v2251
        %v2253 = vadd.f32 %v2249, %v2252
        %vm2254 = vweird.f32 %v2222
        %vm2255 = vweird.f32 %v2249
        %vm2256 = vmor %vm2254, %vm2255
        %v2257 = vsel %vm2256, %v2249, %v2253
        %v2258 = vand.u32 2147483647, %v2222
        %vm2259 = vcmp.eq.f32.partialorder %v2258, 8.507059e+37
        %v2260 = vand.u32 %v2222, 2147483648
        %v2261 = vor.u32 1.1754944e-38, %v2260
        %v2262 = vsel %vm2259, %v2261, %v2257
        %v2263 = vmul.f32 1.0, %v2262
        %v2264 = vrcp.pop %v2223
        %v2265 = vmul.f32 %v2223, %v2264
        %v2266 = vsub.f32 1.0, %v2265
        %v2267 = vmul.f32 %v2264, %v2266
        %v2268 = vadd.f32 %v2264, %v2267
        %vm2269 = vweird.f32 %v2223
        %vm2270 = vweird.f32 %v2264
        %vm2271 = vmor %vm2269, %vm2270
        %v2272 = vsel %vm2271, %v2264, %v2268
        %v2273 = vand.u32 2147483647, %v2223
        %vm2274 = vcmp.eq.f32.partialorder %v2273, 8.507059e+37
        %v2275 = vand.u32 %v2223, 2147483648
        %v2276 = vor.u32 1.1754944e-38, %v2275
        %v2277 = vsel %vm2274, %v2276, %v2272
        %v2278 = vmul.f32 1.0, %v2277
        %v2279 = vrcp.pop %v2224
        %v2280 = vmul.f32 %v2224, %v2279
        %v2281 = vsub.f32 1.0, %v2280
        %v2282 = vmul.f32 %v2279, %v2281
        %v2283 = vadd.f32 %v2279, %v2282
        %vm2284 = vweird.f32 %v2224
        %vm2285 = vweird.f32 %v2279
        %vm2286 = vmor %vm2284, %vm2285
        %v2287 = vsel %vm2286, %v2279, %v2283
        %v2288 = vand.u32 2147483647, %v2224
        %vm2289 = vcmp.eq.f32.partialorder %v2288, 8.507059e+37
        %v2290 = vand.u32 %v2224, 2147483648
        %v2291 = vor.u32 1.1754944e-38, %v2290
        %v2292 = vsel %vm2289, %v2291, %v2287
        %v2293 = vmul.f32 1.0, %v2292
        %v2294 = vrcp.pop %v2225
        %v2295 = vmul.f32 %v2225, %v2294
        %v2296 = vsub.f32 1.0, %v2295
        %v2297 = vmul.f32 %v2294, %v2296
        %v2298 = vadd.f32 %v2294, %v2297
        %vm2299 = vweird.f32 %v2225
        %vm2300 = vweird.f32 %v2294
        %vm2301 = vmor %vm2299, %vm2300
        %v2302 = vsel %vm2301, %v2294, %v2298
        %v2303 = vand.u32 2147483647, %v2225
        %vm2304 = vcmp.eq.f32.partialorder %v2303, 8.507059e+37
        %v2305 = vand.u32 %v2225, 2147483648
        %v2306 = vor.u32 1.1754944e-38, %v2305
        %v2307 = vsel %vm2304, %v2306, %v2302
        %v2308 = vmul.f32 1.0, %v2307
        %v2309 = vrcp.pop %v2226
        %v2310 = vmul.f32 %v2226, %v2309
        %v2311 = vsub.f32 1.0, %v2310
        %v2312 = vmul.f32 %v2309, %v2311
        %v2313 = vadd.f32 %v2309, %v2312
        %vm2314 = vweird.f32 %v2226
        %vm2315 = vweird.f32 %v2309
        %vm2316 = vmor %vm2314, %vm2315
        %v2317 = vsel %vm2316, %v2309, %v2313
        %v2318 = vand.u32 2147483647, %v2226
        %vm2319 = vcmp.eq.f32.partialorder %v2318, 8.507059e+37
        %v2320 = vand.u32 %v2226, 2147483648
        %v2321 = vor.u32 1.1754944e-38, %v2320
        %v2322 = vsel %vm2319, %v2321, %v2317
        %v2323 = vmul.f32 1.0, %v2322
        %v2324 = vrcp.pop %v2227
        %v2325 = vmul.f32 %v2227, %v2324
        %v2326 = vsub.f32 1.0, %v2325
        %v2327 = vmul.f32 %v2324, %v2326
        %v2328 = vadd.f32 %v2324, %v2327
        %vm2329 = vweird.f32 %v2227
        %vm2330 = vweird.f32 %v2324
        %vm2331 = vmor %vm2329, %vm2330
        %v2332 = vsel %vm2331, %v2324, %v2328
        %v2333 = vand.u32 2147483647, %v2227
        %vm2334 = vcmp.eq.f32.partialorder %v2333, 8.507059e+37
        %v2335 = vand.u32 %v2227, 2147483648
        %v2336 = vor.u32 1.1754944e-38, %v2335
        %v2337 = vsel %vm2334, %v2336, %v2332
        %v2338 = vmul.f32 1.0, %v2337
        %v2339 = vrcp.pop %v2228
        %v2340 = vmul.f32 %v2228, %v2339
        %v2341 = vsub.f32 1.0, %v2340
        %v2342 = vmul.f32 %v2339, %v2341
        %v2343 = vadd.f32 %v2339, %v2342
        %vm2344 = vweird.f32 %v2228
        %vm2345 = vweird.f32 %v2339
        %vm2346 = vmor %vm2344, %vm2345
        %v2347 = vsel %vm2346, %v2339, %v2343
        %v2348 = vand.u32 2147483647, %v2228
        %vm2349 = vcmp.eq.f32.partialorder %v2348, 8.507059e+37
        %v2350 = vand.u32 %v2228, 2147483648
        %v2351 = vor.u32 1.1754944e-38, %v2350
        %v2352 = vsel %vm2349, %v2351, %v2347
        %v2353 = vmul.f32 1.0, %v2352
        %v2354 = vrcp.pop %v2229
        %v2355 = vmul.f32 %v2229, %v2354
        %v2356 = vsub.f32 1.0, %v2355
        %v2357 = vmul.f32 %v2354, %v2356
        %v2358 = vadd.f32 %v2354, %v2357
        %vm2359 = vweird.f32 %v2229
        %vm2360 = vweird.f32 %v2354
        %vm2361 = vmor %vm2359, %vm2360
        %v2362 = vsel %vm2361, %v2354, %v2358
        %v2363 = vand.u32 2147483647, %v2229
        %vm2364 = vcmp.eq.f32.partialorder %v2363, 8.507059e+37
        %v2365 = vand.u32 %v2229, 2147483648
        %v2366 = vor.u32 1.1754944e-38, %v2365
        %v2367 = vsel %vm2364, %v2366, %v2362
        %v2368 = vmul.f32 1.0, %v2367
        %v2369 = vrcp.pop %v2230
        %v2370 = vmul.f32 %v2230, %v2369
        %v2371 = vsub.f32 1.0, %v2370
        %v2372 = vmul.f32 %v2369, %v2371
        %v2373 = vadd.f32 %v2369, %v2372
        %vm2374 = vweird.f32 %v2230
        %vm2375 = vweird.f32 %v2369
        %vm2376 = vmor %vm2374, %vm2375
        %v2377 = vsel %vm2376, %v2369, %v2373
        %v2378 = vand.u32 2147483647, %v2230
        %vm2379 = vcmp.eq.f32.partialorder %v2378, 8.507059e+37
        %v2380 = vand.u32 %v2230, 2147483648
        %v2381 = vor.u32 1.1754944e-38, %v2380
        %v2382 = vsel %vm2379, %v2381, %v2377
        %v2383 = vmul.f32 1.0, %v2382
        %v2384 = vrcp.pop %v2231
        %v2385 = vmul.f32 %v2231, %v2384
        %v2386 = vsub.f32 1.0, %v2385
        %v2387 = vmul.f32 %v2384, %v2386
        %v2388 = vadd.f32 %v2384, %v2387
        %vm2389 = vweird.f32 %v2231
        %vm2390 = vweird.f32 %v2384
        %vm2391 = vmor %vm2389, %vm2390
        %v2392 = vsel %vm2391, %v2384, %v2388
        %v2393 = vand.u32 2147483647, %v2231
        %vm2394 = vcmp.eq.f32.partialorder %v2393, 8.507059e+37
        %v2395 = vand.u32 %v2231, 2147483648
        %v2396 = vor.u32 1.1754944e-38, %v2395
        %v2397 = vsel %vm2394, %v2396, %v2392
        %v2398 = vmul.f32 1.0, %v2397
        %v2399 = vrcp.pop %v2232
        %v2400 = vmul.f32 %v2232, %v2399
        %v2401 = vsub.f32 1.0, %v2400
        %v2402 = vmul.f32 %v2399, %v2401
        %v2403 = vadd.f32 %v2399, %v2402
        %vm2404 = vweird.f32 %v2232
        %vm2405 = vweird.f32 %v2399
        %vm2406 = vmor %vm2404, %vm2405
        %v2407 = vsel %vm2406, %v2399, %v2403
        %v2408 = vand.u32 2147483647, %v2232
        %vm2409 = vcmp.eq.f32.partialorder %v2408, 8.507059e+37
        %v2410 = vand.u32 %v2232, 2147483648
        %v2411 = vor.u32 1.1754944e-38, %v2410
        %v2412 = vsel %vm2409, %v2411, %v2407
        %v2413 = vmul.f32 1.0, %v2412
        %v2414 = vrcp.pop %v2233
        %v2415 = vmul.f32 %v2233, %v2414
        %v2416 = vsub.f32 1.0, %v2415
        %v2417 = vmul.f32 %v2414, %v2416
        %v2418 = vadd.f32 %v2414, %v2417
        %vm2419 = vweird.f32 %v2233
        %vm2420 = vweird.f32 %v2414
        %vm2421 = vmor %vm2419, %vm2420
        %v2422 = vsel %vm2421, %v2414, %v2418
        %v2423 = vand.u32 2147483647, %v2233
        %vm2424 = vcmp.eq.f32.partialorder %v2423, 8.507059e+37
        %v2425 = vand.u32 %v2233, 2147483648
        %v2426 = vor.u32 1.1754944e-38, %v2425
        %v2427 = vsel %vm2424, %v2426, %v2422
        %v2428 = vmul.f32 1.0, %v2427
        %v2429 = vrcp.pop %v2234
        %v2430 = vmul.f32 %v2234, %v2429
        %v2431 = vsub.f32 1.0, %v2430
        %v2432 = vmul.f32 %v2429, %v2431
        %v2433 = vadd.f32 %v2429, %v2432
        %vm2434 = vweird.f32 %v2234
        %vm2435 = vweird.f32 %v2429
        %vm2436 = vmor %vm2434, %vm2435
        %v2437 = vsel %vm2436, %v2429, %v2433
        %v2438 = vand.u32 2147483647, %v2234
        %vm2439 = vcmp.eq.f32.partialorder %v2438, 8.507059e+37
        %v2440 = vand.u32 %v2234, 2147483648
        %v2441 = vor.u32 1.1754944e-38, %v2440
        %v2442 = vsel %vm2439, %v2441, %v2437
        %v2443 = vmul.f32 1.0, %v2442
        %v2444 = vrcp.pop %v2235
        %v2445 = vmul.f32 %v2235, %v2444
        %v2446 = vsub.f32 1.0, %v2445
        %v2447 = vmul.f32 %v2444, %v2446
        %v2448 = vadd.f32 %v2444, %v2447
        %vm2449 = vweird.f32 %v2235
        %vm2450 = vweird.f32 %v2444
        %vm2451 = vmor %vm2449, %vm2450
        %v2452 = vsel %vm2451, %v2444, %v2448
        %v2453 = vand.u32 2147483647, %v2235
        %vm2454 = vcmp.eq.f32.partialorder %v2453, 8.507059e+37
        %v2455 = vand.u32 %v2235, 2147483648
        %v2456 = vor.u32 1.1754944e-38, %v2455
        %v2457 = vsel %vm2454, %v2456, %v2452
        %v2458 = vmul.f32 1.0, %v2457
        %v2459 = vrcp.pop %v2236
        %v2460 = vmul.f32 %v2236, %v2459
        %v2461 = vsub.f32 1.0, %v2460
        %v2462 = vmul.f32 %v2459, %v2461
        %v2463 = vadd.f32 %v2459, %v2462
        %vm2464 = vweird.f32 %v2236
        %vm2465 = vweird.f32 %v2459
        %vm2466 = vmor %vm2464, %vm2465
        %v2467 = vsel %vm2466, %v2459, %v2463
        %v2468 = vand.u32 2147483647, %v2236
        %vm2469 = vcmp.eq.f32.partialorder %v2468, 8.507059e+37
        %v2470 = vand.u32 %v2236, 2147483648
        %v2471 = vor.u32 1.1754944e-38, %v2470
        %v2472 = vsel %vm2469, %v2471, %v2467
        %v2473 = vmul.f32 1.0, %v2472
        %v2474 = vrcp.pop %v2237
        %v2475 = vmul.f32 %v2237, %v2474
        %v2476 = vsub.f32 1.0, %v2475
        %v2477 = vmul.f32 %v2474, %v2476
        %v2478 = vadd.f32 %v2474, %v2477
        %vm2479 = vweird.f32 %v2237
        %vm2480 = vweird.f32 %v2474
        %vm2481 = vmor %vm2479, %vm2480
        %v2482 = vsel %vm2481, %v2474, %v2478
        %v2483 = vand.u32 2147483647, %v2237
        %vm2484 = vcmp.eq.f32.partialorder %v2483, 8.507059e+37
        %v2485 = vand.u32 %v2237, 2147483648
        %v2486 = vor.u32 1.1754944e-38, %v2485
        %v2487 = vsel %vm2484, %v2486, %v2482
        %v2488 = vmul.f32 1.0, %v2487
        %v2489 = vrcp.pop %v2238
        %v2490 = vmul.f32 %v2238, %v2489
        %v2491 = vsub.f32 1.0, %v2490
        %v2492 = vmul.f32 %v2489, %v2491
        %v2493 = vadd.f32 %v2489, %v2492
        %vm2494 = vweird.f32 %v2238
        %vm2495 = vweird.f32 %v2489
        %vm2496 = vmor %vm2494, %vm2495
        %v2497 = vsel %vm2496, %v2489, %v2493
        %v2498 = vand.u32 2147483647, %v2238
        %vm2499 = vcmp.eq.f32.partialorder %v2498, 8.507059e+37
        %v2500 = vand.u32 %v2238, 2147483648
        %v2501 = vor.u32 1.1754944e-38, %v2500
        %v2502 = vsel %vm2499, %v2501, %v2497
        %v2503 = vmul.f32 1.0, %v2502
        %v2504 = vrcp.pop %v2239
        %v2505 = vmul.f32 %v2239, %v2504
        %v2506 = vsub.f32 1.0, %v2505
        %v2507 = vmul.f32 %v2504, %v2506
        %v2508 = vadd.f32 %v2504, %v2507
        %vm2509 = vweird.f32 %v2239
        %vm2510 = vweird.f32 %v2504
        %vm2511 = vmor %vm2509, %vm2510
        %v2512 = vsel %vm2511, %v2504, %v2508
        %v2513 = vand.u32 2147483647, %v2239
        %vm2514 = vcmp.eq.f32.partialorder %v2513, 8.507059e+37
        %v2515 = vand.u32 %v2239, 2147483648
        %v2516 = vor.u32 1.1754944e-38, %v2515
        %v2517 = vsel %vm2514, %v2516, %v2512
        %v2518 = vmul.f32 1.0, %v2517
        %v2519 = vrcp.pop %v2240
        %v2520 = vmul.f32 %v2240, %v2519
        %v2521 = vsub.f32 1.0, %v2520
        %v2522 = vmul.f32 %v2519, %v2521
        %v2523 = vadd.f32 %v2519, %v2522
        %vm2524 = vweird.f32 %v2240
        %vm2525 = vweird.f32 %v2519
        %vm2526 = vmor %vm2524, %vm2525
        %v2527 = vsel %vm2526, %v2519, %v2523
        %v2528 = vand.u32 2147483647, %v2240
        %vm2529 = vcmp.eq.f32.partialorder %v2528, 8.507059e+37
        %v2530 = vand.u32 %v2240, 2147483648
        %v2531 = vor.u32 1.1754944e-38, %v2530
        %v2532 = vsel %vm2529, %v2531, %v2527
        %v2533 = vmul.f32 1.0, %v2532
        %v2534 = vrcp.pop %v2241
        %v2535 = vmul.f32 %v2241, %v2534
        %v2536 = vsub.f32 1.0, %v2535
        %v2537 = vmul.f32 %v2534, %v2536
        %v2538 = vadd.f32 %v2534, %v2537
        %vm2539 = vweird.f32 %v2241
        %vm2540 = vweird.f32 %v2534
        %vm2541 = vmor %vm2539, %vm2540
        %v2542 = vsel %vm2541, %v2534, %v2538
        %v2543 = vand.u32 2147483647, %v2241
        %vm2544 = vcmp.eq.f32.partialorder %v2543, 8.507059e+37
        %v2545 = vand.u32 %v2241, 2147483648
        %v2546 = vor.u32 1.1754944e-38, %v2545
        %v2547 = vsel %vm2544, %v2546, %v2542
        %v2548 = vmul.f32 1.0, %v2547
        %v2549 = vrcp.pop %v2242
        %v2550 = vmul.f32 %v2242, %v2549
        %v2551 = vsub.f32 1.0, %v2550
        %v2552 = vmul.f32 %v2549, %v2551
        %v2553 = vadd.f32 %v2549, %v2552
        %vm2554 = vweird.f32 %v2242
        %vm2555 = vweird.f32 %v2549
        %vm2556 = vmor %vm2554, %vm2555
        %v2557 = vsel %vm2556, %v2549, %v2553
        %v2558 = vand.u32 2147483647, %v2242
        %vm2559 = vcmp.eq.f32.partialorder %v2558, 8.507059e+37
        %v2560 = vand.u32 %v2242, 2147483648
        %v2561 = vor.u32 1.1754944e-38, %v2560
        %v2562 = vsel %vm2559, %v2561, %v2557
        %v2563 = vmul.f32 1.0, %v2562
        %v2564 = vrcp.pop %v2243
        %v2565 = vmul.f32 %v2243, %v2564
        %v2566 = vsub.f32 1.0, %v2565
        %v2567 = vmul.f32 %v2564, %v2566
        %v2568 = vadd.f32 %v2564, %v2567
        %vm2569 = vweird.f32 %v2243
        %vm2570 = vweird.f32 %v2564
        %vm2571 = vmor %vm2569, %vm2570
        %v2572 = vsel %vm2571, %v2564, %v2568
        %v2573 = vand.u32 2147483647, %v2243
        %vm2574 = vcmp.eq.f32.partialorder %v2573, 8.507059e+37
        %v2575 = vand.u32 %v2243, 2147483648
        %v2576 = vor.u32 1.1754944e-38, %v2575
        %v2577 = vsel %vm2574, %v2576, %v2572
        %v2578 = vmul.f32 1.0, %v2577
        %v2579 = vrcp.pop %v2244
        %v2580 = vmul.f32 %v2244, %v2579
        %v2581 = vsub.f32 1.0, %v2580
        %v2582 = vmul.f32 %v2579, %v2581
        %v2583 = vadd.f32 %v2579, %v2582
        %vm2584 = vweird.f32 %v2244
        %vm2585 = vweird.f32 %v2579
        %vm2586 = vmor %vm2584, %vm2585
        %v2587 = vsel %vm2586, %v2579, %v2583
        %v2588 = vand.u32 2147483647, %v2244
        %vm2589 = vcmp.eq.f32.partialorder %v2588, 8.507059e+37
        %v2590 = vand.u32 %v2244, 2147483648
        %v2591 = vor.u32 1.1754944e-38, %v2590
        %v2592 = vsel %vm2589, %v2591, %v2587
        %v2593 = vmul.f32 1.0, %v2592
        %v2594 = vrcp.pop %v2245
        %v2595 = vmul.f32 %v2245, %v2594
        %v2596 = vsub.f32 1.0, %v2595
        %v2597 = vmul.f32 %v2594, %v2596
        %v2598 = vadd.f32 %v2594, %v2597
        %vm2599 = vweird.f32 %v2245
        %vm2600 = vweird.f32 %v2594
        %vm2601 = vmor %vm2599, %vm2600
        %v2602 = vsel %vm2601, %v2594, %v2598
        %v2603 = vand.u32 2147483647, %v2245
        %vm2604 = vcmp.eq.f32.partialorder %v2603, 8.507059e+37
        %v2605 = vand.u32 %v2245, 2147483648
        %v2606 = vor.u32 1.1754944e-38, %v2605
        %v2607 = vsel %vm2604, %v2606, %v2602
        %v2608 = vmul.f32 1.0, %v2607
        %v2609 = vrcp.pop %v2246
        %v2610 = vmul.f32 %v2246, %v2609
        %v2611 = vsub.f32 1.0, %v2610
        %v2612 = vmul.f32 %v2609, %v2611
        %v2613 = vadd.f32 %v2609, %v2612
        %vm2614 = vweird.f32 %v2246
        %vm2615 = vweird.f32 %v2609
        %vm2616 = vmor %vm2614, %vm2615
        %v2617 = vsel %vm2616, %v2609, %v2613
        %v2618 = vand.u32 2147483647, %v2246
        %vm2619 = vcmp.eq.f32.partialorder %v2618, 8.507059e+37
        %v2620 = vand.u32 %v2246, 2147483648
        %v2621 = vor.u32 1.1754944e-38, %v2620
        %v2622 = vsel %vm2619, %v2621, %v2617
        %v2623 = vmul.f32 1.0, %v2622
        %v2624 = vrcp.pop %v2247
        %v2625 = vmul.f32 %v2247, %v2624
        %v2626 = vsub.f32 1.0, %v2625
        %v2627 = vmul.f32 %v2624, %v2626
        %v2628 = vadd.f32 %v2624, %v2627
        %vm2629 = vweird.f32 %v2247
        %vm2630 = vweird.f32 %v2624
        %vm2631 = vmor %vm2629, %vm2630
        %v2632 = vsel %vm2631, %v2624, %v2628
        %v2633 = vand.u32 2147483647, %v2247
        %vm2634 = vcmp.eq.f32.partialorder %v2633, 8.507059e+37
        %v2635 = vand.u32 %v2247, 2147483648
        %v2636 = vor.u32 1.1754944e-38, %v2635
        %v2637 = vsel %vm2634, %v2636, %v2632
        %v2638 = vmul.f32 1.0, %v2637
        %v2639 = vrcp.pop %v2248
        %v2640 = vmul.f32 %v2248, %v2639
        %v2641 = vsub.f32 1.0, %v2640
        %v2642 = vmul.f32 %v2639, %v2641
        %v2643 = vadd.f32 %v2639, %v2642
        %vm2644 = vweird.f32 %v2248
        %vm2645 = vweird.f32 %v2639
        %vm2646 = vmor %vm2644, %vm2645
        %v2647 = vsel %vm2646, %v2639, %v2643
        %v2648 = vand.u32 2147483647, %v2248
        %vm2649 = vcmp.eq.f32.partialorder %v2648, 8.507059e+37
        %v2650 = vand.u32 %v2248, 2147483648
        %v2651 = vor.u32 1.1754944e-38, %v2650
        %v2652 = vsel %vm2649, %v2651, %v2647
        %v2653 = vmul.f32 1.0, %v2652
        %v2654 = vmul.f32 %v2114, %v2263
        %v2655 = vmul.f32 %v2115, %v2278
        %v2656 = vmul.f32 %v2116, %v2293
        %v2657 = vmul.f32 %v2117, %v2308
        %v2658 = vmul.f32 %v2118, %v2323
        %v2659 = vmul.f32 %v2119, %v2338
        %v2660 = vmul.f32 %v2120, %v2353
        %v2661 = vmul.f32 %v2121, %v2368
        %v2662 = vmul.f32 %v2122, %v2383
        %v2663 = vmul.f32 %v2123, %v2398
        %v2664 = vmul.f32 %v2124, %v2413
        %v2665 = vmul.f32 %v2125, %v2428
        %v2666 = vmul.f32 %v2126, %v2443
        %v2667 = vmul.f32 %v2127, %v2458
        %v2668 = vmul.f32 %v2128, %v2473
        %v2669 = vmul.f32 %v2129, %v2488
        %v2670 = vmul.f32 %v2130, %v2503
        %v2671 = vmul.f32 %v2131, %v2518
        %v2672 = vmul.f32 %v2132, %v2533
        %v2673 = vmul.f32 %v2133, %v2548
        %v2674 = vmul.f32 %v2134, %v2563
        %v2675 = vmul.f32 %v2135, %v2578
        %v2676 = vmul.f32 %v2136, %v2593
        %v2677 = vmul.f32 %v2137, %v2608
        %v2678 = vmul.f32 %v2138, %v2623
        %v2679 = vmul.f32 %v2139, %v2638
        %v2680 = vmul.f32 %v2140, %v2653
        %v2681 = vld [vmem:[%s5] sm:$0xff]
        %v2682 = vld [vmem:[%s5 + $0x8] sm:$0xff]
        %v2683 = vld [vmem:[%s5 + $0x10] sm:$0xff]
        %v2684 = vld [vmem:[%s5 + $0x18] sm:$0xff]
        %v2685 = vld [vmem:[%s5 + $0x20] sm:$0xff]
        %v2686 = vld [vmem:[%s5 + $0x28] sm:$0xff]
        %v2687 = vld [vmem:[%s5 + $0x30] sm:$0xff]
        %v2688 = vld [vmem:[%s5 + $0x38] sm:$0xff]
        %v2689 = vld [vmem:[%s5 + $0x40] sm:$0xff]
        %v2690 = vld [vmem:[%s5 + $0x48] sm:$0xff]
        %v2691 = vld [vmem:[%s5 + $0x50] sm:$0xff]
        %v2692 = vld [vmem:[%s5 + $0x58] sm:$0xff]
        %v2693 = vld [vmem:[%s5 + $0x60] sm:$0xff]
        %v2694 = vld [vmem:[%s5 + $0x68] sm:$0xff]
        %v2695 = vld [vmem:[%s5 + $0x70] sm:$0xff]
        %v2696 = vld [vmem:[%s5 + $0x78] sm:$0xff]
        %v2697 = vld [vmem:[%s5 + $0x80] sm:$0xff]
        %v2698 = vld [vmem:[%s5 + $0x88] sm:$0xff]
        %v2699 = vld [vmem:[%s5 + $0x90] sm:$0xff]
        %v2700 = vld [vmem:[%s5 + $0x98] sm:$0xff]
        %v2701 = vld [vmem:[%s5 + $0xa0] sm:$0xff]
        %v2702 = vld [vmem:[%s5 + $0xa8] sm:$0xff]
        %v2703 = vld [vmem:[%s5 + $0xb0] sm:$0xff]
        %v2704 = vld [vmem:[%s5 + $0xb8] sm:$0xff]
        %v2705 = vld [vmem:[%s5 + $0xc0] sm:$0xff]
        %v2706 = vld [vmem:[%s5 + $0xc8] sm:$0xff]
        %v2707 = vld [vmem:[%s5 + $0xd0] sm:$0xff]
        %v2708 = vld [vmem:[%s5 + $0xd8] sm:$0xff]
        %v2709 = vld [vmem:[%s5 + $0xe0] sm:$0xff]
        %v2710 = vld [vmem:[%s5 + $0xe8] sm:$0xff]
        %v2711 = vld [vmem:[%s5 + $0xf0] sm:$0xff]
        %v2712 = vld [vmem:[%s5 + $0xf8] sm:$0xff]
        %v2713 = vld [vmem:[%s5 + $0x100] sm:$0xff]
        %v2714 = vld [vmem:[%s5 + $0x108] sm:$0xff]
        %v2715 = vld [vmem:[%s5 + $0x110] sm:$0xff]
        %v2716 = vld [vmem:[%s5 + $0x118] sm:$0xff]
        %v2717 = vld [vmem:[%s5 + $0x120] sm:$0xff]
        %v2718 = vld [vmem:[%s5 + $0x128] sm:$0xff]
        %v2719 = vld [vmem:[%s5 + $0x130] sm:$0xff]
        %v2720 = vld [vmem:[%s5 + $0x138] sm:$0xff]
        %v2721 = vld [vmem:[%s5 + $0x140] sm:$0xff]
        %v2722 = vld [vmem:[%s5 + $0x148] sm:$0xff]
        %v2723 = vld [vmem:[%s5 + $0x150] sm:$0xff]
        %v2724 = vld [vmem:[%s5 + $0x158] sm:$0xff]
        %v2725 = vld [vmem:[%s5 + $0x160] sm:$0xff]
        %v2726 = vld [vmem:[%s5 + $0x168] sm:$0xff]
        %v2727 = vld [vmem:[%s5 + $0x170] sm:$0xff]
        %v2728 = vld [vmem:[%s5 + $0x178] sm:$0xff]
        %v2729 = vld [vmem:[%s5 + $0x180] sm:$0xff]
        %v2730 = vld [vmem:[%s5 + $0x188] sm:$0xff]
        %v2731 = vld [vmem:[%s5 + $0x190] sm:$0xff]
        %v2732 = vld [vmem:[%s5 + $0x198] sm:$0xff]
        %v2733 = vld [vmem:[%s5 + $0x1a0] sm:$0xff]
        %v2734 = vld [vmem:[%s5 + $0x1a8] sm:$0xff]
        %v2735 = vld [vmem:[%s5 + $0x1b0] sm:$0xff]
        %v2736 = vld [vmem:[%s5 + $0x1b8] sm:$0xff]
        %v2737 = vld [vmem:[%s5 + $0x1c0] sm:$0xff]
        %v2738 = vld [vmem:[%s5 + $0x1c8] sm:$0xff]
        %v2739 = vld [vmem:[%s5 + $0x1d0] sm:$0xff]
        %v2740 = vld [vmem:[%s5 + $0x1d8] sm:$0xff]
        %v2741 = vld [vmem:[%s5 + $0x1e0] sm:$0xff]
        %v2742 = vld [vmem:[%s5 + $0x1e8] sm:$0xff]
        %v2743 = vld [vmem:[%s5 + $0x1f0] sm:$0xff]
        %v2744 = vld [vmem:[%s5 + $0x1f8] sm:$0xff]
        %v2745 = vld [vmem:[%s5 + $0x200] sm:$0xff]
        %v2746 = vld [vmem:[%s5 + $0x208] sm:$0xff]
        %v2747 = vld [vmem:[%s5 + $0x210] sm:$0xff]
        %v2748 = vld [vmem:[%s5 + $0x218] sm:$0xff]
        %v2749 = vld [vmem:[%s5 + $0x220] sm:$0xff]
        %v2750 = vld [vmem:[%s5 + $0x228] sm:$0xff]
        %v2751 = vld [vmem:[%s5 + $0x230] sm:$0xff]
        %v2752 = vld [vmem:[%s5 + $0x238] sm:$0xff]
        %v2753 = vld [vmem:[%s5 + $0x240] sm:$0xff]
        %v2754 = vld [vmem:[%s5 + $0x248] sm:$0xff]
        %v2755 = vld [vmem:[%s5 + $0x250] sm:$0xff]
        %v2756 = vld [vmem:[%s5 + $0x258] sm:$0xff]
        %v2757 = vld [vmem:[%s5 + $0x260] sm:$0xff]
        %v2758 = vld [vmem:[%s5 + $0x268] sm:$0xff]
        %v2759 = vld [vmem:[%s5 + $0x270] sm:$0xff]
        %v2760 = vld [vmem:[%s5 + $0x278] sm:$0xff]
        %v2761 = vld [vmem:[%s5 + $0x280] sm:$0xff]
        %v2762 = vld [vmem:[%s5 + $0x288] sm:$0xff]
        %v2763 = vld [vmem:[%s5 + $0x290] sm:$0xff]
        %v2764 = vld [vmem:[%s5 + $0x298] sm:$0xff]
        %v2765 = vld [vmem:[%s5 + $0x2a0] sm:$0xff]
        %v2766 = vld [vmem:[%s5 + $0x2a8] sm:$0xff]
        %v2767 = vld [vmem:[%s5 + $0x2b0] sm:$0xff]
        %v2768 = vld [vmem:[%s5 + $0x2b8] sm:$0xff]
        %v2769 = vld [vmem:[%s5 + $0x2c0] sm:$0xff]
        %v2770 = vld [vmem:[%s5 + $0x2c8] sm:$0xff]
        %v2771 = vld [vmem:[%s5 + $0x2d0] sm:$0xff]
        %v2772 = vld [vmem:[%s5 + $0x2d8] sm:$0xff]
        %v2773 = vld [vmem:[%s5 + $0x2e0] sm:$0xff]
        %v2774 = vld [vmem:[%s5 + $0x2e8] sm:$0xff]
        %v2775 = vld [vmem:[%s5 + $0x2f0] sm:$0xff]
        %v2776 = vld [vmem:[%s5 + $0x2f8] sm:$0xff]
        %v2777 = vld [vmem:[%s5 + $0x300] sm:$0xff]
        %v2778 = vld [vmem:[%s5 + $0x308] sm:$0xff]
        %v2779 = vld [vmem:[%s5 + $0x310] sm:$0xff]
        %v2780 = vld [vmem:[%s5 + $0x318] sm:$0xff]
        %v2781 = vld [vmem:[%s5 + $0x320] sm:$0xff]
        %v2782 = vld [vmem:[%s5 + $0x328] sm:$0xff]
        %v2783 = vld [vmem:[%s5 + $0x330] sm:$0xff]
        %v2784 = vld [vmem:[%s5 + $0x338] sm:$0xff]
        %v2785 = vld [vmem:[%s5 + $0x340] sm:$0xff]
        %v2786 = vld [vmem:[%s5 + $0x348] sm:$0xff]
        %v2787 = vld [vmem:[%s5 + $0x350] sm:$0xff]
        %v2788 = vld [vmem:[%s5 + $0x358] sm:$0xff]
        %v2789 = vld [vmem:[%s6] sm:$0xff]
        %v2790 = vld [vmem:[%s6 + $0x8] sm:$0xff]
        %v2791 = vld [vmem:[%s6 + $0x10] sm:$0xff]
        %v2792 = vld [vmem:[%s6 + $0x18] sm:$0xff]
        %v2793 = vld [vmem:[%s6 + $0x20] sm:$0xff]
        %v2794 = vld [vmem:[%s6 + $0x28] sm:$0xff]
        %v2795 = vld [vmem:[%s6 + $0x30] sm:$0xff]
        %v2796 = vld [vmem:[%s6 + $0x38] sm:$0xff]
        %v2797 = vld [vmem:[%s6 + $0x40] sm:$0xff]
        %v2798 = vld [vmem:[%s6 + $0x48] sm:$0xff]
        %v2799 = vld [vmem:[%s6 + $0x50] sm:$0xff]
        %v2800 = vld [vmem:[%s6 + $0x58] sm:$0xff]
        %v2801 = vld [vmem:[%s6 + $0x60] sm:$0xff]
        %v2802 = vld [vmem:[%s6 + $0x68] sm:$0xff]
        %v2803 = vld [vmem:[%s6 + $0x70] sm:$0xff]
        %v2804 = vld [vmem:[%s6 + $0x78] sm:$0xff]
        %v2805 = vld [vmem:[%s6 + $0x80] sm:$0xff]
        %v2806 = vld [vmem:[%s6 + $0x88] sm:$0xff]
        %v2807 = vld [vmem:[%s6 + $0x90] sm:$0xff]
        %v2808 = vld [vmem:[%s6 + $0x98] sm:$0xff]
        %v2809 = vld [vmem:[%s6 + $0xa0] sm:$0xff]
        %v2810 = vld [vmem:[%s6 + $0xa8] sm:$0xff]
        %v2811 = vld [vmem:[%s6 + $0xb0] sm:$0xff]
        %v2812 = vld [vmem:[%s6 + $0xb8] sm:$0xff]
        %v2813 = vld [vmem:[%s6 + $0xc0] sm:$0xff]
        %v2814 = vld [vmem:[%s6 + $0xc8] sm:$0xff]
        %v2815 = vld [vmem:[%s6 + $0xd0] sm:$0xff]
        %v2816 = vld [vmem:[%s6 + $0xd8] sm:$0xff]
        %v2817 = vld [vmem:[%s6 + $0xe0] sm:$0xff]
        %v2818 = vld [vmem:[%s6 + $0xe8] sm:$0xff]
        %v2819 = vld [vmem:[%s6 + $0xf0] sm:$0xff]
        %v2820 = vld [vmem:[%s6 + $0xf8] sm:$0xff]
        %v2821 = vld [vmem:[%s6 + $0x100] sm:$0xff]
        %v2822 = vld [vmem:[%s6 + $0x108] sm:$0xff]
        %v2823 = vld [vmem:[%s6 + $0x110] sm:$0xff]
        %v2824 = vld [vmem:[%s6 + $0x118] sm:$0xff]
        %vm2852 = vcmask 1042432
        %v2853 = vrot.slane %v2654, 5
        %v2854 = vrot.slane %v2657, 5
        %v2855 = vsel %vm2852, %v2853, %v2854
        %v2856 = vrot.slane %v2655, 5
        %v2857 = vrot.slane %v2658, 5
        %v2858 = vsel %vm2852, %v2856, %v2857
        %v2859 = vrot.slane %v2656, 5
        %v2860 = vrot.slane %v2659, 5
        %v2861 = vsel %vm2852, %v2859, %v2860
        %v2862 = vrot.slane %v2660, 5
        %v2863 = vsel %vm2852, %v2854, %v2862
        %v2864 = vrot.slane %v2661, 5
        %v2865 = vsel %vm2852, %v2857, %v2864
        %v2866 = vrot.slane %v2662, 5
        %v2867 = vsel %vm2852, %v2860, %v2866
        %v2868 = vrot.slane %v2663, 5
        %v2869 = vsel %vm2852, %v2862, %v2868
        %v2870 = vrot.slane %v2664, 5
        %v2871 = vsel %vm2852, %v2864, %v2870
        %v2872 = vrot.slane %v2665, 5
        %v2873 = vsel %vm2852, %v2866, %v2872
        %v2874 = vrot.slane %v2666, 5
        %v2875 = vsel %vm2852, %v2868, %v2874
        %v2876 = vrot.slane %v2667, 5
        %v2877 = vsel %vm2852, %v2870, %v2876
        %v2878 = vrot.slane %v2668, 5
        %v2879 = vsel %vm2852, %v2872, %v2878
        %v2880 = vrot.slane %v2669, 5
        %v2881 = vsel %vm2852, %v2874, %v2880
        %v2882 = vrot.slane %v2670, 5
        %v2883 = vsel %vm2852, %v2876, %v2882
        %v2884 = vrot.slane %v2671, 5
        %v2885 = vsel %vm2852, %v2878, %v2884
        %v2886 = vrot.slane %v2672, 5
        %v2887 = vsel %vm2852, %v2880, %v2886
        %v2888 = vrot.slane %v2673, 5
        %v2889 = vsel %vm2852, %v2882, %v2888
        %v2890 = vrot.slane %v2674, 5
        %v2891 = vsel %vm2852, %v2884, %v2890
        %v2892 = vrot.slane %v2675, 5
        %v2893 = vsel %vm2852, %v2886, %v2892
        %v2894 = vrot.slane %v2676, 5
        %v2895 = vsel %vm2852, %v2888, %v2894
        %v2896 = vrot.slane %v2677, 5
        %v2897 = vsel %vm2852, %v2890, %v2896
        %v2898 = vrot.slane %v2678, 5
        %v2899 = vsel %vm2852, %v2892, %v2898
        %v2900 = vrot.slane %v2679, 5
        %v2901 = vsel %vm2852, %v2894, %v2900
        %v2902 = vrot.slane %v2680, 5
        %v2903 = vsel %vm2852, %v2896, %v2902
        %v2920 = vsel %vm1508, %v2861, 0
        %v2922 = vsel %vm1508, %v2867, 0
        %v2924 = vsel %vm1508, %v2873, 0
        %v2926 = vsel %vm1508, %v2879, 0
        %v2928 = vsel %vm1508, %v2885, 0
        %v2930 = vsel %vm1508, %v2891, 0
        %v2932 = vsel %vm1508, %v2897, 0
        %v2934 = vsel %vm1508, %v2903, 0
        %2936 = vmatpush.msra.mxu0 %v2804
        %2937 = vmatpush.msra.mxu0 %v2803
        %2938 = vmatpush.msra.mxu0 %v2802
        %2939 = vmatpush.msra.mxu0 %v2801
        %2940 = vmatpush.msra.mxu0 %v2800
        %2941 = vmatpush.msra.mxu0 %v2799
        %2942 = vmatpush.msra.mxu0 %v2798
        %2943 = vmatpush.msra.mxu0 %v2797
        %2944 = vmatpush.msra.mxu0 %v2796
        %2945 = vmatpush.msra.mxu0 %v2795
        %2946 = vmatpush.msra.mxu0 %v2794
        %2947 = vmatpush.msra.mxu0 %v2793
        %2948 = vmatpush.msra.mxu0 %v2792
        %2949 = vmatpush.msra.mxu0 %v2791
        %2950 = vmatpush.msra.mxu0 %v2790
        %2951 = vmatpush.msra.mxu0 %v2789
        %2952 = vmatmul.f32.gmra.mxu0 %v2855
        %v2953 = vpop.f32.mrf.mxu0
        %v2954 = vadd.f32 0.0, %v2953
        %2955 = vmatmul.f32.gmra.mxu0 %v2863
        %v2956 = vpop.f32.mrf.mxu0
        %v2957 = vadd.f32 0.0, %v2956
        %2958 = vmatmul.f32.gmra.mxu0 %v2869
        %v2959 = vpop.f32.mrf.mxu0
        %v2960 = vadd.f32 0.0, %v2959
        %2961 = vmatmul.f32.gmra.mxu0 %v2875
        %v2962 = vpop.f32.mrf.mxu0
        %v2963 = vadd.f32 0.0, %v2962
        %2964 = vmatmul.f32.gmra.mxu0 %v2881
        %v2965 = vpop.f32.mrf.mxu0
        %v2966 = vadd.f32 0.0, %v2965
        %2967 = vmatmul.f32.gmra.mxu0 %v2887
        %v2968 = vpop.f32.mrf.mxu0
        %v2969 = vadd.f32 0.0, %v2968
        %2970 = vmatmul.f32.gmra.mxu0 %v2893
        %v2971 = vpop.f32.mrf.mxu0
        %v2972 = vadd.f32 0.0, %v2971
        %2973 = vmatmul.f32.gmra.mxu0 %v2899
        %v2974 = vpop.f32.mrf.mxu0
        %v2975 = vadd.f32 0.0, %v2974
        %2976 = vdwg.mxu0
        %2977 = vmatpush.msra.mxu0 %v2820
        %2978 = vmatpush.msra.mxu0 %v2819
        %2979 = vmatpush.msra.mxu0 %v2818
        %2980 = vmatpush.msra.mxu0 %v2817
        %2981 = vmatpush.msra.mxu0 %v2816
        %2982 = vmatpush.msra.mxu0 %v2815
        %2983 = vmatpush.msra.mxu0 %v2814
        %2984 = vmatpush.msra.mxu0 %v2813
        %2985 = vmatpush.msra.mxu0 %v2812
        %2986 = vmatpush.msra.mxu0 %v2811
        %2987 = vmatpush.msra.mxu0 %v2810
        %2988 = vmatpush.msra.mxu0 %v2809
        %2989 = vmatpush.msra.mxu0 %v2808
        %2990 = vmatpush.msra.mxu0 %v2807
        %2991 = vmatpush.msra.mxu0 %v2806
        %2992 = vmatpush.msra.mxu0 %v2805
        %2993 = vmatmul.f32.gmra.mxu0 %v2858
        %v2994 = vpop.f32.mrf.mxu0
        %v2995 = vadd.f32 %v2954, %v2994
        %2996 = vmatmul.f32.gmra.mxu0 %v2865
        %v2997 = vpop.f32.mrf.mxu0
        %v2998 = vadd.f32 %v2957, %v2997
        %2999 = vmatmul.f32.gmra.mxu0 %v2871
        %v3000 = vpop.f32.mrf.mxu0
        %v3001 = vadd.f32 %v2960, %v3000
        %3002 = vmatmul.f32.gmra.mxu0 %v2877
        %v3003 = vpop.f32.mrf.mxu0
        %v3004 = vadd.f32 %v2963, %v3003
        %3005 = vmatmul.f32.gmra.mxu0 %v2883
        %v3006 = vpop.f32.mrf.mxu0
        %v3007 = vadd.f32 %v2966, %v3006
        %3008 = vmatmul.f32.gmra.mxu0 %v2889
        %v3009 = vpop.f32.mrf.mxu0
        %v3010 = vadd.f32 %v2969, %v3009
        %3011 = vmatmul.f32.gmra.mxu0 %v2895
        %v3012 = vpop.f32.mrf.mxu0
        %v3013 = vadd.f32 %v2972, %v3012
        %3014 = vmatmul.f32.gmra.mxu0 %v2901
        %v3015 = vpop.f32.mrf.mxu0
        %v3016 = vadd.f32 %v2975, %v3015
        %3017 = vdwg.mxu0
        %3018 = vmatpush.msra.mxu0 0.0
        %3019 = vmatpush.msra.mxu0 0.0
        %3020 = vmatpush.msra.mxu0 0.0
        %3021 = vmatpush.msra.mxu0 0.0
        %3022 = vmatpush.msra.mxu0 0.0
        %3023 = vmatpush.msra.mxu0 0.0
        %3024 = vmatpush.msra.mxu0 0.0
        %3025 = vmatpush.msra.mxu0 0.0
        %3026 = vmatpush.msra.mxu0 0.0
        %3027 = vmatpush.msra.mxu0 0.0
        %3028 = vmatpush.msra.mxu0 0.0
        %3029 = vmatpush.msra.mxu0 0.0
        %3030 = vmatpush.msra.mxu0 %v2824
        %3031 = vmatpush.msra.mxu0 %v2823
        %3032 = vmatpush.msra.mxu0 %v2822
        %3033 = vmatpush.msra.mxu0 %v2821
        %3034 = vmatmul.f32.gmra.mxu0 %v2920
        %v3035 = vpop.f32.mrf.mxu0
        %v3036 = vadd.f32 %v2995, %v3035
        %3037 = vmatmul.f32.gmra.mxu0 %v2922
        %v3038 = vpop.f32.mrf.mxu0
        %v3039 = vadd.f32 %v2998, %v3038
        %3040 = vmatmul.f32.gmra.mxu0 %v2924
        %v3041 = vpop.f32.mrf.mxu0
        %v3042 = vadd.f32 %v3001, %v3041
        %3043 = vmatmul.f32.gmra.mxu0 %v2926
        %v3044 = vpop.f32.mrf.mxu0
        %v3045 = vadd.f32 %v3004, %v3044
        %3046 = vmatmul.f32.gmra.mxu0 %v2928
        %v3047 = vpop.f32.mrf.mxu0
        %v3048 = vadd.f32 %v3007, %v3047
        %3049 = vmatmul.f32.gmra.mxu0 %v2930
        %v3050 = vpop.f32.mrf.mxu0
        %v3051 = vadd.f32 %v3010, %v3050
        %3052 = vmatmul.f32.gmra.mxu0 %v2932
        %v3053 = vpop.f32.mrf.mxu0
        %v3054 = vadd.f32 %v3013, %v3053
        %3055 = vmatmul.f32.gmra.mxu0 %v2934
        %v3056 = vpop.f32.mrf.mxu0
        %v3057 = vadd.f32 %v3016, %v3056
        %3058 = vdwg.mxu0
        %v3059 = vld [vmem:[%s7] sm:$0x7]
        %v3061 = vperm.slane %v3059, 0
        %v3062 = vperm.slane %v3059, 1
        %v3063 = vperm.slane %v3059, 2
        %3067 = vmatpush.msra.mxu0 %v2726
        %3068 = vmatpush.msra.mxu0 %v2723
        %3069 = vmatpush.msra.mxu0 %v2720
        %3070 = vmatpush.msra.mxu0 %v2717
        %3071 = vmatpush.msra.mxu0 %v2714
        %3072 = vmatpush.msra.mxu0 %v2711
        %3073 = vmatpush.msra.mxu0 %v2708
        %3074 = vmatpush.msra.mxu0 %v2705
        %3075 = vmatpush.msra.mxu0 %v2702
        %3076 = vmatpush.msra.mxu0 %v2699
        %3077 = vmatpush.msra.mxu0 %v2696
        %3078 = vmatpush.msra.mxu0 %v2693
        %3079 = vmatpush.msra.mxu0 %v2690
        %3080 = vmatpush.msra.mxu0 %v2687
        %3081 = vmatpush.msra.mxu0 %v2684
        %3082 = vmatpush.msra.mxu0 %v2681
        %3083 = vmatmul.f32.gmra.mxu0 %v2855
        %v3084 = vpop.f32.mrf.mxu0
        %v3085 = vadd.f32 %v3061, %v3084
        %3086 = vmatmul.f32.gmra.mxu0 %v2863
        %v3087 = vpop.f32.mrf.mxu0
        %v3088 = vadd.f32 %v3061, %v3087
        %3089 = vmatmul.f32.gmra.mxu0 %v2869
        %v3090 = vpop.f32.mrf.mxu0
        %v3091 = vadd.f32 %v3061, %v3090
        %3092 = vmatmul.f32.gmra.mxu0 %v2875
        %v3093 = vpop.f32.mrf.mxu0
        %v3094 = vadd.f32 %v3061, %v3093
        %3095 = vmatmul.f32.gmra.mxu0 %v2881
        %v3096 = vpop.f32.mrf.mxu0
        %v3097 = vadd.f32 %v3061, %v3096
        %3098 = vmatmul.f32.gmra.mxu0 %v2887
        %v3099 = vpop.f32.mrf.mxu0
        %v3100 = vadd.f32 %v3061, %v3099
        %3101 = vmatmul.f32.gmra.mxu0 %v2893
        %v3102 = vpop.f32.mrf.mxu0
        %v3103 = vadd.f32 %v3061, %v3102
        %3104 = vmatmul.f32.gmra.mxu0 %v2899
        %v3105 = vpop.f32.mrf.mxu0
        %v3106 = vadd.f32 %v3061, %v3105
        %3107 = vdwg.mxu0
        %3108 = vmatpush.msra.mxu0 %v2774
        %3109 = vmatpush.msra.mxu0 %v2771
        %3110 = vmatpush.msra.mxu0 %v2768
        %3111 = vmatpush.msra.mxu0 %v2765
        %3112 = vmatpush.msra.mxu0 %v2762
        %3113 = vmatpush.msra.mxu0 %v2759
        %3114 = vmatpush.msra.mxu0 %v2756
        %3115 = vmatpush.msra.mxu0 %v2753
        %3116 = vmatpush.msra.mxu0 %v2750
        %3117 = vmatpush.msra.mxu0 %v2747
        %3118 = vmatpush.msra.mxu0 %v2744
        %3119 = vmatpush.msra.mxu0 %v2741
        %3120 = vmatpush.msra.mxu0 %v2738
        %3121 = vmatpush.msra.mxu0 %v2735
        %3122 = vmatpush.msra.mxu0 %v2732
        %3123 = vmatpush.msra.mxu0 %v2729
        %3124 = vmatmul.f32.gmra.mxu0 %v2858
        %v3125 = vpop.f32.mrf.mxu0
        %v3126 = vadd.f32 %v3085, %v3125
        %3127 = vmatmul.f32.gmra.mxu0 %v2865
        %v3128 = vpop.f32.mrf.mxu0
        %v3129 = vadd.f32 %v3088, %v3128
        %3130 = vmatmul.f32.gmra.mxu0 %v2871
        %v3131 = vpop.f32.mrf.mxu0
        %v3132 = vadd.f32 %v3091, %v3131
        %3133 = vmatmul.f32.gmra.mxu0 %v2877
        %v3134 = vpop.f32.mrf.mxu0
        %v3135 = vadd.f32 %v3094, %v3134
        %3136 = vmatmul.f32.gmra.mxu0 %v2883
        %v3137 = vpop.f32.mrf.mxu0
        %v3138 = vadd.f32 %v3097, %v3137
        %3139 = vmatmul.f32.gmra.mxu0 %v2889
        %v3140 = vpop.f32.mrf.mxu0
        %v3141 = vadd.f32 %v3100, %v3140
        %3142 = vmatmul.f32.gmra.mxu0 %v2895
        %v3143 = vpop.f32.mrf.mxu0
        %v3144 = vadd.f32 %v3103, %v3143
        %3145 = vmatmul.f32.gmra.mxu0 %v2901
        %v3146 = vpop.f32.mrf.mxu0
        %v3147 = vadd.f32 %v3106, %v3146
        %3148 = vdwg.mxu0
        %3149 = vmatpush.msra.mxu0 0.0
        %3150 = vmatpush.msra.mxu0 0.0
        %3151 = vmatpush.msra.mxu0 0.0
        %3152 = vmatpush.msra.mxu0 0.0
        %3153 = vmatpush.msra.mxu0 0.0
        %3154 = vmatpush.msra.mxu0 0.0
        %3155 = vmatpush.msra.mxu0 0.0
        %3156 = vmatpush.msra.mxu0 0.0
        %3157 = vmatpush.msra.mxu0 0.0
        %3158 = vmatpush.msra.mxu0 0.0
        %3159 = vmatpush.msra.mxu0 0.0
        %3160 = vmatpush.msra.mxu0 0.0
        %3161 = vmatpush.msra.mxu0 %v2786
        %3162 = vmatpush.msra.mxu0 %v2783
        %3163 = vmatpush.msra.mxu0 %v2780
        %3164 = vmatpush.msra.mxu0 %v2777
        %3165 = vmatmul.f32.gmra.mxu0 %v2920
        %v3166 = vpop.f32.mrf.mxu0
        %v3167 = vadd.f32 %v3126, %v3166
        %3168 = vmatmul.f32.gmra.mxu0 %v2922
        %v3169 = vpop.f32.mrf.mxu0
        %v3170 = vadd.f32 %v3129, %v3169
        %3171 = vmatmul.f32.gmra.mxu0 %v2924
        %v3172 = vpop.f32.mrf.mxu0
        %v3173 = vadd.f32 %v3132, %v3172
        %3174 = vmatmul.f32.gmra.mxu0 %v2926
        %v3175 = vpop.f32.mrf.mxu0
        %v3176 = vadd.f32 %v3135, %v3175
        %3177 = vmatmul.f32.gmra.mxu0 %v2928
        %v3178 = vpop.f32.mrf.mxu0
        %v3179 = vadd.f32 %v3138, %v3178
        %3180 = vmatmul.f32.gmra.mxu0 %v2930
        %v3181 = vpop.f32.mrf.mxu0
        %v3182 = vadd.f32 %v3141, %v3181
        %3183 = vmatmul.f32.gmra.mxu0 %v2932
        %v3184 = vpop.f32.mrf.mxu0
        %v3185 = vadd.f32 %v3144, %v3184
        %3186 = vmatmul.f32.gmra.mxu0 %v2934
        %v3187 = vpop.f32.mrf.mxu0
        %v3188 = vadd.f32 %v3147, %v3187
        %3189 = vdwg.mxu0
        %3190 = vmatpush.msra.mxu0 %v2727
        %3191 = vmatpush.msra.mxu0 %v2724
        %3192 = vmatpush.msra.mxu0 %v2721
        %3193 = vmatpush.msra.mxu0 %v2718
        %3194 = vmatpush.msra.mxu0 %v2715
        %3195 = vmatpush.msra.mxu0 %v2712
        %3196 = vmatpush.msra.mxu0 %v2709
        %3197 = vmatpush.msra.mxu0 %v2706
        %3198 = vmatpush.msra.mxu0 %v2703
        %3199 = vmatpush.msra.mxu0 %v2700
        %3200 = vmatpush.msra.mxu0 %v2697
        %3201 = vmatpush.msra.mxu0 %v2694
        %3202 = vmatpush.msra.mxu0 %v2691
        %3203 = vmatpush.msra.mxu0 %v2688
        %3204 = vmatpush.msra.mxu0 %v2685
        %3205 = vmatpush.msra.mxu0 %v2682
        %3206 = vmatmul.f32.gmra.mxu0 %v2855
        %v3207 = vpop.f32.mrf.mxu0
        %v3208 = vadd.f32 %v3062, %v3207
        %3209 = vmatmul.f32.gmra.mxu0 %v2863
        %v3210 = vpop.f32.mrf.mxu0
        %v3211 = vadd.f32 %v3062, %v3210
        %3212 = vmatmul.f32.gmra.mxu0 %v2869
        %v3213 = vpop.f32.mrf.mxu0
        %v3214 = vadd.f32 %v3062, %v3213
        %3215 = vmatmul.f32.gmra.mxu0 %v2875
        %v3216 = vpop.f32.mrf.mxu0
        %v3217 = vadd.f32 %v3062, %v3216
        %3218 = vmatmul.f32.gmra.mxu0 %v2881
        %v3219 = vpop.f32.mrf.mxu0
        %v3220 = vadd.f32 %v3062, %v3219
        %3221 = vmatmul.f32.gmra.mxu0 %v2887
        %v3222 = vpop.f32.mrf.mxu0
        %v3223 = vadd.f32 %v3062, %v3222
        %3224 = vmatmul.f32.gmra.mxu0 %v2893
        %v3225 = vpop.f32.mrf.mxu0
        %v3226 = vadd.f32 %v3062, %v3225
        %3227 = vmatmul.f32.gmra.mxu0 %v2899
        %v3228 = vpop.f32.mrf.mxu0
        %v3229 = vadd.f32 %v3062, %v3228
        %3230 = vdwg.mxu0
        %3231 = vmatpush.msra.mxu0 %v2775
        %3232 = vmatpush.msra.mxu0 %v2772
        %3233 = vmatpush.msra.mxu0 %v2769
        %3234 = vmatpush.msra.mxu0 %v2766
        %3235 = vmatpush.msra.mxu0 %v2763
        %3236 = vmatpush.msra.mxu0 %v2760
        %3237 = vmatpush.msra.mxu0 %v2757
        %3238 = vmatpush.msra.mxu0 %v2754
        %3239 = vmatpush.msra.mxu0 %v2751
        %3240 = vmatpush.msra.mxu0 %v2748
        %3241 = vmatpush.msra.mxu0 %v2745
        %3242 = vmatpush.msra.mxu0 %v2742
        %3243 = vmatpush.msra.mxu0 %v2739
        %3244 = vmatpush.msra.mxu0 %v2736
        %3245 = vmatpush.msra.mxu0 %v2733
        %3246 = vmatpush.msra.mxu0 %v2730
        %3247 = vmatmul.f32.gmra.mxu0 %v2858
        %v3248 = vpop.f32.mrf.mxu0
        %v3249 = vadd.f32 %v3208, %v3248
        %3250 = vmatmul.f32.gmra.mxu0 %v2865
        %v3251 = vpop.f32.mrf.mxu0
        %v3252 = vadd.f32 %v3211, %v3251
        %3253 = vmatmul.f32.gmra.mxu0 %v2871
        %v3254 = vpop.f32.mrf.mxu0
        %v3255 = vadd.f32 %v3214, %v3254
        %3256 = vmatmul.f32.gmra.mxu0 %v2877
        %v3257 = vpop.f32.mrf.mxu0
        %v3258 = vadd.f32 %v3217, %v3257
        %3259 = vmatmul.f32.gmra.mxu0 %v2883
        %v3260 = vpop.f32.mrf.mxu0
        %v3261 = vadd.f32 %v3220, %v3260
        %3262 = vmatmul.f32.gmra.mxu0 %v2889
        %v3263 = vpop.f32.mrf.mxu0
        %v3264 = vadd.f32 %v3223, %v3263
        %3265 = vmatmul.f32.gmra.mxu0 %v2895
        %v3266 = vpop.f32.mrf.mxu0
        %v3267 = vadd.f32 %v3226, %v3266
        %3268 = vmatmul.f32.gmra.mxu0 %v2901
        %v3269 = vpop.f32.mrf.mxu0
        %v3270 = vadd.f32 %v3229, %v3269
        %3271 = vdwg.mxu0
        %3272 = vmatpush.msra.mxu0 0.0
        %3273 = vmatpush.msra.mxu0 0.0
        %3274 = vmatpush.msra.mxu0 0.0
        %3275 = vmatpush.msra.mxu0 0.0
        %3276 = vmatpush.msra.mxu0 0.0
        %3277 = vmatpush.msra.mxu0 0.0
        %3278 = vmatpush.msra.mxu0 0.0
        %3279 = vmatpush.msra.mxu0 0.0
        %3280 = vmatpush.msra.mxu0 0.0
        %3281 = vmatpush.msra.mxu0 0.0
        %3282 = vmatpush.msra.mxu0 0.0
        %3283 = vmatpush.msra.mxu0 0.0
        %3284 = vmatpush.msra.mxu0 %v2787
        %3285 = vmatpush.msra.mxu0 %v2784
        %3286 = vmatpush.msra.mxu0 %v2781
        %3287 = vmatpush.msra.mxu0 %v2778
        %3288 = vmatmul.f32.gmra.mxu0 %v2920
        %v3289 = vpop.f32.mrf.mxu0
        %v3290 = vadd.f32 %v3249, %v3289
        %3291 = vmatmul.f32.gmra.mxu0 %v2922
        %v3292 = vpop.f32.mrf.mxu0
        %v3293 = vadd.f32 %v3252, %v3292
        %3294 = vmatmul.f32.gmra.mxu0 %v2924
        %v3295 = vpop.f32.mrf.mxu0
        %v3296 = vadd.f32 %v3255, %v3295
        %3297 = vmatmul.f32.gmra.mxu0 %v2926
        %v3298 = vpop.f32.mrf.mxu0
        %v3299 = vadd.f32 %v3258, %v3298
        %3300 = vmatmul.f32.gmra.mxu0 %v2928
        %v3301 = vpop.f32.mrf.mxu0
        %v3302 = vadd.f32 %v3261, %v3301
        %3303 = vmatmul.f32.gmra.mxu0 %v2930
        %v3304 = vpop.f32.mrf.mxu0
        %v3305 = vadd.f32 %v3264, %v3304
        %3306 = vmatmul.f32.gmra.mxu0 %v2932
        %v3307 = vpop.f32.mrf.mxu0
        %v3308 = vadd.f32 %v3267, %v3307
        %3309 = vmatmul.f32.gmra.mxu0 %v2934
        %v3310 = vpop.f32.mrf.mxu0
        %v3311 = vadd.f32 %v3270, %v3310
        %3312 = vdwg.mxu0
        %3313 = vmatpush.msra.mxu0 %v2728
        %3314 = vmatpush.msra.mxu0 %v2725
        %3315 = vmatpush.msra.mxu0 %v2722
        %3316 = vmatpush.msra.mxu0 %v2719
        %3317 = vmatpush.msra.mxu0 %v2716
        %3318 = vmatpush.msra.mxu0 %v2713
        %3319 = vmatpush.msra.mxu0 %v2710
        %3320 = vmatpush.msra.mxu0 %v2707
        %3321 = vmatpush.msra.mxu0 %v2704
        %3322 = vmatpush.msra.mxu0 %v2701
        %3323 = vmatpush.msra.mxu0 %v2698
        %3324 = vmatpush.msra.mxu0 %v2695
        %3325 = vmatpush.msra.mxu0 %v2692
        %3326 = vmatpush.msra.mxu0 %v2689
        %3327 = vmatpush.msra.mxu0 %v2686
        %3328 = vmatpush.msra.mxu0 %v2683
        %3329 = vmatmul.f32.gmra.mxu0 %v2855
        %v3330 = vpop.f32.mrf.mxu0
        %v3331 = vadd.f32 %v3063, %v3330
        %3332 = vmatmul.f32.gmra.mxu0 %v2863
        %v3333 = vpop.f32.mrf.mxu0
        %v3334 = vadd.f32 %v3063, %v3333
        %3335 = vmatmul.f32.gmra.mxu0 %v2869
        %v3336 = vpop.f32.mrf.mxu0
        %v3337 = vadd.f32 %v3063, %v3336
        %3338 = vmatmul.f32.gmra.mxu0 %v2875
        %v3339 = vpop.f32.mrf.mxu0
        %v3340 = vadd.f32 %v3063, %v3339
        %3341 = vmatmul.f32.gmra.mxu0 %v2881
        %v3342 = vpop.f32.mrf.mxu0
        %v3343 = vadd.f32 %v3063, %v3342
        %3344 = vmatmul.f32.gmra.mxu0 %v2887
        %v3345 = vpop.f32.mrf.mxu0
        %v3346 = vadd.f32 %v3063, %v3345
        %3347 = vmatmul.f32.gmra.mxu0 %v2893
        %v3348 = vpop.f32.mrf.mxu0
        %v3349 = vadd.f32 %v3063, %v3348
        %3350 = vmatmul.f32.gmra.mxu0 %v2899
        %v3351 = vpop.f32.mrf.mxu0
        %v3352 = vadd.f32 %v3063, %v3351
        %3353 = vdwg.mxu0
        %3354 = vmatpush.msra.mxu0 %v2776
        %3355 = vmatpush.msra.mxu0 %v2773
        %3356 = vmatpush.msra.mxu0 %v2770
        %3357 = vmatpush.msra.mxu0 %v2767
        %3358 = vmatpush.msra.mxu0 %v2764
        %3359 = vmatpush.msra.mxu0 %v2761
        %3360 = vmatpush.msra.mxu0 %v2758
        %3361 = vmatpush.msra.mxu0 %v2755
        %3362 = vmatpush.msra.mxu0 %v2752
        %3363 = vmatpush.msra.mxu0 %v2749
        %3364 = vmatpush.msra.mxu0 %v2746
        %3365 = vmatpush.msra.mxu0 %v2743
        %3366 = vmatpush.msra.mxu0 %v2740
        %3367 = vmatpush.msra.mxu0 %v2737
        %3368 = vmatpush.msra.mxu0 %v2734
        %3369 = vmatpush.msra.mxu0 %v2731
        %3370 = vmatmul.f32.gmra.mxu0 %v2858
        %v3371 = vpop.f32.mrf.mxu0
        %v3372 = vadd.f32 %v3331, %v3371
        %3373 = vmatmul.f32.gmra.mxu0 %v2865
        %v3374 = vpop.f32.mrf.mxu0
        %v3375 = vadd.f32 %v3334, %v3374
        %3376 = vmatmul.f32.gmra.mxu0 %v2871
        %v3377 = vpop.f32.mrf.mxu0
        %v3378 = vadd.f32 %v3337, %v3377
        %3379 = vmatmul.f32.gmra.mxu0 %v2877
        %v3380 = vpop.f32.mrf.mxu0
        %v3381 = vadd.f32 %v3340, %v3380
        %3382 = vmatmul.f32.gmra.mxu0 %v2883
        %v3383 = vpop.f32.mrf.mxu0
        %v3384 = vadd.f32 %v3343, %v3383
        %3385 = vmatmul.f32.gmra.mxu0 %v2889
        %v3386 = vpop.f32.mrf.mxu0
        %v3387 = vadd.f32 %v3346, %v3386
        %3388 = vmatmul.f32.gmra.mxu0 %v2895
        %v3389 = vpop.f32.mrf.mxu0
        %v3390 = vadd.f32 %v3349, %v3389
        %3391 = vmatmul.f32.gmra.mxu0 %v2901
        %v3392 = vpop.f32.mrf.mxu0
        %v3393 = vadd.f32 %v3352, %v3392
        %3394 = vdwg.mxu0
        %3395 = vmatpush.msra.mxu0 0.0
        %3396 = vmatpush.msra.mxu0 0.0
        %3397 = vmatpush.msra.mxu0 0.0
        %3398 = vmatpush.msra.mxu0 0.0
        %3399 = vmatpush.msra.mxu0 0.0
        %3400 = vmatpush.msra.mxu0 0.0
        %3401 = vmatpush.msra.mxu0 0.0
        %3402 = vmatpush.msra.mxu0 0.0
        %3403 = vmatpush.msra.mxu0 0.0
        %3404 = vmatpush.msra.mxu0 0.0
        %3405 = vmatpush.msra.mxu0 0.0
        %3406 = vmatpush.msra.mxu0 0.0
        %3407 = vmatpush.msra.mxu0 %v2788
        %3408 = vmatpush.msra.mxu0 %v2785
        %3409 = vmatpush.msra.mxu0 %v2782
        %3410 = vmatpush.msra.mxu0 %v2779
        %3411 = vmatmul.f32.gmra.mxu0 %v2920
        %v3412 = vpop.f32.mrf.mxu0
        %v3413 = vadd.f32 %v3372, %v3412
        %3414 = vmatmul.f32.gmra.mxu0 %v2922
        %v3415 = vpop.f32.mrf.mxu0
        %v3416 = vadd.f32 %v3375, %v3415
        %3417 = vmatmul.f32.gmra.mxu0 %v2924
        %v3418 = vpop.f32.mrf.mxu0
        %v3419 = vadd.f32 %v3378, %v3418
        %3420 = vmatmul.f32.gmra.mxu0 %v2926
        %v3421 = vpop.f32.mrf.mxu0
        %v3422 = vadd.f32 %v3381, %v3421
        %3423 = vmatmul.f32.gmra.mxu0 %v2928
        %v3424 = vpop.f32.mrf.mxu0
        %v3425 = vadd.f32 %v3384, %v3424
        %3426 = vmatmul.f32.gmra.mxu0 %v2930
        %v3427 = vpop.f32.mrf.mxu0
        %v3428 = vadd.f32 %v3387, %v3427
        %3429 = vmatmul.f32.gmra.mxu0 %v2932
        %v3430 = vpop.f32.mrf.mxu0
        %v3431 = vadd.f32 %v3390, %v3430
        %3432 = vmatmul.f32.gmra.mxu0 %v2934
        %v3433 = vpop.f32.mrf.mxu0
        %v3434 = vadd.f32 %v3393, %v3433
        %3435 = vdwg.mxu0
        %v3436 = vmax.f32 %v3167, 0.0
        %v3437 = vmax.f32 %v3290, 0.0
        %v3438 = vmax.f32 %v3413, 0.0
        %v3439 = vmax.f32 %v3170, 0.0
        %v3440 = vmax.f32 %v3293, 0.0
        %v3441 = vmax.f32 %v3416, 0.0
        %v3442 = vmax.f32 %v3173, 0.0
        %v3443 = vmax.f32 %v3296, 0.0
        %v3444 = vmax.f32 %v3419, 0.0
        %v3445 = vmax.f32 %v3176, 0.0
        %v3446 = vmax.f32 %v3299, 0.0
        %v3447 = vmax.f32 %v3422, 0.0
        %v3448 = vmax.f32 %v3179, 0.0
        %v3449 = vmax.f32 %v3302, 0.0
        %v3450 = vmax.f32 %v3425, 0.0
        %v3451 = vmax.f32 %v3182, 0.0
        %v3452 = vmax.f32 %v3305, 0.0
        %v3453 = vmax.f32 %v3428, 0.0
        %v3454 = vmax.f32 %v3185, 0.0
        %v3455 = vmax.f32 %v3308, 0.0
        %v3456 = vmax.f32 %v3431, 0.0
        %v3457 = vmax.f32 %v3188, 0.0
        %v3458 = vmax.f32 %v3311, 0.0
        %v3459 = vmax.f32 %v3434, 0.0
        %vm3460 = vcmp.ne.f32.partialorder %v3167, %v3167
        %vm3461 = vcmp.ne.f32.partialorder %v3290, %v3290
        %vm3462 = vcmp.ne.f32.partialorder %v3413, %v3413
        %vm3463 = vcmp.ne.f32.partialorder %v3170, %v3170
        %vm3464 = vcmp.ne.f32.partialorder %v3293, %v3293
        %vm3465 = vcmp.ne.f32.partialorder %v3416, %v3416
        %vm3466 = vcmp.ne.f32.partialorder %v3173, %v3173
        %vm3467 = vcmp.ne.f32.partialorder %v3296, %v3296
        %vm3468 = vcmp.ne.f32.partialorder %v3419, %v3419
        %vm3469 = vcmp.ne.f32.partialorder %v3176, %v3176
        %vm3470 = vcmp.ne.f32.partialorder %v3299, %v3299
        %vm3471 = vcmp.ne.f32.partialorder %v3422, %v3422
        %vm3472 = vcmp.ne.f32.partialorder %v3179, %v3179
        %vm3473 = vcmp.ne.f32.partialorder %v3302, %v3302
        %vm3474 = vcmp.ne.f32.partialorder %v3425, %v3425
        %vm3475 = vcmp.ne.f32.partialorder %v3182, %v3182
        %vm3476 = vcmp.ne.f32.partialorder %v3305, %v3305
        %vm3477 = vcmp.ne.f32.partialorder %v3428, %v3428
        %vm3478 = vcmp.ne.f32.partialorder %v3185, %v3185
        %vm3479 = vcmp.ne.f32.partialorder %v3308, %v3308
        %vm3480 = vcmp.ne.f32.partialorder %v3431, %v3431
        %vm3481 = vcmp.ne.f32.partialorder %v3188, %v3188
        %vm3482 = vcmp.ne.f32.partialorder %v3311, %v3311
        %vm3483 = vcmp.ne.f32.partialorder %v3434, %v3434
        %v3484 = vadd.f32 %v3167, 0.0
        %v3485 = vadd.f32 %v3290, 0.0
        %v3486 = vadd.f32 %v3413, 0.0
        %v3487 = vadd.f32 %v3170, 0.0
        %v3488 = vadd.f32 %v3293, 0.0
        %v3489 = vadd.f32 %v3416, 0.0
        %v3490 = vadd.f32 %v3173, 0.0
        %v3491 = vadd.f32 %v3296, 0.0
        %v3492 = vadd.f32 %v3419, 0.0
        %v3493 = vadd.f32 %v3176, 0.0
        %v3494 = vadd.f32 %v3299, 0.0
        %v3495 = vadd.f32 %v3422, 0.0
        %v3496 = vadd.f32 %v3179, 0.0
        %v3497 = vadd.f32 %v3302, 0.0
        %v3498 = vadd.f32 %v3425, 0.0
        %v3499 = vadd.f32 %v3182, 0.0
        %v3500 = vadd.f32 %v3305, 0.0
        %v3501 = vadd.f32 %v3428, 0.0
        %v3502 = vadd.f32 %v3185, 0.0
        %v3503 = vadd.f32 %v3308, 0.0
        %v3504 = vadd.f32 %v3431, 0.0
        %v3505 = vadd.f32 %v3188, 0.0
        %v3506 = vadd.f32 %v3311, 0.0
        %v3507 = vadd.f32 %v3434, 0.0
        %v3508 = vand.u32 2147483647, %v3167
        %v3509 = vand.u32 2147483647, %v3290
        %v3510 = vand.u32 2147483647, %v3413
        %v3511 = vand.u32 2147483647, %v3170
        %v3512 = vand.u32 2147483647, %v3293
        %v3513 = vand.u32 2147483647, %v3416
        %v3514 = vand.u32 2147483647, %v3173
        %v3515 = vand.u32 2147483647, %v3296
        %v3516 = vand.u32 2147483647, %v3419
        %v3517 = vand.u32 2147483647, %v3176
        %v3518 = vand.u32 2147483647, %v3299
        %v3519 = vand.u32 2147483647, %v3422
        %v3520 = vand.u32 2147483647, %v3179
        %v3521 = vand.u32 2147483647, %v3302
        %v3522 = vand.u32 2147483647, %v3425
        %v3523 = vand.u32 2147483647, %v3182
        %v3524 = vand.u32 2147483647, %v3305
        %v3525 = vand.u32 2147483647, %v3428
        %v3526 = vand.u32 2147483647, %v3185
        %v3527 = vand.u32 2147483647, %v3308
        %v3528 = vand.u32 2147483647, %v3431
        %v3529 = vand.u32 2147483647, %v3188
        %v3530 = vand.u32 2147483647, %v3311
        %v3531 = vand.u32 2147483647, %v3434
        %v3532 = vsub.f32 0.0, %v3508
        %v3533 = vsub.f32 0.0, %v3509
        %v3534 = vsub.f32 0.0, %v3510
        %v3535 = vsub.f32 0.0, %v3511
        %v3536 = vsub.f32 0.0, %v3512
        %v3537 = vsub.f32 0.0, %v3513
        %v3538 = vsub.f32 0.0, %v3514
        %v3539 = vsub.f32 0.0, %v3515
        %v3540 = vsub.f32 0.0, %v3516
        %v3541 = vsub.f32 0.0, %v3517
        %v3542 = vsub.f32 0.0, %v3518
        %v3543 = vsub.f32 0.0, %v3519
        %v3544 = vsub.f32 0.0, %v3520
        %v3545 = vsub.f32 0.0, %v3521
        %v3546 = vsub.f32 0.0, %v3522
        %v3547 = vsub.f32 0.0, %v3523
        %v3548 = vsub.f32 0.0, %v3524
        %v3549 = vsub.f32 0.0, %v3525
        %v3550 = vsub.f32 0.0, %v3526
        %v3551 = vsub.f32 0.0, %v3527
        %v3552 = vsub.f32 0.0, %v3528
        %v3553 = vsub.f32 0.0, %v3529
        %v3554 = vsub.f32 0.0, %v3530
        %v3555 = vsub.f32 0.0, %v3531
        %v3556 = vmul.f32 %v3532, 1.442695
        %v3557 = vpow.pop %v3556
        %v3558 = vmul.f32 %v3533, 1.442695
        %v3559 = vpow.pop %v3558
        %v3560 = vmul.f32 %v3534, 1.442695
        %v3561 = vpow.pop %v3560
        %v3562 = vmul.f32 %v3535, 1.442695
        %v3563 = vpow.pop %v3562
        %v3564 = vmul.f32 %v3536, 1.442695
        %v3565 = vpow.pop %v3564
        %v3566 = vmul.f32 %v3537, 1.442695
        %v3567 = vpow.pop %v3566
        %v3568 = vmul.f32 %v3538, 1.442695
        %v3569 = vpow.pop %v3568
        %v3570 = vmul.f32 %v3539, 1.442695
        %v3571 = vpow.pop %v3570
        %v3572 = vmul.f32 %v3540, 1.442695
        %v3573 = vpow.pop %v3572
        %v3574 = vmul.f32 %v3541, 1.442695
        %v3575 = vpow.pop %v3574
        %v3576 = vmul.f32 %v3542, 1.442695
        %v3577 = vpow.pop %v3576
        %v3578 = vmul.f32 %v3543, 1.442695
        %v3579 = vpow.pop %v3578
        %v3580 = vmul.f32 %v3544, 1.442695
        %v3581 = vpow.pop %v3580
        %v3582 = vmul.f32 %v3545, 1.442695
        %v3583 = vpow.pop %v3582
        %v3584 = vmul.f32 %v3546, 1.442695
        %v3585 = vpow.pop %v3584
        %v3586 = vmul.f32 %v3547, 1.442695
        %v3587 = vpow.pop %v3586
        %v3588 = vmul.f32 %v3548, 1.442695
        %v3589 = vpow.pop %v3588
        %v3590 = vmul.f32 %v3549, 1.442695
        %v3591 = vpow.pop %v3590
        %v3592 = vmul.f32 %v3550, 1.442695
        %v3593 = vpow.pop %v3592
        %v3594 = vmul.f32 %v3551, 1.442695
        %v3595 = vpow.pop %v3594
        %v3596 = vmul.f32 %v3552, 1.442695
        %v3597 = vpow.pop %v3596
        %v3598 = vmul.f32 %v3553, 1.442695
        %v3599 = vpow.pop %v3598
        %v3600 = vmul.f32 %v3554, 1.442695
        %v3601 = vpow.pop %v3600
        %v3602 = vmul.f32 %v3555, 1.442695
        %v3603 = vpow.pop %v3602
        %v3604 = vadd.f32 %v3557, 1.0
        %v3605 = vlog2.pop %v3604
        %v3606 = vmul.f32 %v3605, 0.6931472
        %v3607 = vmul.f32 -0.5, %v3557
        %v3608 = vadd.f32 %v3607, 1.0
        %v3609 = vmul.f32 %v3608, %v3557
        %v3610 = vand.u32 2147483647, %v3557
        %vm3611 = vcmp.lt.f32.partialorder %v3610, 0.0004427343
        %v3612 = vsel %vm3611, %v3609, %v3606
        %v3613 = vadd.f32 %v3559, 1.0
        %v3614 = vlog2.pop %v3613
        %v3615 = vmul.f32 %v3614, 0.6931472
        %v3616 = vmul.f32 -0.5, %v3559
        %v3617 = vadd.f32 %v3616, 1.0
        %v3618 = vmul.f32 %v3617, %v3559
        %v3619 = vand.u32 2147483647, %v3559
        %vm3620 = vcmp.lt.f32.partialorder %v3619, 0.0004427343
        %v3621 = vsel %vm3620, %v3618, %v3615
        %v3622 = vadd.f32 %v3561, 1.0
        %v3623 = vlog2.pop %v3622
        %v3624 = vmul.f32 %v3623, 0.6931472
        %v3625 = vmul.f32 -0.5, %v3561
        %v3626 = vadd.f32 %v3625, 1.0
        %v3627 = vmul.f32 %v3626, %v3561
        %v3628 = vand.u32 2147483647, %v3561
        %vm3629 = vcmp.lt.f32.partialorder %v3628, 0.0004427343
        %v3630 = vsel %vm3629, %v3627, %v3624
        %v3631 = vadd.f32 %v3563, 1.0
        %v3632 = vlog2.pop %v3631
        %v3633 = vmul.f32 %v3632, 0.6931472
        %v3634 = vmul.f32 -0.5, %v3563
        %v3635 = vadd.f32 %v3634, 1.0
        %v3636 = vmul.f32 %v3635, %v3563
        %v3637 = vand.u32 2147483647, %v3563
        %vm3638 = vcmp.lt.f32.partialorder %v3637, 0.0004427343
        %v3639 = vsel %vm3638, %v3636, %v3633
        %v3640 = vadd.f32 %v3565, 1.0
        %v3641 = vlog2.pop %v3640
        %v3642 = vmul.f32 %v3641, 0.6931472
        %v3643 = vmul.f32 -0.5, %v3565
        %v3644 = vadd.f32 %v3643, 1.0
        %v3645 = vmul.f32 %v3644, %v3565
        %v3646 = vand.u32 2147483647, %v3565
        %vm3647 = vcmp.lt.f32.partialorder %v3646, 0.0004427343
        %v3648 = vsel %vm3647, %v3645, %v3642
        %v3649 = vadd.f32 %v3567, 1.0
        %v3650 = vlog2.pop %v3649
        %v3651 = vmul.f32 %v3650, 0.6931472
        %v3652 = vmul.f32 -0.5, %v3567
        %v3653 = vadd.f32 %v3652, 1.0
        %v3654 = vmul.f32 %v3653, %v3567
        %v3655 = vand.u32 2147483647, %v3567
        %vm3656 = vcmp.lt.f32.partialorder %v3655, 0.0004427343
        %v3657 = vsel %vm3656, %v3654, %v3651
        %v3658 = vadd.f32 %v3569, 1.0
        %v3659 = vlog2.pop %v3658
        %v3660 = vmul.f32 %v3659, 0.6931472
        %v3661 = vmul.f32 -0.5, %v3569
        %v3662 = vadd.f32 %v3661, 1.0
        %v3663 = vmul.f32 %v3662, %v3569
        %v3664 = vand.u32 2147483647, %v3569
        %vm3665 = vcmp.lt.f32.partialorder %v3664, 0.0004427343
        %v3666 = vsel %vm3665, %v3663, %v3660
        %v3667 = vadd.f32 %v3571, 1.0
        %v3668 = vlog2.pop %v3667
        %v3669 = vmul.f32 %v3668, 0.6931472
        %v3670 = vmul.f32 -0.5, %v3571
        %v3671 = vadd.f32 %v3670, 1.0
        %v3672 = vmul.f32 %v3671, %v3571
        %v3673 = vand.u32 2147483647, %v3571
        %vm3674 = vcmp.lt.f32.partialorder %v3673, 0.0004427343
        %v3675 = vsel %vm3674, %v3672, %v3669
        %v3676 = vadd.f32 %v3573, 1.0
        %v3677 = vlog2.pop %v3676
        %v3678 = vmul.f32 %v3677, 0.6931472
        %v3679 = vmul.f32 -0.5, %v3573
        %v3680 = vadd.f32 %v3679, 1.0
        %v3681 = vmul.f32 %v3680, %v3573
        %v3682 = vand.u32 2147483647, %v3573
        %vm3683 = vcmp.lt.f32.partialorder %v3682, 0.0004427343
        %v3684 = vsel %vm3683, %v3681, %v3678
        %v3685 = vadd.f32 %v3575, 1.0
        %v3686 = vlog2.pop %v3685
        %v3687 = vmul.f32 %v3686, 0.6931472
        %v3688 = vmul.f32 -0.5, %v3575
        %v3689 = vadd.f32 %v3688, 1.0
        %v3690 = vmul.f32 %v3689, %v3575
        %v3691 = vand.u32 2147483647, %v3575
        %vm3692 = vcmp.lt.f32.partialorder %v3691, 0.0004427343
        %v3693 = vsel %vm3692, %v3690, %v3687
        %v3694 = vadd.f32 %v3577, 1.0
        %v3695 = vlog2.pop %v3694
        %v3696 = vmul.f32 %v3695, 0.6931472
        %v3697 = vmul.f32 -0.5, %v3577
        %v3698 = vadd.f32 %v3697, 1.0
        %v3699 = vmul.f32 %v3698, %v3577
        %v3700 = vand.u32 2147483647, %v3577
        %vm3701 = vcmp.lt.f32.partialorder %v3700, 0.0004427343
        %v3702 = vsel %vm3701, %v3699, %v3696
        %v3703 = vadd.f32 %v3579, 1.0
        %v3704 = vlog2.pop %v3703
        %v3705 = vmul.f32 %v3704, 0.6931472
        %v3706 = vmul.f32 -0.5, %v3579
        %v3707 = vadd.f32 %v3706, 1.0
        %v3708 = vmul.f32 %v3707, %v3579
        %v3709 = vand.u32 2147483647, %v3579
        %vm3710 = vcmp.lt.f32.partialorder %v3709, 0.0004427343
        %v3711 = vsel %vm3710, %v3708, %v3705
        %v3712 = vadd.f32 %v3581, 1.0
        %v3713 = vlog2.pop %v3712
        %v3714 = vmul.f32 %v3713, 0.6931472
        %v3715 = vmul.f32 -0.5, %v3581
        %v3716 = vadd.f32 %v3715, 1.0
        %v3717 = vmul.f32 %v3716, %v3581
        %v3718 = vand.u32 2147483647, %v3581
        %vm3719 = vcmp.lt.f32.partialorder %v3718, 0.0004427343
        %v3720 = vsel %vm3719, %v3717, %v3714
        %v3721 = vadd.f32 %v3583, 1.0
        %v3722 = vlog2.pop %v3721
        %v3723 = vmul.f32 %v3722, 0.6931472
        %v3724 = vmul.f32 -0.5, %v3583
        %v3725 = vadd.f32 %v3724, 1.0
        %v3726 = vmul.f32 %v3725, %v3583
        %v3727 = vand.u32 2147483647, %v3583
        %vm3728 = vcmp.lt.f32.partialorder %v3727, 0.0004427343
        %v3729 = vsel %vm3728, %v3726, %v3723
        %v3730 = vadd.f32 %v3585, 1.0
        %v3731 = vlog2.pop %v3730
        %v3732 = vmul.f32 %v3731, 0.6931472
        %v3733 = vmul.f32 -0.5, %v3585
        %v3734 = vadd.f32 %v3733, 1.0
        %v3735 = vmul.f32 %v3734, %v3585
        %v3736 = vand.u32 2147483647, %v3585
        %vm3737 = vcmp.lt.f32.partialorder %v3736, 0.0004427343
        %v3738 = vsel %vm3737, %v3735, %v3732
        %v3739 = vadd.f32 %v3587, 1.0
        %v3740 = vlog2.pop %v3739
        %v3741 = vmul.f32 %v3740, 0.6931472
        %v3742 = vmul.f32 -0.5, %v3587
        %v3743 = vadd.f32 %v3742, 1.0
        %v3744 = vmul.f32 %v3743, %v3587
        %v3745 = vand.u32 2147483647, %v3587
        %vm3746 = vcmp.lt.f32.partialorder %v3745, 0.0004427343
        %v3747 = vsel %vm3746, %v3744, %v3741
        %v3748 = vadd.f32 %v3589, 1.0
        %v3749 = vlog2.pop %v3748
        %v3750 = vmul.f32 %v3749, 0.6931472
        %v3751 = vmul.f32 -0.5, %v3589
        %v3752 = vadd.f32 %v3751, 1.0
        %v3753 = vmul.f32 %v3752, %v3589
        %v3754 = vand.u32 2147483647, %v3589
        %vm3755 = vcmp.lt.f32.partialorder %v3754, 0.0004427343
        %v3756 = vsel %vm3755, %v3753, %v3750
        %v3757 = vadd.f32 %v3591, 1.0
        %v3758 = vlog2.pop %v3757
        %v3759 = vmul.f32 %v3758, 0.6931472
        %v3760 = vmul.f32 -0.5, %v3591
        %v3761 = vadd.f32 %v3760, 1.0
        %v3762 = vmul.f32 %v3761, %v3591
        %v3763 = vand.u32 2147483647, %v3591
        %vm3764 = vcmp.lt.f32.partialorder %v3763, 0.0004427343
        %v3765 = vsel %vm3764, %v3762, %v3759
        %v3766 = vadd.f32 %v3593, 1.0
        %v3767 = vlog2.pop %v3766
        %v3768 = vmul.f32 %v3767, 0.6931472
        %v3769 = vmul.f32 -0.5, %v3593
        %v3770 = vadd.f32 %v3769, 1.0
        %v3771 = vmul.f32 %v3770, %v3593
        %v3772 = vand.u32 2147483647, %v3593
        %vm3773 = vcmp.lt.f32.partialorder %v3772, 0.0004427343
        %v3774 = vsel %vm3773, %v3771, %v3768
        %v3775 = vadd.f32 %v3595, 1.0
        %v3776 = vlog2.pop %v3775
        %v3777 = vmul.f32 %v3776, 0.6931472
        %v3778 = vmul.f32 -0.5, %v3595
        %v3779 = vadd.f32 %v3778, 1.0
        %v3780 = vmul.f32 %v3779, %v3595
        %v3781 = vand.u32 2147483647, %v3595
        %vm3782 = vcmp.lt.f32.partialorder %v3781, 0.0004427343
        %v3783 = vsel %vm3782, %v3780, %v3777
        %v3784 = vadd.f32 %v3597, 1.0
        %v3785 = vlog2.pop %v3784
        %v3786 = vmul.f32 %v3785, 0.6931472
        %v3787 = vmul.f32 -0.5, %v3597
        %v3788 = vadd.f32 %v3787, 1.0
        %v3789 = vmul.f32 %v3788, %v3597
        %v3790 = vand.u32 2147483647, %v3597
        %vm3791 = vcmp.lt.f32.partialorder %v3790, 0.0004427343
        %v3792 = vsel %vm3791, %v3789, %v3786
        %v3793 = vadd.f32 %v3599, 1.0
        %v3794 = vlog2.pop %v3793
        %v3795 = vmul.f32 %v3794, 0.6931472
        %v3796 = vmul.f32 -0.5, %v3599
        %v3797 = vadd.f32 %v3796, 1.0
        %v3798 = vmul.f32 %v3797, %v3599
        %v3799 = vand.u32 2147483647, %v3599
        %vm3800 = vcmp.lt.f32.partialorder %v3799, 0.0004427343
        %v3801 = vsel %vm3800, %v3798, %v3795
        %v3802 = vadd.f32 %v3601, 1.0
        %v3803 = vlog2.pop %v3802
        %v3804 = vmul.f32 %v3803, 0.6931472
        %v3805 = vmul.f32 -0.5, %v3601
        %v3806 = vadd.f32 %v3805, 1.0
        %v3807 = vmul.f32 %v3806, %v3601
        %v3808 = vand.u32 2147483647, %v3601
        %vm3809 = vcmp.lt.f32.partialorder %v3808, 0.0004427343
        %v3810 = vsel %vm3809, %v3807, %v3804
        %v3811 = vadd.f32 %v3603, 1.0
        %v3812 = vlog2.pop %v3811
        %v3813 = vmul.f32 %v3812, 0.6931472
        %v3814 = vmul.f32 -0.5, %v3603
        %v3815 = vadd.f32 %v3814, 1.0
        %v3816 = vmul.f32 %v3815, %v3603
        %v3817 = vand.u32 2147483647, %v3603
        %vm3818 = vcmp.lt.f32.partialorder %v3817, 0.0004427343
        %v3819 = vsel %vm3818, %v3816, %v3813
        %v3820 = vadd.f32 %v3436, %v3612
        %v3821 = vadd.f32 %v3437, %v3621
        %v3822 = vadd.f32 %v3438, %v3630
        %v3823 = vadd.f32 %v3439, %v3639
        %v3824 = vadd.f32 %v3440, %v3648
        %v3825 = vadd.f32 %v3441, %v3657
        %v3826 = vadd.f32 %v3442, %v3666
        %v3827 = vadd.f32 %v3443, %v3675
        %v3828 = vadd.f32 %v3444, %v3684
        %v3829 = vadd.f32 %v3445, %v3693
        %v3830 = vadd.f32 %v3446, %v3702
        %v3831 = vadd.f32 %v3447, %v3711
        %v3832 = vadd.f32 %v3448, %v3720
        %v3833 = vadd.f32 %v3449, %v3729
        %v3834 = vadd.f32 %v3450, %v3738
        %v3835 = vadd.f32 %v3451, %v3747
        %v3836 = vadd.f32 %v3452, %v3756
        %v3837 = vadd.f32 %v3453, %v3765
        %v3838 = vadd.f32 %v3454, %v3774
        %v3839 = vadd.f32 %v3455, %v3783
        %v3840 = vadd.f32 %v3456, %v3792
        %v3841 = vadd.f32 %v3457, %v3801
        %v3842 = vadd.f32 %v3458, %v3810
        %v3843 = vadd.f32 %v3459, %v3819
        %v3844 = vsel %vm3460, %v3484, %v3820
        %v3845 = vsel %vm3461, %v3485, %v3821
        %v3846 = vsel %vm3462, %v3486, %v3822
        %v3847 = vsel %vm3463, %v3487, %v3823
        %v3848 = vsel %vm3464, %v3488, %v3824
        %v3849 = vsel %vm3465, %v3489, %v3825
        %v3850 = vsel %vm3466, %v3490, %v3826
        %v3851 = vsel %vm3467, %v3491, %v3827
        %v3852 = vsel %vm3468, %v3492, %v3828
        %v3853 = vsel %vm3469, %v3493, %v3829
        %v3854 = vsel %vm3470, %v3494, %v3830
        %v3855 = vsel %vm3471, %v3495, %v3831
        %v3856 = vsel %vm3472, %v3496, %v3832
        %v3857 = vsel %vm3473, %v3497, %v3833
        %v3858 = vsel %vm3474, %v3498, %v3834
        %v3859 = vsel %vm3475, %v3499, %v3835
        %v3860 = vsel %vm3476, %v3500, %v3836
        %v3861 = vsel %vm3477, %v3501, %v3837
        %v3862 = vsel %vm3478, %v3502, %v3838
        %v3863 = vsel %vm3479, %v3503, %v3839
        %v3864 = vsel %vm3480, %v3504, %v3840
        %v3865 = vsel %vm3481, %v3505, %v3841
        %v3866 = vsel %vm3482, %v3506, %v3842
        %v3867 = vsel %vm3483, %v3507, %v3843
        %3868 = vst [vmem:[#allocation3] sm:$0xff] %v3844
        %3869 = vst [vmem:[#allocation3 + $0x8] sm:$0xff] %v3845
        %3870 = vst.msk [vmem:[#allocation3 + $0x10] sm:$0xff] %vm1508, %v3846
        %3871 = vst [vmem:[#allocation3 + $0x18] sm:$0xff] %v3847
        %3872 = vst [vmem:[#allocation3 + $0x20] sm:$0xff] %v3848
        %3873 = vst.msk [vmem:[#allocation3 + $0x28] sm:$0xff] %vm1508, %v3849
        %3874 = vst [vmem:[#allocation3 + $0x30] sm:$0xff] %v3850
        %3875 = vst [vmem:[#allocation3 + $0x38] sm:$0xff] %v3851
        %3876 = vst.msk [vmem:[#allocation3 + $0x40] sm:$0xff] %vm1508, %v3852
        %3877 = vst [vmem:[#allocation3 + $0x48] sm:$0xff] %v3853
        %3878 = vst [vmem:[#allocation3 + $0x50] sm:$0xff] %v3854
        %3879 = vst.msk [vmem:[#allocation3 + $0x58] sm:$0xff] %vm1508, %v3855
        %3880 = vst [vmem:[#allocation3 + $0x60] sm:$0xff] %v3856
        %3881 = vst [vmem:[#allocation3 + $0x68] sm:$0xff] %v3857
        %3882 = vst.msk [vmem:[#allocation3 + $0x70] sm:$0xff] %vm1508, %v3858
        %3883 = vst [vmem:[#allocation3 + $0x78] sm:$0xff] %v3859
        %3884 = vst [vmem:[#allocation3 + $0x80] sm:$0xff] %v3860
        %3885 = vst.msk [vmem:[#allocation3 + $0x88] sm:$0xff] %vm1508, %v3861
        %3886 = vst [vmem:[#allocation3 + $0x90] sm:$0xff] %v3862
        %3887 = vst [vmem:[#allocation3 + $0x98] sm:$0xff] %v3863
        %3888 = vst.msk [vmem:[#allocation3 + $0xa0] sm:$0xff] %vm1508, %v3864
        %3889 = vst [vmem:[#allocation3 + $0xa8] sm:$0xff] %v3865
        %3890 = vst [vmem:[#allocation3 + $0xb0] sm:$0xff] %v3866
        %3891 = vst.msk [vmem:[#allocation3 + $0xb8] sm:$0xff] %vm1508, %v3867
        %v3900 = vmul.f32 %v3844, %v2855
        %v3901 = vmul.f32 %v3845, %v2858
        %v3902 = vmul.f32 %v3846, %v2861
        %v3903 = vmul.f32 %v3847, %v2863
        %v3904 = vmul.f32 %v3848, %v2865
        %v3905 = vmul.f32 %v3849, %v2867
        %v3906 = vmul.f32 %v3850, %v2869
        %v3907 = vmul.f32 %v3851, %v2871
        %v3908 = vmul.f32 %v3852, %v2873
        %v3909 = vmul.f32 %v3853, %v2875
        %v3910 = vmul.f32 %v3854, %v2877
        %v3911 = vmul.f32 %v3855, %v2879
        %v3912 = vmul.f32 %v3856, %v2881
        %v3913 = vmul.f32 %v3857, %v2883
        %v3914 = vmul.f32 %v3858, %v2885
        %v3915 = vmul.f32 %v3859, %v2887
        %v3916 = vmul.f32 %v3860, %v2889
        %v3917 = vmul.f32 %v3861, %v2891
        %v3918 = vmul.f32 %v3862, %v2893
        %v3919 = vmul.f32 %v3863, %v2895
        %v3920 = vmul.f32 %v3864, %v2897
        %v3921 = vmul.f32 %v3865, %v2899
        %v3922 = vmul.f32 %v3866, %v2901
        %v3923 = vmul.f32 %v3867, %v2903
        %3924 = vst [vmem:[#allocation4] sm:$0xff] %v3900
        %3925 = vst [vmem:[#allocation4 + $0x8] sm:$0xff] %v3901
        %3926 = vst.msk [vmem:[#allocation4 + $0x10] sm:$0xff] %vm1508, %v3902
        %3927 = vst [vmem:[#allocation4 + $0x18] sm:$0xff] %v3903
        %3928 = vst [vmem:[#allocation4 + $0x20] sm:$0xff] %v3904
        %3929 = vst.msk [vmem:[#allocation4 + $0x28] sm:$0xff] %vm1508, %v3905
        %3930 = vst [vmem:[#allocation4 + $0x30] sm:$0xff] %v3906
        %3931 = vst [vmem:[#allocation4 + $0x38] sm:$0xff] %v3907
        %3932 = vst.msk [vmem:[#allocation4 + $0x40] sm:$0xff] %vm1508, %v3908
        %3933 = vst [vmem:[#allocation4 + $0x48] sm:$0xff] %v3909
        %3934 = vst [vmem:[#allocation4 + $0x50] sm:$0xff] %v3910
        %3935 = vst.msk [vmem:[#allocation4 + $0x58] sm:$0xff] %vm1508, %v3911
        %3936 = vst [vmem:[#allocation4 + $0x60] sm:$0xff] %v3912
        %3937 = vst [vmem:[#allocation4 + $0x68] sm:$0xff] %v3913
        %3938 = vst.msk [vmem:[#allocation4 + $0x70] sm:$0xff] %vm1508, %v3914
        %3939 = vst [vmem:[#allocation4 + $0x78] sm:$0xff] %v3915
        %3940 = vst [vmem:[#allocation4 + $0x80] sm:$0xff] %v3916
        %3941 = vst.msk [vmem:[#allocation4 + $0x88] sm:$0xff] %vm1508, %v3917
        %3942 = vst [vmem:[#allocation4 + $0x90] sm:$0xff] %v3918
        %3943 = vst [vmem:[#allocation4 + $0x98] sm:$0xff] %v3919
        %3944 = vst.msk [vmem:[#allocation4 + $0xa0] sm:$0xff] %vm1508, %v3920
        %3945 = vst [vmem:[#allocation4 + $0xa8] sm:$0xff] %v3921
        %3946 = vst [vmem:[#allocation4 + $0xb0] sm:$0xff] %v3922
        %3947 = vst.msk [vmem:[#allocation4 + $0xb8] sm:$0xff] %vm1508, %v3923
        %3948 = vst [vmem:[#allocation5] sm:$0xff] %v1482
        %3949 = vst [vmem:[#allocation5 + $0x8] sm:$0xff] %v1483
        %3950 = vst.msk [vmem:[#allocation5 + $0x10] sm:$0xff] %vm1508, %v1484
        %3951 = vst [vmem:[#allocation5 + $0x18] sm:$0xff] %v1485
        %3952 = vst [vmem:[#allocation5 + $0x20] sm:$0xff] %v1486
        %3953 = vst.msk [vmem:[#allocation5 + $0x28] sm:$0xff] %vm1508, %v1487
        %3954 = vst [vmem:[#allocation5 + $0x30] sm:$0xff] %v1488
        %3955 = vst [vmem:[#allocation5 + $0x38] sm:$0xff] %v1489
        %3956 = vst.msk [vmem:[#allocation5 + $0x40] sm:$0xff] %vm1508, %v1490
        %3957 = vst [vmem:[#allocation5 + $0x48] sm:$0xff] %v1491
        %3958 = vst [vmem:[#allocation5 + $0x50] sm:$0xff] %v1492
        %3959 = vst.msk [vmem:[#allocation5 + $0x58] sm:$0xff] %vm1508, %v1493
        %3960 = vst [vmem:[#allocation5 + $0x60] sm:$0xff] %v1494
        %3961 = vst [vmem:[#allocation5 + $0x68] sm:$0xff] %v1495
        %3962 = vst.msk [vmem:[#allocation5 + $0x70] sm:$0xff] %vm1508, %v1496
        %3963 = vst [vmem:[#allocation5 + $0x78] sm:$0xff] %v1497
        %3964 = vst [vmem:[#allocation5 + $0x80] sm:$0xff] %v1498
        %3965 = vst.msk [vmem:[#allocation5 + $0x88] sm:$0xff] %vm1508, %v1499
        %3966 = vst [vmem:[#allocation5 + $0x90] sm:$0xff] %v1500
        %3967 = vst [vmem:[#allocation5 + $0x98] sm:$0xff] %v1501
        %3968 = vst.msk [vmem:[#allocation5 + $0xa0] sm:$0xff] %vm1508, %v1502
        %3969 = vst [vmem:[#allocation5 + $0xa8] sm:$0xff] %v1503
        %3970 = vst [vmem:[#allocation5 + $0xb0] sm:$0xff] %v1504
        %3971 = vst.msk [vmem:[#allocation5 + $0xb8] sm:$0xff] %vm1508, %v1505
        %v3972 = vld [vmem:[%s9] sm:$0x7]
        %v3974 = vperm.slane %v3972, 0
        %v3975 = vperm.slane %v3972, 1
        %v3976 = vperm.slane %v3972, 2
        %v3980 = vmul.f32 %v3974, %v2654
        %v3981 = vmul.f32 %v3975, %v2655
        %v3982 = vmul.f32 %v3976, %v2656
        %v3983 = vmul.f32 %v3974, %v2657
        %v3984 = vmul.f32 %v3975, %v2658
        %v3985 = vmul.f32 %v3976, %v2659
        %v3986 = vmul.f32 %v3974, %v2660
        %v3987 = vmul.f32 %v3975, %v2661
        %v3988 = vmul.f32 %v3976, %v2662
        %v3989 = vmul.f32 %v3974, %v2663
        %v3990 = vmul.f32 %v3975, %v2664
        %v3991 = vmul.f32 %v3976, %v2665
        %v3992 = vmul.f32 %v3974, %v2666
        %v3993 = vmul.f32 %v3975, %v2667
        %v3994 = vmul.f32 %v3976, %v2668
        %v3995 = vmul.f32 %v3974, %v2669
        %v3996 = vmul.f32 %v3975, %v2670
        %v3997 = vmul.f32 %v3976, %v2671
        %v3998 = vmul.f32 %v3974, %v2672
        %v3999 = vmul.f32 %v3975, %v2673
        %v4000 = vmul.f32 %v3976, %v2674
        %v4001 = vmul.f32 %v3974, %v2675
        %v4002 = vmul.f32 %v3975, %v2676
        %v4003 = vmul.f32 %v3976, %v2677
        %v4004 = vmul.f32 %v3974, %v2678
        %v4005 = vmul.f32 %v3975, %v2679
        %v4006 = vmul.f32 %v3976, %v2680
        %v4031 = vrot.slane %v1482, 3
        %v4032 = vrot.slane %v1483, 3
        %v4033 = vrot.slane %v1484, 3
        %v4034 = vrot.slane %v1485, 3
        %v4035 = vsel %vm2041, %v4031, %v4034
        %v4036 = vrot.slane %v1486, 3
        %v4037 = vsel %vm2041, %v4032, %v4036
        %v4038 = vrot.slane %v1487, 3
        %v4039 = vsel %vm2041, %v4033, %v4038
        %v4040 = vrot.slane %v1488, 3
        %v4041 = vsel %vm2041, %v4034, %v4040
        %v4042 = vrot.slane %v1489, 3
        %v4043 = vsel %vm2041, %v4036, %v4042
        %v4044 = vrot.slane %v1490, 3
        %v4045 = vsel %vm2041, %v4038, %v4044
        %v4046 = vrot.slane %v1491, 3
        %v4047 = vsel %vm2041, %v4040, %v4046
        %v4048 = vrot.slane %v1492, 3
        %v4049 = vsel %vm2041, %v4042, %v4048
        %v4050 = vrot.slane %v1493, 3
        %v4051 = vsel %vm2041, %v4044, %v4050
        %v4052 = vrot.slane %v1494, 3
        %v4053 = vsel %vm2041, %v4046, %v4052
        %v4054 = vrot.slane %v1495, 3
        %v4055 = vsel %vm2041, %v4048, %v4054
        %v4056 = vrot.slane %v1496, 3
        %v4057 = vsel %vm2041, %v4050, %v4056
        %v4058 = vrot.slane %v1497, 3
        %v4059 = vsel %vm2041, %v4052, %v4058
        %v4060 = vrot.slane %v1498, 3
        %v4061 = vsel %vm2041, %v4054, %v4060
        %v4062 = vrot.slane %v1499, 3
        %v4063 = vsel %vm2041, %v4056, %v4062
        %v4064 = vrot.slane %v1500, 3
        %v4065 = vsel %vm2041, %v4058, %v4064
        %v4066 = vrot.slane %v1501, 3
        %v4067 = vsel %vm2041, %v4060, %v4066
        %v4068 = vrot.slane %v1502, 3
        %v4069 = vsel %vm2041, %v4062, %v4068
        %v4070 = vrot.slane %v1503, 3
        %v4071 = vsel %vm2041, %v4064, %v4070
        %v4072 = vrot.slane %v1504, 3
        %v4073 = vsel %vm2041, %v4066, %v4072
        %v4074 = vrot.slane %v1505, 3
        %v4075 = vsel %vm2041, %v4068, %v4074
        %v4103 = vmul.f32 %v3980, %v4031
        %v4104 = vmul.f32 %v3981, %v4032
        %v4105 = vmul.f32 %v3982, %v4033
        %v4106 = vmul.f32 %v3983, %v4035
        %v4107 = vmul.f32 %v3984, %v4037
        %v4108 = vmul.f32 %v3985, %v4039
        %v4109 = vmul.f32 %v3986, %v4041
        %v4110 = vmul.f32 %v3987, %v4043
        %v4111 = vmul.f32 %v3988, %v4045
        %v4112 = vmul.f32 %v3989, %v4047
        %v4113 = vmul.f32 %v3990, %v4049
        %v4114 = vmul.f32 %v3991, %v4051
        %v4115 = vmul.f32 %v3992, %v4053
        %v4116 = vmul.f32 %v3993, %v4055
        %v4117 = vmul.f32 %v3994, %v4057
        %v4118 = vmul.f32 %v3995, %v4059
        %v4119 = vmul.f32 %v3996, %v4061
        %v4120 = vmul.f32 %v3997, %v4063
        %v4121 = vmul.f32 %v3998, %v4065
        %v4122 = vmul.f32 %v3999, %v4067
        %v4123 = vmul.f32 %v4000, %v4069
        %v4124 = vmul.f32 %v4001, %v4071
        %v4125 = vmul.f32 %v4002, %v4073
        %v4126 = vmul.f32 %v4003, %v4075
        %v4127 = vmul.f32 %v4004, %v4070
        %v4128 = vmul.f32 %v4005, %v4072
        %v4129 = vmul.f32 %v4006, %v4074
        %v4157 = vrot.slane %v4103, 5
        %v4158 = vrot.slane %v4106, 5
        %v4159 = vsel %vm2852, %v4157, %v4158
        %v4160 = vrot.slane %v4104, 5
        %v4161 = vrot.slane %v4107, 5
        %v4162 = vsel %vm2852, %v4160, %v4161
        %v4163 = vrot.slane %v4105, 5
        %v4164 = vrot.slane %v4108, 5
        %v4165 = vsel %vm2852, %v4163, %v4164
        %v4166 = vrot.slane %v4109, 5
        %v4167 = vsel %vm2852, %v4158, %v4166
        %v4168 = vrot.slane %v4110, 5
        %v4169 = vsel %vm2852, %v4161, %v4168
        %v4170 = vrot.slane %v4111, 5
        %v4171 = vsel %vm2852, %v4164, %v4170
        %v4172 = vrot.slane %v4112, 5
        %v4173 = vsel %vm2852, %v4166, %v4172
        %v4174 = vrot.slane %v4113, 5
        %v4175 = vsel %vm2852, %v4168, %v4174
        %v4176 = vrot.slane %v4114, 5
        %v4177 = vsel %vm2852, %v4170, %v4176
        %v4178 = vrot.slane %v4115, 5
        %v4179 = vsel %vm2852, %v4172, %v4178
        %v4180 = vrot.slane %v4116, 5
        %v4181 = vsel %vm2852, %v4174, %v4180
        %v4182 = vrot.slane %v4117, 5
        %v4183 = vsel %vm2852, %v4176, %v4182
        %v4184 = vrot.slane %v4118, 5
        %v4185 = vsel %vm2852, %v4178, %v4184
        %v4186 = vrot.slane %v4119, 5
        %v4187 = vsel %vm2852, %v4180, %v4186
        %v4188 = vrot.slane %v4120, 5
        %v4189 = vsel %vm2852, %v4182, %v4188
        %v4190 = vrot.slane %v4121, 5
        %v4191 = vsel %vm2852, %v4184, %v4190
        %v4192 = vrot.slane %v4122, 5
        %v4193 = vsel %vm2852, %v4186, %v4192
        %v4194 = vrot.slane %v4123, 5
        %v4195 = vsel %vm2852, %v4188, %v4194
        %v4196 = vrot.slane %v4124, 5
        %v4197 = vsel %vm2852, %v4190, %v4196
        %v4198 = vrot.slane %v4125, 5
        %v4199 = vsel %vm2852, %v4192, %v4198
        %v4200 = vrot.slane %v4126, 5
        %v4201 = vsel %vm2852, %v4194, %v4200
        %v4202 = vrot.slane %v4127, 5
        %v4203 = vsel %vm2852, %v4196, %v4202
        %v4204 = vrot.slane %v4128, 5
        %v4205 = vsel %vm2852, %v4198, %v4204
        %v4206 = vrot.slane %v4129, 5
        %v4207 = vsel %vm2852, %v4200, %v4206
        %4232 = vst [vmem:[#allocation6] sm:$0xff] %v4159
        %4233 = vst [vmem:[#allocation6 + $0x8] sm:$0xff] %v4162
        %4234 = vst.msk [vmem:[#allocation6 + $0x10] sm:$0xff] %vm1508, %v4165
        %4235 = vst [vmem:[#allocation6 + $0x18] sm:$0xff] %v4167
        %4236 = vst [vmem:[#allocation6 + $0x20] sm:$0xff] %v4169
        %4237 = vst.msk [vmem:[#allocation6 + $0x28] sm:$0xff] %vm1508, %v4171
        %4238 = vst [vmem:[#allocation6 + $0x30] sm:$0xff] %v4173
        %4239 = vst [vmem:[#allocation6 + $0x38] sm:$0xff] %v4175
        %4240 = vst.msk [vmem:[#allocation6 + $0x40] sm:$0xff] %vm1508, %v4177
        %4241 = vst [vmem:[#allocation6 + $0x48] sm:$0xff] %v4179
        %4242 = vst [vmem:[#allocation6 + $0x50] sm:$0xff] %v4181
        %4243 = vst.msk [vmem:[#allocation6 + $0x58] sm:$0xff] %vm1508, %v4183
        %4244 = vst [vmem:[#allocation6 + $0x60] sm:$0xff] %v4185
        %4245 = vst [vmem:[#allocation6 + $0x68] sm:$0xff] %v4187
        %4246 = vst.msk [vmem:[#allocation6 + $0x70] sm:$0xff] %vm1508, %v4189
        %4247 = vst [vmem:[#allocation6 + $0x78] sm:$0xff] %v4191
        %4248 = vst [vmem:[#allocation6 + $0x80] sm:$0xff] %v4193
        %4249 = vst.msk [vmem:[#allocation6 + $0x88] sm:$0xff] %vm1508, %v4195
        %4250 = vst [vmem:[#allocation6 + $0x90] sm:$0xff] %v4197
        %4251 = vst [vmem:[#allocation6 + $0x98] sm:$0xff] %v4199
        %4252 = vst.msk [vmem:[#allocation6 + $0xa0] sm:$0xff] %vm1508, %v4201
        %4253 = vst [vmem:[#allocation6 + $0xa8] sm:$0xff] %v4203
        %4254 = vst [vmem:[#allocation6 + $0xb0] sm:$0xff] %v4205
        %4255 = vst.msk [vmem:[#allocation6 + $0xb8] sm:$0xff] %vm1508, %v4207
        %4256 = vst.msk [vmem:[#allocation7] sm:$0xff] %vm455, %v3036
        %4257 = vst.msk [vmem:[#allocation7 + $0x8] sm:$0xff] %vm455, %v3039
        %4258 = vst.msk [vmem:[#allocation7 + $0x10] sm:$0xff] %vm455, %v3042
        %4259 = vst.msk [vmem:[#allocation7 + $0x18] sm:$0xff] %vm455, %v3045
        %4260 = vst.msk [vmem:[#allocation7 + $0x20] sm:$0xff] %vm455, %v3048
        %4261 = vst.msk [vmem:[#allocation7 + $0x28] sm:$0xff] %vm455, %v3051
        %4262 = vst.msk [vmem:[#allocation7 + $0x30] sm:$0xff] %vm455, %v3054
        %4263 = vst.msk [vmem:[#allocation7 + $0x38] sm:$0xff] %vm455, %v3057
        %v4264 = vld [vmem:[%s8] sm:$0xff]
        %v4265 = vld [vmem:[%s8 + $0x8] sm:$0xff]
        %v4266 = vld [vmem:[%s8 + $0x10] sm:$0xff]
        %v4267 = vlaneseq
        %v4268 = vshrl.u32 %v4267, 7
        %v4269 = vadd.s32 %v4268, 8
        %v4270 = vlaneseq
        %v4271 = vand.u32 %v4270, 127
        %vm4272 = vcmp.eq.s32.totalorder %v4268, %v4271
        %vm4273 = vcmp.eq.s32.totalorder %v4269, %v4271
        %v4274 = vsel %vm4272, 1, 0
        %v4275 = vsel %vm4273, 1, 0
        %v4276 = vcvt.s32.f32 %v4274
        %v4277 = vcvt.s32.f32 %v4275
        loop: start=0, step=1, limit=8
        $region65: #{_lambda_.3} parent=63 // loop_pre_header
          _
        $region66: #{_lambda_.3} parent=63 // loop_header
          %s4279 = sphi 0, %s4283
          %p4280 = scmp.ge.s32.totalorder %s4279, 8
          %v4284 = vphi 0.0, %v4789
          %v4285 = vphi 0.0, %v4790
          %v4286 = vphi 0.0, %v4791
        $region67: #{_lambda_.3} parent=63 // loop_header_branch
          %4282 = sbr.rel (%p4280) target = $region71
        $region68: #{_lambda_.3} parent=63 // loop_body
          %s4287 = smul.u32 %s4279, 8
          %s4288 = sshra.s32 %s4287, 3
          %s4289 = sand.u32 %s4287, 7
          %s4290 = smul.u32 %s4288, 3
          %s4291 = smul.addr %s4290, 8
          %s4292 = scalar_lea.vmem [#allocation3], %s4291
          %v4293 = vld [vmem:[%s4292] sm:$0xff]
          %v4294 = vld [vmem:[%s4292 + $0x8] sm:$0xff]
          %v4295 = vld [vmem:[%s4292 + $0x10] sm:$0xff]
          %s4296 = smul.addr %s4290, 8
          %s4297 = scalar_lea.vmem [#allocation4], %s4296
          %v4298 = vld [vmem:[%s4297] sm:$0xff]
          %v4299 = vld [vmem:[%s4297 + $0x8] sm:$0xff]
          %v4300 = vld [vmem:[%s4297 + $0x10] sm:$0xff]
          %s4301 = scalar_lea.vmem [#allocation7], %s4287
          %v4302 = vld [vmem:[%s4301] sm:$0xff]
          %v4304 = vsel %vm455, %v4276, 0
          %v4307 = vsel %vm455, %v4277, 0
          %v4310 = vsel %vm455, %v4302, 0
          %4312 = vmatpush.xpose.msra.mxu0 0.0
          %4313 = vmatpush.xpose.msra.mxu0 0.0
          %4314 = vmatpush.xpose.msra.mxu0 0.0
          %4315 = vmatpush.xpose.msra.mxu0 0.0
          %4316 = vmatpush.xpose.msra.mxu0 0.0
          %4317 = vmatpush.xpose.msra.mxu0 0.0
          %4318 = vmatpush.xpose.msra.mxu0 0.0
          %4319 = vmatpush.xpose.msra.mxu0 0.0
          %4320 = vmatpush.xpose.msra.mxu0 0.0
          %4321 = vmatpush.xpose.msra.mxu0 0.0
          %4322 = vmatpush.xpose.msra.mxu0 0.0
          %4323 = vmatpush.xpose.msra.mxu0 0.0
          %4324 = vmatpush.xpose.msra.mxu0 0.0
          %4325 = vmatpush.xpose.msra.mxu0 0.0
          %4326 = vmatpush.xpose.msra.mxu0 0.0
          %4327 = vmatpush.xpose.msra.mxu0 %v4310
          %4328 = vmatmul.f32.gmra.mxu0 %v4304
          %v4329 = vpop.f32.mrf.mxu0
          %v4330 = vadd.f32 0.0, %v4329
          %4331 = vmatmul.f32.gmra.mxu0 %v4307
          %v4332 = vpop.f32.mrf.mxu0
          %v4333 = vadd.f32 0.0, %v4332
          %4334 = vdwg.mxu0
          %v4335 = vperm.slane %v4293, 0
          %v4336 = vperm.slane %v4294, 0
          %v4337 = vperm.slane %v4295, 0
          %v4338 = vmul.f32 %v4335, %v4264
          %v4339 = vmul.f32 %v4336, %v4265
          %v4340 = vmul.f32 %v4337, %v4266
          %v4341 = vmul.f32 %v4338, 1.442695
          %v4342 = vpow.pop %v4341
          %v4343 = vmul.f32 %v4339, 1.442695
          %v4344 = vpow.pop %v4343
          %v4345 = vmul.f32 %v4340, 1.442695
          %v4346 = vpow.pop %v4345
          %v4347 = vmul.f32 %v4342, %v4284
          %v4348 = vmul.f32 %v4344, %v4285
          %v4349 = vmul.f32 %v4346, %v4286
          %4351 = vset.pattern.permute.xlu0 0
          %4352 = vperm.xlu0 %4351, %v4330
          %v4353 = vpop.permute.xlu0 %4352
          %v4355 = vperm.slane %v4298, 0
          %v4356 = vperm.slane %v4299, 0
          %v4357 = vperm.slane %v4300, 0
          %v4358 = vmul.f32 %v4353, %v4355
          %v4359 = vmul.f32 %v4353, %v4356
          %v4360 = vmul.f32 %v4353, %v4357
          %v4361 = vadd.f32 %v4347, %v4358
          %v4362 = vadd.f32 %v4348, %v4359
          %v4363 = vadd.f32 %v4349, %v4360
          %4365 = vset.pattern.permute.xlu0 0
          %4366 = vperm.xlu0 %4365, %v4333
          %v4367 = vpop.permute.xlu0 %4366
          %v4369 = vmul.f32 %v4361, %v4367
          %v4370 = vmul.f32 %v4362, %v4367
          %v4371 = vmul.f32 %v4363, %v4367
          %v4372 = vrot.slane %v4369, 4
          %v4373 = vadd.f32 %v4369, %v4372
          %v4374 = vrot.slane %v4373, 2
          %v4375 = vadd.f32 %v4373, %v4374
          %v4376 = vrot.slane %v4375, 1
          %v4377 = vadd.f32 %v4375, %v4376
          %v4378 = vrot.slane %v4370, 4
          %v4379 = vadd.f32 %v4370, %v4378
          %v4380 = vrot.slane %v4379, 2
          %v4381 = vadd.f32 %v4379, %v4380
          %v4382 = vrot.slane %v4381, 1
          %v4383 = vadd.f32 %v4381, %v4382
          %v4384 = vsel %vm1508, %v4371, 0.0
          %v4385 = vrot.slane %v4384, 4
          %v4386 = vadd.f32 %v4384, %v4385
          %v4387 = vrot.slane %v4386, 2
          %v4388 = vadd.f32 %v4386, %v4387
          %v4389 = vrot.slane %v4388, 1
          %v4390 = vadd.f32 %v4388, %v4389
          %vm4391 = vcmp.eq.s32.totalorder %v4268, 0
          %v4392 = vsel %vm4391, %v4377, 0.0
          %v4393 = vsel %vm4391, %v4383, 0.0
          %v4394 = vsel %vm4391, %v4390, 0.0
          %v4395 = vadd.f32 %v4392, 0.0
          %v4396 = vadd.f32 %v4393, 0.0
          %v4397 = vadd.f32 %v4394, 0.0
          %v4398 = vperm.slane %v4293, 1
          %v4399 = vperm.slane %v4294, 1
          %v4400 = vperm.slane %v4295, 1
          %v4401 = vmul.f32 %v4398, %v4264
          %v4402 = vmul.f32 %v4399, %v4265
          %v4403 = vmul.f32 %v4400, %v4266
          %v4404 = vmul.f32 %v4401, 1.442695
          %v4405 = vpow.pop %v4404
          %v4406 = vmul.f32 %v4402, 1.442695
          %v4407 = vpow.pop %v4406
          %v4408 = vmul.f32 %v4403, 1.442695
          %v4409 = vpow.pop %v4408
          %v4410 = vmul.f32 %v4405, %v4361
          %v4411 = vmul.f32 %v4407, %v4362
          %v4412 = vmul.f32 %v4409, %v4363
          %4413 = vset.pattern.permute.xlu0 1
          %4414 = vperm.xlu0 %4413, %v4330
          %v4415 = vpop.permute.xlu0 %4414
          %v4417 = vperm.slane %v4298, 1
          %v4418 = vperm.slane %v4299, 1
          %v4419 = vperm.slane %v4300, 1
          %v4420 = vmul.f32 %v4415, %v4417
          %v4421 = vmul.f32 %v4415, %v4418
          %v4422 = vmul.f32 %v4415, %v4419
          %v4423 = vadd.f32 %v4410, %v4420
          %v4424 = vadd.f32 %v4411, %v4421
          %v4425 = vadd.f32 %v4412, %v4422
          %4426 = vset.pattern.permute.xlu0 1
          %4427 = vperm.xlu0 %4426, %v4333
          %v4428 = vpop.permute.xlu0 %4427
          %v4430 = vmul.f32 %v4423, %v4428
          %v4431 = vmul.f32 %v4424, %v4428
          %v4432 = vmul.f32 %v4425, %v4428
          %v4433 = vrot.slane %v4430, 4
          %v4434 = vadd.f32 %v4430, %v4433
          %v4435 = vrot.slane %v4434, 2
          %v4436 = vadd.f32 %v4434, %v4435
          %v4437 = vrot.slane %v4436, 1
          %v4438 = vadd.f32 %v4436, %v4437
          %v4439 = vrot.slane %v4431, 4
          %v4440 = vadd.f32 %v4431, %v4439
          %v4441 = vrot.slane %v4440, 2
          %v4442 = vadd.f32 %v4440, %v4441
          %v4443 = vrot.slane %v4442, 1
          %v4444 = vadd.f32 %v4442, %v4443
          %v4445 = vsel %vm1508, %v4432, 0.0
          %v4446 = vrot.slane %v4445, 4
          %v4447 = vadd.f32 %v4445, %v4446
          %v4448 = vrot.slane %v4447, 2
          %v4449 = vadd.f32 %v4447, %v4448
          %v4450 = vrot.slane %v4449, 1
          %v4451 = vadd.f32 %v4449, %v4450
          %vm4452 = vcmp.eq.s32.totalorder %v4268, 1
          %v4453 = vsel %vm4452, %v4438, 0.0
          %v4454 = vsel %vm4452, %v4444, 0.0
          %v4455 = vsel %vm4452, %v4451, 0.0
          %v4456 = vadd.f32 %v4395, %v4453
          %v4457 = vadd.f32 %v4396, %v4454
          %v4458 = vadd.f32 %v4397, %v4455
          %v4459 = vperm.slane %v4293, 2
          %v4460 = vperm.slane %v4294, 2
          %v4461 = vperm.slane %v4295, 2
          %v4462 = vmul.f32 %v4459, %v4264
          %v4463 = vmul.f32 %v4460, %v4265
          %v4464 = vmul.f32 %v4461, %v4266
          %v4465 = vmul.f32 %v4462, 1.442695
          %v4466 = vpow.pop %v4465
          %v4467 = vmul.f32 %v4463, 1.442695
          %v4468 = vpow.pop %v4467
          %v4469 = vmul.f32 %v4464, 1.442695
          %v4470 = vpow.pop %v4469
          %v4471 = vmul.f32 %v4466, %v4423
          %v4472 = vmul.f32 %v4468, %v4424
          %v4473 = vmul.f32 %v4470, %v4425
          %4474 = vset.pattern.permute.xlu0 2
          %4475 = vperm.xlu0 %4474, %v4330
          %v4476 = vpop.permute.xlu0 %4475
          %v4478 = vperm.slane %v4298, 2
          %v4479 = vperm.slane %v4299, 2
          %v4480 = vperm.slane %v4300, 2
          %v4481 = vmul.f32 %v4476, %v4478
          %v4482 = vmul.f32 %v4476, %v4479
          %v4483 = vmul.f32 %v4476, %v4480
          %v4484 = vadd.f32 %v4471, %v4481
          %v4485 = vadd.f32 %v4472, %v4482
          %v4486 = vadd.f32 %v4473, %v4483
          %4487 = vset.pattern.permute.xlu0 2
          %4488 = vperm.xlu0 %4487, %v4333
          %v4489 = vpop.permute.xlu0 %4488
          %v4491 = vmul.f32 %v4484, %v4489
          %v4492 = vmul.f32 %v4485, %v4489
          %v4493 = vmul.f32 %v4486, %v4489
          %v4494 = vrot.slane %v4491, 4
          %v4495 = vadd.f32 %v4491, %v4494
          %v4496 = vrot.slane %v4495, 2
          %v4497 = vadd.f32 %v4495, %v4496
          %v4498 = vrot.slane %v4497, 1
          %v4499 = vadd.f32 %v4497, %v4498
          %v4500 = vrot.slane %v4492, 4
          %v4501 = vadd.f32 %v4492, %v4500
          %v4502 = vrot.slane %v4501, 2
          %v4503 = vadd.f32 %v4501, %v4502
          %v4504 = vrot.slane %v4503, 1
          %v4505 = vadd.f32 %v4503, %v4504
          %v4506 = vsel %vm1508, %v4493, 0.0
          %v4507 = vrot.slane %v4506, 4
          %v4508 = vadd.f32 %v4506, %v4507
          %v4509 = vrot.slane %v4508, 2
          %v4510 = vadd.f32 %v4508, %v4509
          %v4511 = vrot.slane %v4510, 1
          %v4512 = vadd.f32 %v4510, %v4511
          %vm4513 = vcmp.eq.s32.totalorder %v4268, 2
          %v4514 = vsel %vm4513, %v4499, 0.0
          %v4515 = vsel %vm4513, %v4505, 0.0
          %v4516 = vsel %vm4513, %v4512, 0.0
          %v4517 = vadd.f32 %v4456, %v4514
          %v4518 = vadd.f32 %v4457, %v4515
          %v4519 = vadd.f32 %v4458, %v4516
          %v4520 = vperm.slane %v4293, 3
          %v4521 = vperm.slane %v4294, 3
          %v4522 = vperm.slane %v4295, 3
          %v4523 = vmul.f32 %v4520, %v4264
          %v4524 = vmul.f32 %v4521, %v4265
          %v4525 = vmul.f32 %v4522, %v4266
          %v4526 = vmul.f32 %v4523, 1.442695
          %v4527 = vpow.pop %v4526
          %v4528 = vmul.f32 %v4524, 1.442695
          %v4529 = vpow.pop %v4528
          %v4530 = vmul.f32 %v4525, 1.442695
          %v4531 = vpow.pop %v4530
          %v4532 = vmul.f32 %v4527, %v4484
          %v4533 = vmul.f32 %v4529, %v4485
          %v4534 = vmul.f32 %v4531, %v4486
          %4535 = vset.pattern.permute.xlu0 3
          %4536 = vperm.xlu0 %4535, %v4330
          %v4537 = vpop.permute.xlu0 %4536
          %v4539 = vperm.slane %v4298, 3
          %v4540 = vperm.slane %v4299, 3
          %v4541 = vperm.slane %v4300, 3
          %v4542 = vmul.f32 %v4537, %v4539
          %v4543 = vmul.f32 %v4537, %v4540
          %v4544 = vmul.f32 %v4537, %v4541
          %v4545 = vadd.f32 %v4532, %v4542
          %v4546 = vadd.f32 %v4533, %v4543
          %v4547 = vadd.f32 %v4534, %v4544
          %4548 = vset.pattern.permute.xlu0 3
          %4549 = vperm.xlu0 %4548, %v4333
          %v4550 = vpop.permute.xlu0 %4549
          %v4552 = vmul.f32 %v4545, %v4550
          %v4553 = vmul.f32 %v4546, %v4550
          %v4554 = vmul.f32 %v4547, %v4550
          %v4555 = vrot.slane %v4552, 4
          %v4556 = vadd.f32 %v4552, %v4555
          %v4557 = vrot.slane %v4556, 2
          %v4558 = vadd.f32 %v4556, %v4557
          %v4559 = vrot.slane %v4558, 1
          %v4560 = vadd.f32 %v4558, %v4559
          %v4561 = vrot.slane %v4553, 4
          %v4562 = vadd.f32 %v4553, %v4561
          %v4563 = vrot.slane %v4562, 2
          %v4564 = vadd.f32 %v4562, %v4563
          %v4565 = vrot.slane %v4564, 1
          %v4566 = vadd.f32 %v4564, %v4565
          %v4567 = vsel %vm1508, %v4554, 0.0
          %v4568 = vrot.slane %v4567, 4
          %v4569 = vadd.f32 %v4567, %v4568
          %v4570 = vrot.slane %v4569, 2
          %v4571 = vadd.f32 %v4569, %v4570
          %v4572 = vrot.slane %v4571, 1
          %v4573 = vadd.f32 %v4571, %v4572
          %vm4574 = vcmp.eq.s32.totalorder %v4268, 3
          %v4575 = vsel %vm4574, %v4560, 0.0
          %v4576 = vsel %vm4574, %v4566, 0.0
          %v4577 = vsel %vm4574, %v4573, 0.0
          %v4578 = vadd.f32 %v4517, %v4575
          %v4579 = vadd.f32 %v4518, %v4576
          %v4580 = vadd.f32 %v4519, %v4577
          %v4581 = vperm.slane %v4293, 4
          %v4582 = vperm.slane %v4294, 4
          %v4583 = vperm.slane %v4295, 4
          %v4584 = vmul.f32 %v4581, %v4264
          %v4585 = vmul.f32 %v4582, %v4265
          %v4586 = vmul.f32 %v4583, %v4266
          %v4587 = vmul.f32 %v4584, 1.442695
          %v4588 = vpow.pop %v4587
          %v4589 = vmul.f32 %v4585, 1.442695
          %v4590 = vpow.pop %v4589
          %v4591 = vmul.f32 %v4586, 1.442695
          %v4592 = vpow.pop %v4591
          %v4593 = vmul.f32 %v4588, %v4545
          %v4594 = vmul.f32 %v4590, %v4546
          %v4595 = vmul.f32 %v4592, %v4547
          %4596 = vset.pattern.permute.xlu0 4
          %4597 = vperm.xlu0 %4596, %v4330
          %v4598 = vpop.permute.xlu0 %4597
          %v4600 = vperm.slane %v4298, 4
          %v4601 = vperm.slane %v4299, 4
          %v4602 = vperm.slane %v4300, 4
          %v4603 = vmul.f32 %v4598, %v4600
          %v4604 = vmul.f32 %v4598, %v4601
          %v4605 = vmul.f32 %v4598, %v4602
          %v4606 = vadd.f32 %v4593, %v4603
          %v4607 = vadd.f32 %v4594, %v4604
          %v4608 = vadd.f32 %v4595, %v4605
          %4609 = vset.pattern.permute.xlu0 4
          %4610 = vperm.xlu0 %4609, %v4333
          %v4611 = vpop.permute.xlu0 %4610
          %v4613 = vmul.f32 %v4606, %v4611
          %v4614 = vmul.f32 %v4607, %v4611
          %v4615 = vmul.f32 %v4608, %v4611
          %v4616 = vrot.slane %v4613, 4
          %v4617 = vadd.f32 %v4613, %v4616
          %v4618 = vrot.slane %v4617, 2
          %v4619 = vadd.f32 %v4617, %v4618
          %v4620 = vrot.slane %v4619, 1
          %v4621 = vadd.f32 %v4619, %v4620
          %v4622 = vrot.slane %v4614, 4
          %v4623 = vadd.f32 %v4614, %v4622
          %v4624 = vrot.slane %v4623, 2
          %v4625 = vadd.f32 %v4623, %v4624
          %v4626 = vrot.slane %v4625, 1
          %v4627 = vadd.f32 %v4625, %v4626
          %v4628 = vsel %vm1508, %v4615, 0.0
          %v4629 = vrot.slane %v4628, 4
          %v4630 = vadd.f32 %v4628, %v4629
          %v4631 = vrot.slane %v4630, 2
          %v4632 = vadd.f32 %v4630, %v4631
          %v4633 = vrot.slane %v4632, 1
          %v4634 = vadd.f32 %v4632, %v4633
          %vm4635 = vcmp.eq.s32.totalorder %v4268, 4
          %v4636 = vsel %vm4635, %v4621, 0.0
          %v4637 = vsel %vm4635, %v4627, 0.0
          %v4638 = vsel %vm4635, %v4634, 0.0
          %v4639 = vadd.f32 %v4578, %v4636
          %v4640 = vadd.f32 %v4579, %v4637
          %v4641 = vadd.f32 %v4580, %v4638
          %v4642 = vperm.slane %v4293, 5
          %v4643 = vperm.slane %v4294, 5
          %v4644 = vperm.slane %v4295, 5
          %v4645 = vmul.f32 %v4642, %v4264
          %v4646 = vmul.f32 %v4643, %v4265
          %v4647 = vmul.f32 %v4644, %v4266
          %v4648 = vmul.f32 %v4645, 1.442695
          %v4649 = vpow.pop %v4648
          %v4650 = vmul.f32 %v4646, 1.442695
          %v4651 = vpow.pop %v4650
          %v4652 = vmul.f32 %v4647, 1.442695
          %v4653 = vpow.pop %v4652
          %v4654 = vmul.f32 %v4649, %v4606
          %v4655 = vmul.f32 %v4651, %v4607
          %v4656 = vmul.f32 %v4653, %v4608
          %4657 = vset.pattern.permute.xlu0 5
          %4658 = vperm.xlu0 %4657, %v4330
          %v4659 = vpop.permute.xlu0 %4658
          %v4661 = vperm.slane %v4298, 5
          %v4662 = vperm.slane %v4299, 5
          %v4663 = vperm.slane %v4300, 5
          %v4664 = vmul.f32 %v4659, %v4661
          %v4665 = vmul.f32 %v4659, %v4662
          %v4666 = vmul.f32 %v4659, %v4663
          %v4667 = vadd.f32 %v4654, %v4664
          %v4668 = vadd.f32 %v4655, %v4665
          %v4669 = vadd.f32 %v4656, %v4666
          %4670 = vset.pattern.permute.xlu0 5
          %4671 = vperm.xlu0 %4670, %v4333
          %v4672 = vpop.permute.xlu0 %4671
          %v4674 = vmul.f32 %v4667, %v4672
          %v4675 = vmul.f32 %v4668, %v4672
          %v4676 = vmul.f32 %v4669, %v4672
          %v4677 = vrot.slane %v4674, 4
          %v4678 = vadd.f32 %v4674, %v4677
          %v4679 = vrot.slane %v4678, 2
          %v4680 = vadd.f32 %v4678, %v4679
          %v4681 = vrot.slane %v4680, 1
          %v4682 = vadd.f32 %v4680, %v4681
          %v4683 = vrot.slane %v4675, 4
          %v4684 = vadd.f32 %v4675, %v4683
          %v4685 = vrot.slane %v4684, 2
          %v4686 = vadd.f32 %v4684, %v4685
          %v4687 = vrot.slane %v4686, 1
          %v4688 = vadd.f32 %v4686, %v4687
          %v4689 = vsel %vm1508, %v4676, 0.0
          %v4690 = vrot.slane %v4689, 4
          %v4691 = vadd.f32 %v4689, %v4690
          %v4692 = vrot.slane %v4691, 2
          %v4693 = vadd.f32 %v4691, %v4692
          %v4694 = vrot.slane %v4693, 1
          %v4695 = vadd.f32 %v4693, %v4694
          %vm4696 = vcmp.eq.s32.totalorder %v4268, 5
          %v4697 = vsel %vm4696, %v4682, 0.0
          %v4698 = vsel %vm4696, %v4688, 0.0
          %v4699 = vsel %vm4696, %v4695, 0.0
          %v4700 = vadd.f32 %v4639, %v4697
          %v4701 = vadd.f32 %v4640, %v4698
          %v4702 = vadd.f32 %v4641, %v4699
          %v4703 = vperm.slane %v4293, 6
          %v4704 = vperm.slane %v4294, 6
          %v4705 = vperm.slane %v4295, 6
          %v4706 = vmul.f32 %v4703, %v4264
          %v4707 = vmul.f32 %v4704, %v4265
          %v4708 = vmul.f32 %v4705, %v4266
          %v4709 = vmul.f32 %v4706, 1.442695
          %v4710 = vpow.pop %v4709
          %v4711 = vmul.f32 %v4707, 1.442695
          %v4712 = vpow.pop %v4711
          %v4713 = vmul.f32 %v4708, 1.442695
          %v4714 = vpow.pop %v4713
          %v4715 = vmul.f32 %v4710, %v4667
          %v4716 = vmul.f32 %v4712, %v4668
          %v4717 = vmul.f32 %v4714, %v4669
          %4718 = vset.pattern.permute.xlu0 6
          %4719 = vperm.xlu0 %4718, %v4330
          %v4720 = vpop.permute.xlu0 %4719
          %v4722 = vperm.slane %v4298, 6
          %v4723 = vperm.slane %v4299, 6
          %v4724 = vperm.slane %v4300, 6
          %v4725 = vmul.f32 %v4720, %v4722
          %v4726 = vmul.f32 %v4720, %v4723
          %v4727 = vmul.f32 %v4720, %v4724
          %v4728 = vadd.f32 %v4715, %v4725
          %v4729 = vadd.f32 %v4716, %v4726
          %v4730 = vadd.f32 %v4717, %v4727
          %4731 = vset.pattern.permute.xlu0 6
          %4732 = vperm.xlu0 %4731, %v4333
          %v4733 = vpop.permute.xlu0 %4732
          %v4735 = vmul.f32 %v4728, %v4733
          %v4736 = vmul.f32 %v4729, %v4733
          %v4737 = vmul.f32 %v4730, %v4733
          %v4738 = vrot.slane %v4735, 4
          %v4739 = vadd.f32 %v4735, %v4738
          %v4740 = vrot.slane %v4739, 2
          %v4741 = vadd.f32 %v4739, %v4740
          %v4742 = vrot.slane %v4741, 1
          %v4743 = vadd.f32 %v4741, %v4742
          %v4744 = vrot.slane %v4736, 4
          %v4745 = vadd.f32 %v4736, %v4744
          %v4746 = vrot.slane %v4745, 2
          %v4747 = vadd.f32 %v4745, %v4746
          %v4748 = vrot.slane %v4747, 1
          %v4749 = vadd.f32 %v4747, %v4748
          %v4750 = vsel %vm1508, %v4737, 0.0
          %v4751 = vrot.slane %v4750, 4
          %v4752 = vadd.f32 %v4750, %v4751
          %v4753 = vrot.slane %v4752, 2
          %v4754 = vadd.f32 %v4752, %v4753
          %v4755 = vrot.slane %v4754, 1
          %v4756 = vadd.f32 %v4754, %v4755
          %vm4757 = vcmp.eq.s32.totalorder %v4268, 6
          %v4758 = vsel %vm4757, %v4743, 0.0
          %v4759 = vsel %vm4757, %v4749, 0.0
          %v4760 = vsel %vm4757, %v4756, 0.0
          %v4761 = vadd.f32 %v4700, %v4758
          %v4762 = vadd.f32 %v4701, %v4759
          %v4763 = vadd.f32 %v4702, %v4760
          %v4764 = vperm.slane %v4293, 7
          %v4765 = vperm.slane %v4294, 7
          %v4766 = vperm.slane %v4295, 7
          %v4767 = vmul.f32 %v4764, %v4264
          %v4768 = vmul.f32 %v4765, %v4265
          %v4769 = vmul.f32 %v4766, %v4266
          %v4770 = vmul.f32 %v4767, 1.442695
          %v4771 = vpow.pop %v4770
          %v4772 = vmul.f32 %v4768, 1.442695
          %v4773 = vpow.pop %v4772
          %v4774 = vmul.f32 %v4769, 1.442695
          %v4775 = vpow.pop %v4774
          %v4776 = vmul.f32 %v4771, %v4728
          %v4777 = vmul.f32 %v4773, %v4729
          %v4778 = vmul.f32 %v4775, %v4730
          %4779 = vset.pattern.permute.xlu0 7
          %4780 = vperm.xlu0 %4779, %v4330
          %v4781 = vpop.permute.xlu0 %4780
          %v4783 = vperm.slane %v4298, 7
          %v4784 = vperm.slane %v4299, 7
          %v4785 = vperm.slane %v4300, 7
          %v4786 = vmul.f32 %v4781, %v4783
          %v4787 = vmul.f32 %v4781, %v4784
          %v4788 = vmul.f32 %v4781, %v4785
          %v4789 = vadd.f32 %v4776, %v4786
          %v4790 = vadd.f32 %v4777, %v4787
          %v4791 = vadd.f32 %v4778, %v4788
          %4792 = vset.pattern.permute.xlu0 7
          %4793 = vperm.xlu0 %4792, %v4333
          %v4794 = vpop.permute.xlu0 %4793
          %v4796 = vmul.f32 %v4789, %v4794
          %v4797 = vmul.f32 %v4790, %v4794
          %v4798 = vmul.f32 %v4791, %v4794
          %v4799 = vrot.slane %v4796, 4
          %v4800 = vadd.f32 %v4796, %v4799
          %v4801 = vrot.slane %v4800, 2
          %v4802 = vadd.f32 %v4800, %v4801
          %v4803 = vrot.slane %v4802, 1
          %v4804 = vadd.f32 %v4802, %v4803
          %v4805 = vrot.slane %v4797, 4
          %v4806 = vadd.f32 %v4797, %v4805
          %v4807 = vrot.slane %v4806, 2
          %v4808 = vadd.f32 %v4806, %v4807
          %v4809 = vrot.slane %v4808, 1
          %v4810 = vadd.f32 %v4808, %v4809
          %v4811 = vsel %vm1508, %v4798, 0.0
          %v4812 = vrot.slane %v4811, 4
          %v4813 = vadd.f32 %v4811, %v4812
          %v4814 = vrot.slane %v4813, 2
          %v4815 = vadd.f32 %v4813, %v4814
          %v4816 = vrot.slane %v4815, 1
          %v4817 = vadd.f32 %v4815, %v4816
          %vm4818 = vcmp.eq.s32.totalorder %v4268, 7
          %v4819 = vsel %vm4818, %v4804, 0.0
          %v4820 = vsel %vm4818, %v4810, 0.0
          %v4821 = vsel %vm4818, %v4817, 0.0
          %v4822 = vadd.f32 %v4761, %v4819
          %v4823 = vadd.f32 %v4762, %v4820
          %v4824 = vadd.f32 %v4763, %v4821
          %s4825 = smul.addr %s4290, 8
          %s4826 = scalar_lea.vmem [#allocation5], %s4825
          %v4827 = vld [vmem:[%s4826] sm:$0xff]
          %v4828 = vld [vmem:[%s4826 + $0x8] sm:$0xff]
          %v4829 = vld [vmem:[%s4826 + $0x10] sm:$0xff]
          %v4830 = vmul.f32 %v4822, %v4827
          %v4831 = vmul.f32 %v4823, %v4828
          %v4832 = vmul.f32 %v4824, %v4829
          %s4833 = smul.addr %s4290, 8
          %s4834 = scalar_lea.vmem [#allocation6], %s4833
          %v4835 = vld [vmem:[%s4834] sm:$0xff]
          %v4836 = vld [vmem:[%s4834 + $0x8] sm:$0xff]
          %v4837 = vld [vmem:[%s4834 + $0x10] sm:$0xff]
          %v4838 = vadd.f32 %v4830, %v4835
          %v4839 = vadd.f32 %v4831, %v4836
          %v4840 = vadd.f32 %v4832, %v4837
          %s4841 = smul.addr %s4290, 8
          %s4842 = scalar_lea.vmem [#allocation8], %s4841
          %4843 = vst [vmem:[%s4842] sm:$0xff] %v4838
          %4844 = vst [vmem:[%s4842 + $0x8] sm:$0xff] %v4839
          %4845 = vst.msk [vmem:[%s4842 + $0x10] sm:$0xff] %vm1508, %v4840
        $region69: #{_lambda_.3} parent=63 // loop_footer
          %s4283 = sadd.s32 1, %s4279
        $region70: #{_lambda_.3} parent=63 // loop_footer_branch
          %4278 = sbr.rel target = $region66
        $region71: #{_lambda_.3} parent=63 // loop_exit
          _
        %v4846 = vld [vmem:[#allocation8] sm:$0xff]
        %v4847 = vld [vmem:[#allocation8 + $0x8] sm:$0xff]
        %v4848 = vld [vmem:[#allocation8 + $0x10] sm:$0xff]
        %v4849 = vld [vmem:[#allocation8 + $0x18] sm:$0xff]
        %v4850 = vld [vmem:[#allocation8 + $0x20] sm:$0xff]
        %v4851 = vld [vmem:[#allocation8 + $0x28] sm:$0xff]
        %v4852 = vld [vmem:[#allocation8 + $0x30] sm:$0xff]
        %v4853 = vld [vmem:[#allocation8 + $0x38] sm:$0xff]
        %v4854 = vld [vmem:[#allocation8 + $0x40] sm:$0xff]
        %v4855 = vld [vmem:[#allocation8 + $0x48] sm:$0xff]
        %v4856 = vld [vmem:[#allocation8 + $0x50] sm:$0xff]
        %v4857 = vld [vmem:[#allocation8 + $0x58] sm:$0xff]
        %v4858 = vld [vmem:[#allocation8 + $0x60] sm:$0xff]
        %v4859 = vld [vmem:[#allocation8 + $0x68] sm:$0xff]
        %v4860 = vld [vmem:[#allocation8 + $0x70] sm:$0xff]
        %v4861 = vld [vmem:[#allocation8 + $0x78] sm:$0xff]
        %v4862 = vld [vmem:[#allocation8 + $0x80] sm:$0xff]
        %v4863 = vld [vmem:[#allocation8 + $0x88] sm:$0xff]
        %v4864 = vld [vmem:[#allocation8 + $0x90] sm:$0xff]
        %v4865 = vld [vmem:[#allocation8 + $0x98] sm:$0xff]
        %v4866 = vld [vmem:[#allocation8 + $0xa0] sm:$0xff]
        %v4867 = vld [vmem:[#allocation8 + $0xa8] sm:$0xff]
        %v4868 = vld [vmem:[#allocation8 + $0xb0] sm:$0xff]
        %v4869 = vld [vmem:[#allocation8 + $0xb8] sm:$0xff]
        %v4870 = vld [vmem:[%s10] sm:$0xff]
        %v4871 = vld [vmem:[%s10 + $0x8] sm:$0xff]
        %v4872 = vld [vmem:[%s10 + $0x10] sm:$0xff]
        %v4873 = vld [vmem:[%s10 + $0x18] sm:$0xff]
        %v4874 = vld [vmem:[%s10 + $0x20] sm:$0xff]
        %v4875 = vld [vmem:[%s10 + $0x28] sm:$0xff]
        %v4876 = vld [vmem:[%s10 + $0x30] sm:$0xff]
        %v4877 = vld [vmem:[%s10 + $0x38] sm:$0xff]
        %v4878 = vld [vmem:[%s10 + $0x40] sm:$0xff]
        %v4879 = vld [vmem:[%s10 + $0x48] sm:$0xff]
        %v4880 = vld [vmem:[%s10 + $0x50] sm:$0xff]
        %v4881 = vld [vmem:[%s10 + $0x58] sm:$0xff]
        %v4882 = vld [vmem:[%s10 + $0x60] sm:$0xff]
        %v4883 = vld [vmem:[%s10 + $0x68] sm:$0xff]
        %v4884 = vld [vmem:[%s10 + $0x70] sm:$0xff]
        %v4885 = vld [vmem:[%s10 + $0x78] sm:$0xff]
        %v4886 = vld [vmem:[%s10 + $0x80] sm:$0xff]
        %v4887 = vld [vmem:[%s10 + $0x88] sm:$0xff]
        %v4888 = vld [vmem:[%s10 + $0x90] sm:$0xff]
        %v4889 = vld [vmem:[%s10 + $0x98] sm:$0xff]
        %v4890 = vld [vmem:[%s10 + $0xa0] sm:$0xff]
        %v4891 = vld [vmem:[%s10 + $0xa8] sm:$0xff]
        %v4892 = vld [vmem:[%s10 + $0xb0] sm:$0xff]
        %v4893 = vld [vmem:[%s10 + $0xb8] sm:$0xff]
        %v4894 = vld [vmem:[%s10 + $0xc0] sm:$0xff]
        %v4895 = vld [vmem:[%s10 + $0xc8] sm:$0xff]
        %v4896 = vld [vmem:[%s10 + $0xd0] sm:$0xff]
        %v4897 = vld [vmem:[%s10 + $0xd8] sm:$0xff]
        %v4898 = vld [vmem:[%s10 + $0xe0] sm:$0xff]
        %v4899 = vld [vmem:[%s10 + $0xe8] sm:$0xff]
        %v4900 = vld [vmem:[%s10 + $0xf0] sm:$0xff]
        %v4901 = vld [vmem:[%s10 + $0xf8] sm:$0xff]
        %v4902 = vld [vmem:[%s10 + $0x100] sm:$0xff]
        %v4903 = vld [vmem:[%s10 + $0x108] sm:$0xff]
        %v4904 = vld [vmem:[%s10 + $0x110] sm:$0xff]
        %v4905 = vld [vmem:[%s10 + $0x118] sm:$0xff]
        %v4906 = vld [vmem:[%s10 + $0x120] sm:$0xff]
        %v4907 = vld [vmem:[%s10 + $0x128] sm:$0xff]
        %v4908 = vld [vmem:[%s10 + $0x130] sm:$0xff]
        %v4909 = vld [vmem:[%s10 + $0x138] sm:$0xff]
        %v4910 = vld [vmem:[%s10 + $0x140] sm:$0xff]
        %v4911 = vld [vmem:[%s10 + $0x148] sm:$0xff]
        %v4912 = vld [vmem:[%s10 + $0x150] sm:$0xff]
        %v4913 = vld [vmem:[%s10 + $0x158] sm:$0xff]
        %v4914 = vld [vmem:[%s10 + $0x160] sm:$0xff]
        %v4915 = vld [vmem:[%s10 + $0x168] sm:$0xff]
        %v4916 = vld [vmem:[%s10 + $0x170] sm:$0xff]
        %v4917 = vld [vmem:[%s10 + $0x178] sm:$0xff]
        %v4918 = vld [vmem:[%s10 + $0x180] sm:$0xff]
        %v4919 = vld [vmem:[%s10 + $0x188] sm:$0xff]
        %v4920 = vld [vmem:[%s10 + $0x190] sm:$0xff]
        %v4921 = vld [vmem:[%s10 + $0x198] sm:$0xff]
        %v4922 = vld [vmem:[%s10 + $0x1a0] sm:$0xff]
        %v4923 = vld [vmem:[%s10 + $0x1a8] sm:$0xff]
        %v4924 = vld [vmem:[%s10 + $0x1b0] sm:$0xff]
        %v4925 = vld [vmem:[%s10 + $0x1b8] sm:$0xff]
        %v4926 = vld [vmem:[%s10 + $0x1c0] sm:$0xff]
        %v4927 = vld [vmem:[%s10 + $0x1c8] sm:$0xff]
        %v4928 = vld [vmem:[%s10 + $0x1d0] sm:$0xff]
        %v4929 = vld [vmem:[%s10 + $0x1d8] sm:$0xff]
        %v4930 = vld [vmem:[%s10 + $0x1e0] sm:$0xff]
        %v4931 = vld [vmem:[%s10 + $0x1e8] sm:$0xff]
        %v4932 = vld [vmem:[%s10 + $0x1f0] sm:$0xff]
        %v4933 = vld [vmem:[%s10 + $0x1f8] sm:$0xff]
        %v4934 = vld [vmem:[%s10 + $0x200] sm:$0xff]
        %v4935 = vld [vmem:[%s10 + $0x208] sm:$0xff]
        %v4936 = vld [vmem:[%s10 + $0x210] sm:$0xff]
        %v4937 = vld [vmem:[%s10 + $0x218] sm:$0xff]
        %v4938 = vld [vmem:[%s10 + $0x220] sm:$0xff]
        %v4939 = vld [vmem:[%s10 + $0x228] sm:$0xff]
        %v4940 = vld [vmem:[%s10 + $0x230] sm:$0xff]
        %v4941 = vld [vmem:[%s10 + $0x238] sm:$0xff]
        %v4943 = vsel %vm1508, %v4848, 0
        %v4946 = vsel %vm1508, %v4851, 0
        %v4949 = vsel %vm1508, %v4854, 0
        %v4952 = vsel %vm1508, %v4857, 0
        %v4955 = vsel %vm1508, %v4860, 0
        %v4958 = vsel %vm1508, %v4863, 0
        %v4961 = vsel %vm1508, %v4866, 0
        %v4964 = vsel %vm1508, %v4869, 0
        %4966 = vmatpush.msra.mxu0 %v4900
        %4967 = vmatpush.msra.mxu0 %v4898
        %4968 = vmatpush.msra.mxu0 %v4896
        %4969 = vmatpush.msra.mxu0 %v4894
        %4970 = vmatpush.msra.mxu0 %v4892
        %4971 = vmatpush.msra.mxu0 %v4890
        %4972 = vmatpush.msra.mxu0 %v4888
        %4973 = vmatpush.msra.mxu0 %v4886
        %4974 = vmatpush.msra.mxu0 %v4884
        %4975 = vmatpush.msra.mxu0 %v4882
        %4976 = vmatpush.msra.mxu0 %v4880
        %4977 = vmatpush.msra.mxu0 %v4878
        %4978 = vmatpush.msra.mxu0 %v4876
        %4979 = vmatpush.msra.mxu0 %v4874
        %4980 = vmatpush.msra.mxu0 %v4872
        %4981 = vmatpush.msra.mxu0 %v4870
        %4982 = vmatmul.f32.gmra.mxu0 %v4846
        %v4983 = vpop.f32.mrf.mxu0
        %v4984 = vadd.f32 0.0, %v4983
        %4985 = vmatmul.f32.gmra.mxu0 %v4849
        %v4986 = vpop.f32.mrf.mxu0
        %v4987 = vadd.f32 0.0, %v4986
        %4988 = vmatmul.f32.gmra.mxu0 %v4852
        %v4989 = vpop.f32.mrf.mxu0
        %v4990 = vadd.f32 0.0, %v4989
        %4991 = vmatmul.f32.gmra.mxu0 %v4855
        %v4992 = vpop.f32.mrf.mxu0
        %v4993 = vadd.f32 0.0, %v4992
        %4994 = vmatmul.f32.gmra.mxu0 %v4858
        %v4995 = vpop.f32.mrf.mxu0
        %v4996 = vadd.f32 0.0, %v4995
        %4997 = vmatmul.f32.gmra.mxu0 %v4861
        %v4998 = vpop.f32.mrf.mxu0
        %v4999 = vadd.f32 0.0, %v4998
        %5000 = vmatmul.f32.gmra.mxu0 %v4864
        %v5001 = vpop.f32.mrf.mxu0
        %v5002 = vadd.f32 0.0, %v5001
        %5003 = vmatmul.f32.gmra.mxu0 %v4867
        %v5004 = vpop.f32.mrf.mxu0
        %v5005 = vadd.f32 0.0, %v5004
        %5006 = vdwg.mxu0
        %5007 = vmatpush.msra.mxu0 %v4932
        %5008 = vmatpush.msra.mxu0 %v4930
        %5009 = vmatpush.msra.mxu0 %v4928
        %5010 = vmatpush.msra.mxu0 %v4926
        %5011 = vmatpush.msra.mxu0 %v4924
        %5012 = vmatpush.msra.mxu0 %v4922
        %5013 = vmatpush.msra.mxu0 %v4920
        %5014 = vmatpush.msra.mxu0 %v4918
        %5015 = vmatpush.msra.mxu0 %v4916
        %5016 = vmatpush.msra.mxu0 %v4914
        %5017 = vmatpush.msra.mxu0 %v4912
        %5018 = vmatpush.msra.mxu0 %v4910
        %5019 = vmatpush.msra.mxu0 %v4908
        %5020 = vmatpush.msra.mxu0 %v4906
        %5021 = vmatpush.msra.mxu0 %v4904
        %5022 = vmatpush.msra.mxu0 %v4902
        %5023 = vmatmul.f32.gmra.mxu0 %v4847
        %v5024 = vpop.f32.mrf.mxu0
        %v5025 = vadd.f32 %v4984, %v5024
        %5026 = vmatmul.f32.gmra.mxu0 %v4850
        %v5027 = vpop.f32.mrf.mxu0
        %v5028 = vadd.f32 %v4987, %v5027
        %5029 = vmatmul.f32.gmra.mxu0 %v4853
        %v5030 = vpop.f32.mrf.mxu0
        %v5031 = vadd.f32 %v4990, %v5030
        %5032 = vmatmul.f32.gmra.mxu0 %v4856
        %v5033 = vpop.f32.mrf.mxu0
        %v5034 = vadd.f32 %v4993, %v5033
        %5035 = vmatmul.f32.gmra.mxu0 %v4859
        %v5036 = vpop.f32.mrf.mxu0
        %v5037 = vadd.f32 %v4996, %v5036
        %5038 = vmatmul.f32.gmra.mxu0 %v4862
        %v5039 = vpop.f32.mrf.mxu0
        %v5040 = vadd.f32 %v4999, %v5039
        %5041 = vmatmul.f32.gmra.mxu0 %v4865
        %v5042 = vpop.f32.mrf.mxu0
        %v5043 = vadd.f32 %v5002, %v5042
        %5044 = vmatmul.f32.gmra.mxu0 %v4868
        %v5045 = vpop.f32.mrf.mxu0
        %v5046 = vadd.f32 %v5005, %v5045
        %5047 = vdwg.mxu0
        %5048 = vmatpush.msra.mxu0 0.0
        %5049 = vmatpush.msra.mxu0 0.0
        %5050 = vmatpush.msra.mxu0 0.0
        %5051 = vmatpush.msra.mxu0 0.0
        %5052 = vmatpush.msra.mxu0 0.0
        %5053 = vmatpush.msra.mxu0 0.0
        %5054 = vmatpush.msra.mxu0 0.0
        %5055 = vmatpush.msra.mxu0 0.0
        %5056 = vmatpush.msra.mxu0 0.0
        %5057 = vmatpush.msra.mxu0 0.0
        %5058 = vmatpush.msra.mxu0 0.0
        %5059 = vmatpush.msra.mxu0 0.0
        %5060 = vmatpush.msra.mxu0 %v4940
        %5061 = vmatpush.msra.mxu0 %v4938
        %5062 = vmatpush.msra.mxu0 %v4936
        %5063 = vmatpush.msra.mxu0 %v4934
        %5064 = vmatmul.f32.gmra.mxu0 %v4943
        %v5065 = vpop.f32.mrf.mxu0
        %v5066 = vadd.f32 %v5025, %v5065
        %5067 = vmatmul.f32.gmra.mxu0 %v4946
        %v5068 = vpop.f32.mrf.mxu0
        %v5069 = vadd.f32 %v5028, %v5068
        %5070 = vmatmul.f32.gmra.mxu0 %v4949
        %v5071 = vpop.f32.mrf.mxu0
        %v5072 = vadd.f32 %v5031, %v5071
        %5073 = vmatmul.f32.gmra.mxu0 %v4952
        %v5074 = vpop.f32.mrf.mxu0
        %v5075 = vadd.f32 %v5034, %v5074
        %5076 = vmatmul.f32.gmra.mxu0 %v4955
        %v5077 = vpop.f32.mrf.mxu0
        %v5078 = vadd.f32 %v5037, %v5077
        %5079 = vmatmul.f32.gmra.mxu0 %v4958
        %v5080 = vpop.f32.mrf.mxu0
        %v5081 = vadd.f32 %v5040, %v5080
        %5082 = vmatmul.f32.gmra.mxu0 %v4961
        %v5083 = vpop.f32.mrf.mxu0
        %v5084 = vadd.f32 %v5043, %v5083
        %5085 = vmatmul.f32.gmra.mxu0 %v4964
        %v5086 = vpop.f32.mrf.mxu0
        %v5087 = vadd.f32 %v5046, %v5086
        %5088 = vdwg.mxu0
        %5089 = vmatpush.msra.mxu0 %v4901
        %5090 = vmatpush.msra.mxu0 %v4899
        %5091 = vmatpush.msra.mxu0 %v4897
        %5092 = vmatpush.msra.mxu0 %v4895
        %5093 = vmatpush.msra.mxu0 %v4893
        %5094 = vmatpush.msra.mxu0 %v4891
        %5095 = vmatpush.msra.mxu0 %v4889
        %5096 = vmatpush.msra.mxu0 %v4887
        %5097 = vmatpush.msra.mxu0 %v4885
        %5098 = vmatpush.msra.mxu0 %v4883
        %5099 = vmatpush.msra.mxu0 %v4881
        %5100 = vmatpush.msra.mxu0 %v4879
        %5101 = vmatpush.msra.mxu0 %v4877
        %5102 = vmatpush.msra.mxu0 %v4875
        %5103 = vmatpush.msra.mxu0 %v4873
        %5104 = vmatpush.msra.mxu0 %v4871
        %5105 = vmatmul.f32.gmra.mxu0 %v4846
        %v5106 = vpop.f32.mrf.mxu0
        %v5107 = vadd.f32 0.0, %v5106
        %5108 = vmatmul.f32.gmra.mxu0 %v4849
        %v5109 = vpop.f32.mrf.mxu0
        %v5110 = vadd.f32 0.0, %v5109
        %5111 = vmatmul.f32.gmra.mxu0 %v4852
        %v5112 = vpop.f32.mrf.mxu0
        %v5113 = vadd.f32 0.0, %v5112
        %5114 = vmatmul.f32.gmra.mxu0 %v4855
        %v5115 = vpop.f32.mrf.mxu0
        %v5116 = vadd.f32 0.0, %v5115
        %5117 = vmatmul.f32.gmra.mxu0 %v4858
        %v5118 = vpop.f32.mrf.mxu0
        %v5119 = vadd.f32 0.0, %v5118
        %5120 = vmatmul.f32.gmra.mxu0 %v4861
        %v5121 = vpop.f32.mrf.mxu0
        %v5122 = vadd.f32 0.0, %v5121
        %5123 = vmatmul.f32.gmra.mxu0 %v4864
        %v5124 = vpop.f32.mrf.mxu0
        %v5125 = vadd.f32 0.0, %v5124
        %5126 = vmatmul.f32.gmra.mxu0 %v4867
        %v5127 = vpop.f32.mrf.mxu0
        %v5128 = vadd.f32 0.0, %v5127
        %5129 = vdwg.mxu0
        %5130 = vmatpush.msra.mxu0 %v4933
        %5131 = vmatpush.msra.mxu0 %v4931
        %5132 = vmatpush.msra.mxu0 %v4929
        %5133 = vmatpush.msra.mxu0 %v4927
        %5134 = vmatpush.msra.mxu0 %v4925
        %5135 = vmatpush.msra.mxu0 %v4923
        %5136 = vmatpush.msra.mxu0 %v4921
        %5137 = vmatpush.msra.mxu0 %v4919
        %5138 = vmatpush.msra.mxu0 %v4917
        %5139 = vmatpush.msra.mxu0 %v4915
        %5140 = vmatpush.msra.mxu0 %v4913
        %5141 = vmatpush.msra.mxu0 %v4911
        %5142 = vmatpush.msra.mxu0 %v4909
        %5143 = vmatpush.msra.mxu0 %v4907
        %5144 = vmatpush.msra.mxu0 %v4905
        %5145 = vmatpush.msra.mxu0 %v4903
        %5146 = vmatmul.f32.gmra.mxu0 %v4847
        %v5147 = vpop.f32.mrf.mxu0
        %v5148 = vadd.f32 %v5107, %v5147
        %5149 = vmatmul.f32.gmra.mxu0 %v4850
        %v5150 = vpop.f32.mrf.mxu0
        %v5151 = vadd.f32 %v5110, %v5150
        %5152 = vmatmul.f32.gmra.mxu0 %v4853
        %v5153 = vpop.f32.mrf.mxu0
        %v5154 = vadd.f32 %v5113, %v5153
        %5155 = vmatmul.f32.gmra.mxu0 %v4856
        %v5156 = vpop.f32.mrf.mxu0
        %v5157 = vadd.f32 %v5116, %v5156
        %5158 = vmatmul.f32.gmra.mxu0 %v4859
        %v5159 = vpop.f32.mrf.mxu0
        %v5160 = vadd.f32 %v5119, %v5159
        %5161 = vmatmul.f32.gmra.mxu0 %v4862
        %v5162 = vpop.f32.mrf.mxu0
        %v5163 = vadd.f32 %v5122, %v5162
        %5164 = vmatmul.f32.gmra.mxu0 %v4865
        %v5165 = vpop.f32.mrf.mxu0
        %v5166 = vadd.f32 %v5125, %v5165
        %5167 = vmatmul.f32.gmra.mxu0 %v4868
        %v5168 = vpop.f32.mrf.mxu0
        %v5169 = vadd.f32 %v5128, %v5168
        %5170 = vdwg.mxu0
        %5171 = vmatpush.msra.mxu0 0.0
        %5172 = vmatpush.msra.mxu0 0.0
        %5173 = vmatpush.msra.mxu0 0.0
        %5174 = vmatpush.msra.mxu0 0.0
        %5175 = vmatpush.msra.mxu0 0.0
        %5176 = vmatpush.msra.mxu0 0.0
        %5177 = vmatpush.msra.mxu0 0.0
        %5178 = vmatpush.msra.mxu0 0.0
        %5179 = vmatpush.msra.mxu0 0.0
        %5180 = vmatpush.msra.mxu0 0.0
        %5181 = vmatpush.msra.mxu0 0.0
        %5182 = vmatpush.msra.mxu0 0.0
        %5183 = vmatpush.msra.mxu0 %v4941
        %5184 = vmatpush.msra.mxu0 %v4939
        %5185 = vmatpush.msra.mxu0 %v4937
        %5186 = vmatpush.msra.mxu0 %v4935
        %5187 = vmatmul.f32.gmra.mxu0 %v4943
        %v5188 = vpop.f32.mrf.mxu0
        %v5189 = vadd.f32 %v5148, %v5188
        %5190 = vmatmul.f32.gmra.mxu0 %v4946
        %v5191 = vpop.f32.mrf.mxu0
        %v5192 = vadd.f32 %v5151, %v5191
        %5193 = vmatmul.f32.gmra.mxu0 %v4949
        %v5194 = vpop.f32.mrf.mxu0
        %v5195 = vadd.f32 %v5154, %v5194
        %5196 = vmatmul.f32.gmra.mxu0 %v4952
        %v5197 = vpop.f32.mrf.mxu0
        %v5198 = vadd.f32 %v5157, %v5197
        %5199 = vmatmul.f32.gmra.mxu0 %v4955
        %v5200 = vpop.f32.mrf.mxu0
        %v5201 = vadd.f32 %v5160, %v5200
        %5202 = vmatmul.f32.gmra.mxu0 %v4958
        %v5203 = vpop.f32.mrf.mxu0
        %v5204 = vadd.f32 %v5163, %v5203
        %5205 = vmatmul.f32.gmra.mxu0 %v4961
        %v5206 = vpop.f32.mrf.mxu0
        %v5207 = vadd.f32 %v5166, %v5206
        %5208 = vmatmul.f32.gmra.mxu0 %v4964
        %v5209 = vpop.f32.mrf.mxu0
        %v5210 = vadd.f32 %v5169, %v5209
        %5211 = vdwg.mxu0
        %5212 = vst [vmem:[%s379] sm:$0xff] %v5066
        %5213 = vst.msk [vmem:[%s379 + $0x8] sm:$0xff] %vm455, %v5189
        %5214 = vst [vmem:[%s379 + $0x10] sm:$0xff] %v5069
        %5215 = vst.msk [vmem:[%s379 + $0x18] sm:$0xff] %vm455, %v5192
        %5216 = vst [vmem:[%s379 + $0x20] sm:$0xff] %v5072
        %5217 = vst.msk [vmem:[%s379 + $0x28] sm:$0xff] %vm455, %v5195
        %5218 = vst [vmem:[%s379 + $0x30] sm:$0xff] %v5075
        %5219 = vst.msk [vmem:[%s379 + $0x38] sm:$0xff] %vm455, %v5198
        %5220 = vst [vmem:[%s379 + $0x40] sm:$0xff] %v5078
        %5221 = vst.msk [vmem:[%s379 + $0x48] sm:$0xff] %vm455, %v5201
        %5222 = vst [vmem:[%s379 + $0x50] sm:$0xff] %v5081
        %5223 = vst.msk [vmem:[%s379 + $0x58] sm:$0xff] %vm455, %v5204
        %5224 = vst [vmem:[%s379 + $0x60] sm:$0xff] %v5084
        %5225 = vst.msk [vmem:[%s379 + $0x68] sm:$0xff] %vm455, %v5207
        %5226 = vst [vmem:[%s379 + $0x70] sm:$0xff] %v5087
        %5227 = vst.msk [vmem:[%s379 + $0x78] sm:$0xff] %vm455, %v5210
        %s5228 = sand.u32 %s269, 1
        %s5229 = scalar_lea.sflag [#allocation10], %s5228
        %s5230 = sand.u32 %s269, 1
        %s5231 = smul.addr %s5230, 128
        %s5232 = scalar_lea.vmem [#allocation9], %s5231
        // Predicated region
        $region72: #{_lambda_.3} parent=63 // pred_check
          %p5233 = pneg %p279
        $region73: #{_lambda_.3} parent=63 // pred_check_branch
          %5235 = sbr.rel (%p5233) target = $region75
        $region74: #{_lambda_.3} parent=63 // pred_region
          %5237 = vsyncadd %s5229, 0
          %s5238 = smul.addr %s25, 16
          %s5239 = smul.addr %s5238, 8
          %s5240 = scalar_lea.hbm %s11, %s5239
          %s5241 = sshll.u32 %s5232, 4
          %s5242 = int_to_ptr.vmem [resolvable:$true] %s5241
          %s5243 = sshll.u32 %s5240, 4
          %s5244 = int_to_ptr.hbm [resolvable:$true] %s5243
          %5249 = dma.vmem_to_hbm [thread:$0]  %s5242, 2048, %s5244, %s5229, 256, 256, 16
        $region75: #{_lambda_.3} parent=63 // pred_fallthru
          _
      $region64: #{_lambda_.3} parent=5 // pred_fallthru
        _
      %p5250 = scmp.le.s32.totalorder 2, %s20
      // Predicated region
      $region76: #{_lambda_.3} parent=5 // pred_check
        %p5251 = pneg %p5250
      $region77: #{_lambda_.3} parent=5 // pred_check_branch
        %5253 = sbr.rel (%p5251) target = $region79
      $region78: #{_lambda_.3} parent=5 // pred_region
        %s5254 = ssub.s32 %s20, 2
        // Predicated region
        $region80: #{_lambda_.3} parent=78 // pred_check
          %p5255 = pneg %p285
        $region81: #{_lambda_.3} parent=78 // pred_check_branch
          %5257 = sbr.rel (%p5255) target = $region83
        $region82: #{_lambda_.3} parent=78 // pred_region
          %s5258 = sand.u32 %s270, 1
          %s5259 = scalar_lea.sflag [#allocation10], %s5258
          %s5260 = sand.u32 %s270, 1
          %s5261 = smul.addr %s5260, 128
          %s5262 = scalar_lea.vmem [#allocation9], %s5261
          %5264 = dma.done %s5259, 2048
        $region83: #{_lambda_.3} parent=78 // pred_fallthru
          _
      $region79: #{_lambda_.3} parent=5 // pred_fallthru
        _
    $region6: #{_lambda_.3} parent=1 // loop_footer
      %s24 = sadd.s32 1, %s20
    $region7: #{_lambda_.3} parent=1 // loop_footer_branch
      %19 = sbr.rel target = $region3
    $region8: #{_lambda_.3} parent=1 // loop_exit
      _
    %5265 = vsyncpa [#allocation10], 1
    %s5266 = scalar_lea.sflag [#allocation10], 1
    %5267 = vsyncpa %s5266, 1

</llo_original>
